<compile_context>
chip_gen: v7x
topology: tpu7x:2x2x1
jax: 0.10.0
libtpu: 0.0.40
codegen_flags: <defaults>
</compile_context>

<pallas_src>
import functools

import jax
import jax.numpy as jnp
from jax.experimental import pallas as pl
from jax.experimental.pallas import tpu as pltpu

TM = 256      # row tile of the im2col matmul (matches 2x256 MXU on v6e/v7x)
LANES = 128   # lane width; Cout is zero-padded up to a multiple of this


def _round_up(x, m):
    return ((x + m - 1) // m) * m


# --------------------------------------------------------------------------
# Conv as im2col matmul:  [M, K](bf16) @ [K, Cout_pad](bf16) (+bias) (+LReLU)
# --------------------------------------------------------------------------
def _mm_kernel(a_ref, b_ref, o_ref, *, negative_slope, apply_act):
    acc = jnp.dot(a_ref[...], b_ref[...], preferred_element_type=jnp.float32)
    if apply_act:
        acc = jnp.where(acc >= 0.0, acc, negative_slope * acc)
    o_ref[...] = acc.astype(o_ref.dtype)


def _mm_bias_kernel(a_ref, b_ref, bias_ref, o_ref, *, negative_slope,
                    apply_act):
    acc = jnp.dot(a_ref[...], b_ref[...], preferred_element_type=jnp.float32)
    acc = acc + bias_ref[...]
    if apply_act:
        acc = jnp.where(acc >= 0.0, acc, negative_slope * acc)
    o_ref[...] = acc.astype(o_ref.dtype)


def _conv_matmul(patches, w2d, bias, *, apply_act, out_dtype,
                 negative_slope=0.2):
    """patches: [M, K], w2d: [K, Cout], bias: [Cout] or None.

    Returns [M, Cout_pad] (Cout_pad = round_up(Cout, 128)); padded lanes are
    exact zeros (weights/bias zero-padded)."""
    M, K = patches.shape
    Cout = w2d.shape[1]
    cout_pad = _round_up(Cout, LANES)
    tm = min(TM, _round_up(M, 8))
    grid = (pl.cdiv(M, tm),)

    a = patches.astype(jnp.bfloat16)
    w_p = jnp.pad(w2d.astype(jnp.bfloat16), ((0, 0), (0, cout_pad - Cout)))

    in_arrays = [a, w_p]
    in_specs = [
        pl.BlockSpec((tm, K), lambda i: (i, 0)),        # im2col row tile
        pl.BlockSpec((K, cout_pad), lambda i: (0, 0)),  # resident weight
    ]
    if bias is not None:
        b_p = jnp.pad(bias.reshape(1, Cout).astype(jnp.float32),
                      ((0, 0), (0, cout_pad - Cout)))
        in_arrays.append(b_p)
        in_specs.append(pl.BlockSpec((1, cout_pad), lambda i: (0, 0)))
        kernel = functools.partial(_mm_bias_kernel,
                                   negative_slope=negative_slope,
                                   apply_act=apply_act)
    else:
        kernel = functools.partial(_mm_kernel,
                                   negative_slope=negative_slope,
                                   apply_act=apply_act)

    return pl.pallas_call(
        kernel,
        out_shape=jax.ShapeDtypeStruct((M, cout_pad), out_dtype),
        grid=grid,
        in_specs=in_specs,
        out_specs=pl.BlockSpec((tm, cout_pad), lambda i: (i, 0)),
        compiler_params=pltpu.CompilerParams(
            dimension_semantics=("parallel",)),
    )(*in_arrays)


def _im2col(x, k, stride, pad):
    """x: [N,H,W,C] -> patches [N, Ho, Wo, k*k*C] (tap order ki, kj, c)."""
    N, H, W, C = x.shape
    xp = jnp.pad(x, ((0, 0), (pad, pad), (pad, pad), (0, 0)))
    Ho = (H + 2 * pad - k) // stride + 1
    Wo = (W + 2 * pad - k) // stride + 1
    cols = [xp[:, ki:ki + stride * Ho:stride, kj:kj + stride * Wo:stride, :]
            for ki in range(k) for kj in range(k)]
    return jnp.concatenate(cols, axis=-1), Ho, Wo


def conv2d(x, w, b, *, stride, pad, apply_act, out_dtype):
    """x: [N,H,W,Cin], w: [kh,kw,Cin,Cout] -> [N,Ho,Wo,Cout_pad] (padded lanes
    are exact zeros)."""
    kh, kw, Cin, Cout = w.shape
    N = x.shape[0]
    patches, Ho, Wo = _im2col(x.astype(jnp.bfloat16), kh, stride, pad)
    a = patches.reshape(N * Ho * Wo, kh * kw * Cin)
    w2d = w.reshape(kh * kw * Cin, Cout)
    out = _conv_matmul(a, w2d, b, apply_act=apply_act, out_dtype=out_dtype)
    return out.reshape(N, Ho, Wo, out.shape[-1])


# --------------------------------------------------------------------------
# InstanceNorm2d (affine=False, eps=1e-5, biased var) fused with LeakyReLU(0.2)
# Single-pass stats; operates lane-dense on the 128-padded channel dim
# (padded channels are zero and stay zero).
# --------------------------------------------------------------------------
def _inorm_lrelu_kernel(x_ref, o_ref, *, eps, negative_slope, inv_hw):
    x = x_ref[0]                                      # (HW, Cpad) f32
    s = jnp.sum(x, axis=0, keepdims=True)
    ss = jnp.sum(x * x, axis=0, keepdims=True)
    mean = s * inv_hw
    var = jnp.maximum(ss * inv_hw - mean * mean, 0.0)  # biased variance
    y = (x - mean) * jax.lax.rsqrt(var + eps)
    o_ref[0] = jnp.where(y >= 0.0, y, negative_slope * y).astype(o_ref.dtype)


def instance_norm_lrelu(x, *, eps=1e-5, negative_slope=0.2,
                        out_dtype=jnp.bfloat16):
    """x: [N, H, W, Cpad] f32 -> same shape in out_dtype."""
    N, H, W, C = x.shape
    HW = H * W
    xf = x.reshape(N, HW, C)
    out = pl.pallas_call(
        functools.partial(_inorm_lrelu_kernel, eps=eps,
                          negative_slope=negative_slope, inv_hw=1.0 / HW),
        out_shape=jax.ShapeDtypeStruct((N, HW, C), out_dtype),
        grid=(N,),
        in_specs=[pl.BlockSpec((1, HW, C), lambda n: (n, 0, 0))],
        out_specs=pl.BlockSpec((1, HW, C), lambda n: (n, 0, 0)),
        compiler_params=pltpu.CompilerParams(
            dimension_semantics=("parallel",)),
    )(xf)
    return out.reshape(N, H, W, C)


# --------------------------------------------------------------------------
# Final Conv2d(Cin, 1, k=4, s=1, p=1) fused with the global average pool.
# --------------------------------------------------------------------------
def _conv_pool_kernel(a_ref, w_ref, b_ref, o_ref, *, inv_hw):
    p = a_ref[0]                                               # (HWo, K) bf16
    acc = jnp.dot(p, w_ref[...], preferred_element_type=jnp.float32)
    o_ref[0] = jnp.sum(acc, axis=0, keepdims=True) * inv_hw + b_ref[...]


def conv2d_globalpool(x, w, b):
    """x: [N,H,W,Cin], w: [4,4,Cin,1], b: [1] -> [N]."""
    kh, kw, Cin, Cout = w.shape
    N = x.shape[0]
    patches, Ho, Wo = _im2col(x.astype(jnp.bfloat16), kh, 1, 1)
    HWo = Ho * Wo
    K = kh * kw * Cin
    a = patches.reshape(N, HWo, K)
    w_p = jnp.pad(w.reshape(K, Cout).astype(jnp.bfloat16),
                  ((0, 0), (0, LANES - Cout)))
    b_p = jnp.pad(b.reshape(1, Cout).astype(jnp.float32),
                  ((0, 0), (0, LANES - Cout)))
    out = pl.pallas_call(
        functools.partial(_conv_pool_kernel, inv_hw=1.0 / HWo),
        out_shape=jax.ShapeDtypeStruct((N, 1, LANES), jnp.float32),
        grid=(N,),
        in_specs=[pl.BlockSpec((1, HWo, K), lambda n: (n, 0, 0)),
                  pl.BlockSpec((K, LANES), lambda n: (0, 0)),
                  pl.BlockSpec((1, LANES), lambda n: (0, 0))],
        out_specs=pl.BlockSpec((1, 1, LANES), lambda n: (n, 0, 0)),
        compiler_params=pltpu.CompilerParams(
            dimension_semantics=("parallel",)),
    )(a, w_p, b_p)
    return out[:, 0, 0]


# --------------------------------------------------------------------------
# Full discriminator forward (matches PyTorch `D.forward`)
# --------------------------------------------------------------------------
def d_forward(x_nchw, params):
    w1, b1, w2, b2, w3, b3, w4, b4, w5, b5 = params
    x = jnp.transpose(x_nchw, (0, 2, 3, 1))                     # NCHW -> NHWC

    # conv1 + fused LeakyReLU (bias kept: no InstanceNorm follows).
    x = conv2d(x, w1, b1, stride=2, pad=1, apply_act=True,
               out_dtype=jnp.bfloat16)[..., :w1.shape[-1]]
    # conv2..4: bias skipped (exactly cancelled by InstanceNorm's mean
    # subtraction); lane padding carried through IN, sliced before im2col.
    x = conv2d(x, w2, None, stride=2, pad=1, apply_act=False,
               out_dtype=jnp.float32)
    x = instance_norm_lrelu(x)[..., :w2.shape[-1]]
    x = conv2d(x, w3, None, stride=2, pad=1, apply_act=False,
               out_dtype=jnp.float32)
    x = instance_norm_lrelu(x)[..., :w3.shape[-1]]
    x = conv2d(x, w4, None, stride=1, pad=1, apply_act=False,
               out_dtype=jnp.float32)
    x = instance_norm_lrelu(x)[..., :w4.shape[-1]]
    # final Cout=1 conv fused with F.avg_pool2d(x, x.size()[2:]) + squeeze.
    # Note: PyTorch `.squeeze()` returns a 0-d scalar when N == 1; here the
    # result has shape [N].
    return conv2d_globalpool(x, w5, b5)


def init_params(key, hidden_dim, channels):
    """Deterministic PyTorch-style init; shapes follow D.__init__."""
    layer_dims = [
        (channels, hidden_dim),
        (hidden_dim, hidden_dim * 2),
        (hidden_dim * 2, hidden_dim * 4),
        (hidden_dim * 4, hidden_dim * 8),
        (hidden_dim * 8, 1),
    ]
    k = 4
    params = []
    for i, (cin, cout) in enumerate(layer_dims):
        kw_key, kb_key = jax.random.split(jax.random.fold_in(key, i))
        bound = 1.0 / ((cin * k * k) ** 0.5)
        w = jax.random.uniform(kw_key, (k, k, cin, cout), jnp.float32,
                               -bound, bound)
        b = jax.random.uniform(kb_key, (cout,), jnp.float32, -bound, bound)
        params += [w, b]
    return tuple(params)


if __name__ == "__main__":
    key = jax.random.PRNGKey(0)
    hidden_dim, channels = 8, 3
    N, H, W = 2, 32, 32              # 32 -> 16 -> 8 -> 4 -> 3 -> 2 spatial

    pkey, xkey = jax.random.split(key)
    params = init_params(pkey, hidden_dim, channels)
    x = jax.random.normal(xkey, (N, channels, H, W), jnp.float32)

    out = jax.jit(lambda xx: d_forward(xx, params))(x)
    jax.block_until_ready(out)
    assert out.shape == (N,), out.shape
    print("KERNEL_OK")
</pallas_src>

<mosaic_0001>
module attributes {stable_mosaic.version = 11 : i64} {
  func.func @_mm_bias_kernel(%arg0: i32, %arg1: memref<256x48xbf16, #tpu.memory_space<vmem>>, %arg2: memref<48x128xbf16, #tpu.memory_space<vmem>>, %arg3: memref<1x128xf32, #tpu.memory_space<vmem>>, %arg4: memref<256x128xbf16, #tpu.memory_space<vmem>>) attributes {dimension_semantics = [#tpu.dimension_semantics<parallel>], iteration_bounds = array<i64: 2>, scalar_prefetch = 0 : i64, scratch_operands = 0 : i64, tpu.core_type = #tpu.core_type<tc>, window_params = [{transform_indices = @transform_0, window_bounds = array<i64: 256, 48>}, {pipeline_mode = #tpu.pipeline_mode<synchronous>, transform_indices = @transform_1, window_bounds = array<i64: 48, 128>}, {pipeline_mode = #tpu.pipeline_mode<synchronous>, transform_indices = @transform_2, window_bounds = array<i64: 1, 128>}, {transform_indices = @transform_3, window_bounds = array<i64: 256, 128>}]} {
    %c0 = arith.constant 0 : index
    %c0_0 = arith.constant 0 : index
    %0 = vector.load %arg1[%c0, %c0_0] : memref<256x48xbf16, #tpu.memory_space<vmem>>, vector<256x48xbf16>
    %c0_1 = arith.constant 0 : index
    %c0_2 = arith.constant 0 : index
    %1 = vector.load %arg2[%c0_1, %c0_2] : memref<48x128xbf16, #tpu.memory_space<vmem>>, vector<48x128xbf16>
    %cst = arith.constant dense<0.000000e+00> : vector<256x128xf32>
    %2 = tpu.matmul %0, %1, %cst {dimension_numbers = #tpu.dot_dimension_numbers<[1], [0], [0], [1], [0, 0, 1, 1], [], []>} : vector<256x48xbf16>, vector<48x128xbf16>, vector<256x128xf32> -> vector<256x128xf32>
    %c0_3 = arith.constant 0 : index
    %c0_4 = arith.constant 0 : index
    %3 = vector.load %arg3[%c0_3, %c0_4] : memref<1x128xf32, #tpu.memory_space<vmem>>, vector<1x128xf32>
    %4 = vector.broadcast %3 : vector<1x128xf32> to vector<256x128xf32>
    %5 = arith.addf %2, %4 : vector<256x128xf32>
    %cst_5 = arith.constant 0.000000e+00 : f32
    %6 = vector.broadcast %cst_5 : f32 to vector<256x128xf32>
    %7 = arith.cmpf oge, %5, %6 : vector<256x128xf32>
    %cst_6 = arith.constant 2.000000e-01 : f32
    %8 = vector.broadcast %cst_6 : f32 to vector<256x128xf32>
    %9 = arith.mulf %8, %5 : vector<256x128xf32>
    %10 = arith.select %7, %5, %9 : vector<256x128xi1>, vector<256x128xf32>
    %11 = arith.truncf %10 : vector<256x128xf32> to vector<256x128xbf16>
    %c0_7 = arith.constant 0 : index
    %c0_8 = arith.constant 0 : index
    %12 = vector.load %arg4[%c0_7, %c0_8] : memref<256x128xbf16, #tpu.memory_space<vmem>>, vector<256x128xbf16>
    tpu.vector_store %arg4[%c0_7, %c0_8], %11 {strides = array<i32>} : memref<256x128xbf16, #tpu.memory_space<vmem>>, vector<256x128xbf16>,
    return
  }
  func.func @transform_0(%arg0: i32) -> (i32, i32) {
    %c0_i32 = arith.constant 0 : i32
    %c0_i32_0 = arith.constant 0 : i32
    return %arg0, %c0_i32 : i32, i32
  }
  func.func @transform_1(%arg0: i32) -> (i32, i32) {
    %c0_i32 = arith.constant 0 : i32
    %c0_i32_0 = arith.constant 0 : i32
    %c0_i32_1 = arith.constant 0 : i32
    return %c0_i32, %c0_i32_0 : i32, i32
  }
  func.func @transform_2(%arg0: i32) -> (i32, i32) {
    %c0_i32 = arith.constant 0 : i32
    %c0_i32_0 = arith.constant 0 : i32
    %c0_i32_1 = arith.constant 0 : i32
    return %c0_i32, %c0_i32_0 : i32, i32
  }
  func.func @transform_3(%arg0: i32) -> (i32, i32) {
    %c0_i32 = arith.constant 0 : i32
    %c0_i32_0 = arith.constant 0 : i32
    return %arg0, %c0_i32 : i32, i32
  }
}

module attributes {stable_mosaic.version = 11 : i64} {
  func.func @_mm_kernel(%arg0: i32, %arg1: memref<128x128xbf16, #tpu.memory_space<vmem>>, %arg2: memref<128x128xbf16, #tpu.memory_space<vmem>>, %arg3: memref<128x128xf32, #tpu.memory_space<vmem>>) attributes {dimension_semantics = [#tpu.dimension_semantics<parallel>], iteration_bounds = array<i64: 1>, scalar_prefetch = 0 : i64, scratch_operands = 0 : i64, tpu.core_type = #tpu.core_type<tc>, window_params = [{transform_indices = @transform_0, window_bounds = array<i64: 128, 128>}, {pipeline_mode = #tpu.pipeline_mode<synchronous>, transform_indices = @transform_1, window_bounds = array<i64: 128, 128>}, {transform_indices = @transform_2, window_bounds = array<i64: 128, 128>}]} {
    %c0 = arith.constant 0 : index
    %c0_0 = arith.constant 0 : index
    %0 = vector.load %arg1[%c0, %c0_0] : memref<128x128xbf16, #tpu.memory_space<vmem>>, vector<128x128xbf16>
    %c0_1 = arith.constant 0 : index
    %c0_2 = arith.constant 0 : index
    %1 = vector.load %arg2[%c0_1, %c0_2] : memref<128x128xbf16, #tpu.memory_space<vmem>>, vector<128x128xbf16>
    %cst = arith.constant dense<0.000000e+00> : vector<128x128xf32>
    %2 = tpu.matmul %0, %1, %cst {dimension_numbers = #tpu.dot_dimension_numbers<[1], [0], [0], [1], [0, 0, 1, 1], [], []>} : vector<128x128xbf16>, vector<128x128xbf16>, vector<128x128xf32> -> vector<128x128xf32>
    %c0_3 = arith.constant 0 : index
    %c0_4 = arith.constant 0 : index
    %3 = vector.load %arg3[%c0_3, %c0_4] : memref<128x128xf32, #tpu.memory_space<vmem>>, vector<128x128xf32>
    tpu.vector_store %arg3[%c0_3, %c0_4], %2 {strides = array<i32>} : memref<128x128xf32, #tpu.memory_space<vmem>>, vector<128x128xf32>,
    return
  }
  func.func @transform_0(%arg0: i32) -> (i32, i32) {
    %c0_i32 = arith.constant 0 : i32
    %c0_i32_0 = arith.constant 0 : i32
    return %arg0, %c0_i32 : i32, i32
  }
  func.func @transform_1(%arg0: i32) -> (i32, i32) {
    %c0_i32 = arith.constant 0 : i32
    %c0_i32_0 = arith.constant 0 : i32
    %c0_i32_1 = arith.constant 0 : i32
    return %c0_i32, %c0_i32_0 : i32, i32
  }
  func.func @transform_2(%arg0: i32) -> (i32, i32) {
    %c0_i32 = arith.constant 0 : i32
    %c0_i32_0 = arith.constant 0 : i32
    return %arg0, %c0_i32 : i32, i32
  }
}

module attributes {stable_mosaic.version = 11 : i64} {
  func.func @_inorm_lrelu_kernel(%arg0: i32, %arg1: memref<1x64x128xf32, #tpu.memory_space<vmem>>, %arg2: memref<1x64x128xbf16, #tpu.memory_space<vmem>>) attributes {dimension_semantics = [#tpu.dimension_semantics<parallel>], iteration_bounds = array<i64: 2>, scalar_prefetch = 0 : i64, scratch_operands = 0 : i64, tpu.core_type = #tpu.core_type<tc>, window_params = [{transform_indices = @transform_0, window_bounds = array<i64: 1, 64, 128>}, {transform_indices = @transform_1, window_bounds = array<i64: 1, 64, 128>}]} {
    %c0 = arith.constant 0 : index
    %c0_0 = arith.constant 0 : index
    %c0_1 = arith.constant 0 : index
    %0 = vector.load %arg1[%c0, %c0_0, %c0_1] : memref<1x64x128xf32, #tpu.memory_space<vmem>>, vector<1x64x128xf32>
    %1 = vector.shape_cast %0 : vector<1x64x128xf32> to vector<64x128xf32>
    %cst = arith.constant dense<0.000000e+00> : vector<128xf32>
    %2 = vector.multi_reduction <add>, %1, %cst [0] : vector<64x128xf32> to vector<128xf32>
    %3 = vector.shape_cast %2 : vector<128xf32> to vector<1x128xf32>
    %4 = arith.mulf %1, %1 : vector<64x128xf32>
    %cst_2 = arith.constant dense<0.000000e+00> : vector<128xf32>
    %5 = vector.multi_reduction <add>, %4, %cst_2 [0] : vector<64x128xf32> to vector<128xf32>
    %6 = vector.shape_cast %5 : vector<128xf32> to vector<1x128xf32>
    %cst_3 = arith.constant 1.562500e-02 : f32
    %7 = vector.broadcast %cst_3 : f32 to vector<1x128xf32>
    %8 = arith.mulf %3, %7 : vector<1x128xf32>
    %cst_4 = arith.constant 1.562500e-02 : f32
    %9 = vector.broadcast %cst_4 : f32 to vector<1x128xf32>
    %10 = arith.mulf %6, %9 : vector<1x128xf32>
    %11 = arith.mulf %8, %8 : vector<1x128xf32>
    %12 = arith.subf %10, %11 : vector<1x128xf32>
    %cst_5 = arith.constant 0.000000e+00 : f32
    %13 = vector.broadcast %cst_5 : f32 to vector<1x128xf32>
    %14 = arith.maximumf %12, %13 : vector<1x128xf32>
    %15 = vector.broadcast %8 : vector<1x128xf32> to vector<64x128xf32>
    %16 = arith.subf %1, %15 : vector<64x128xf32>
    %cst_6 = arith.constant 9.99999974E-6 : f32
    %17 = vector.broadcast %cst_6 : f32 to vector<1x128xf32>
    %18 = arith.addf %14, %17 : vector<1x128xf32>
    %19 = math.rsqrt %18 : vector<1x128xf32>
    %20 = vector.broadcast %19 : vector<1x128xf32> to vector<64x128xf32>
    %21 = arith.mulf %16, %20 : vector<64x128xf32>
    %cst_7 = arith.constant 0.000000e+00 : f32
    %22 = vector.broadcast %cst_7 : f32 to vector<64x128xf32>
    %23 = arith.cmpf oge, %21, %22 : vector<64x128xf32>
    %cst_8 = arith.constant 2.000000e-01 : f32
    %24 = vector.broadcast %cst_8 : f32 to vector<64x128xf32>
    %25 = arith.mulf %24, %21 : vector<64x128xf32>
    %26 = arith.select %23, %21, %25 : vector<64x128xi1>, vector<64x128xf32>
    %27 = arith.truncf %26 : vector<64x128xf32> to vector<64x128xbf16>
    %c0_9 = arith.constant 0 : index
    %c0_10 = arith.constant 0 : index
    %c0_11 = arith.constant 0 : index
    %28 = vector.load %arg2[%c0_9, %c0_10, %c0_11] : memref<1x64x128xbf16, #tpu.memory_space<vmem>>, vector<1x64x128xbf16>
    %29 = vector.shape_cast %28 : vector<1x64x128xbf16> to vector<64x128xbf16>
    %30 = vector.shape_cast %27 : vector<64x128xbf16> to vector<1x64x128xbf16>
    tpu.vector_store %arg2[%c0_9, %c0_10, %c0_11], %30 {strides = array<i32>} : memref<1x64x128xbf16, #tpu.memory_space<vmem>>, vector<1x64x128xbf16>,
    return
  }
  func.func @transform_0(%arg0: i32) -> (i32, i32, i32) {
    %c0_i32 = arith.constant 0 : i32
    %c0_i32_0 = arith.constant 0 : i32
    %c0_i32_1 = arith.constant 0 : i32
    return %arg0, %c0_i32, %c0_i32_0 : i32, i32, i32
  }
  func.func @transform_1(%arg0: i32) -> (i32, i32, i32) {
    %c0_i32 = arith.constant 0 : i32
    %c0_i32_0 = arith.constant 0 : i32
    %c0_i32_1 = arith.constant 0 : i32
    return %arg0, %c0_i32, %c0_i32_0 : i32, i32, i32
  }
}

module attributes {stable_mosaic.version = 11 : i64} {
  func.func @_mm_kernel(%arg0: i32, %arg1: memref<32x256xbf16, #tpu.memory_space<vmem>>, %arg2: memref<256x128xbf16, #tpu.memory_space<vmem>>, %arg3: memref<32x128xf32, #tpu.memory_space<vmem>>) attributes {dimension_semantics = [#tpu.dimension_semantics<parallel>], iteration_bounds = array<i64: 1>, scalar_prefetch = 0 : i64, scratch_operands = 0 : i64, tpu.core_type = #tpu.core_type<tc>, window_params = [{transform_indices = @transform_0, window_bounds = array<i64: 32, 256>}, {pipeline_mode = #tpu.pipeline_mode<synchronous>, transform_indices = @transform_1, window_bounds = array<i64: 256, 128>}, {transform_indices = @transform_2, window_bounds = array<i64: 32, 128>}]} {
    %c0 = arith.constant 0 : index
    %c0_0 = arith.constant 0 : index
    %0 = vector.load %arg1[%c0, %c0_0] : memref<32x256xbf16, #tpu.memory_space<vmem>>, vector<32x256xbf16>
    %c0_1 = arith.constant 0 : index
    %c0_2 = arith.constant 0 : index
    %1 = vector.load %arg2[%c0_1, %c0_2] : memref<256x128xbf16, #tpu.memory_space<vmem>>, vector<256x128xbf16>
    %cst = arith.constant dense<0.000000e+00> : vector<32x128xf32>
    %2 = tpu.matmul %0, %1, %cst {dimension_numbers = #tpu.dot_dimension_numbers<[1], [0], [0], [1], [0, 0, 1, 1], [], []>} : vector<32x256xbf16>, vector<256x128xbf16>, vector<32x128xf32> -> vector<32x128xf32>
    %c0_3 = arith.constant 0 : index
    %c0_4 = arith.constant 0 : index
    %3 = vector.load %arg3[%c0_3, %c0_4] : memref<32x128xf32, #tpu.memory_space<vmem>>, vector<32x128xf32>
    tpu.vector_store %arg3[%c0_3, %c0_4], %2 {strides = array<i32>} : memref<32x128xf32, #tpu.memory_space<vmem>>, vector<32x128xf32>,
    return
  }
  func.func @transform_0(%arg0: i32) -> (i32, i32) {
    %c0_i32 = arith.constant 0 : i32
    %c0_i32_0 = arith.constant 0 : i32
    return %arg0, %c0_i32 : i32, i32
  }
  func.func @transform_1(%arg0: i32) -> (i32, i32) {
    %c0_i32 = arith.constant 0 : i32
    %c0_i32_0 = arith.constant 0 : i32
    %c0_i32_1 = arith.constant 0 : i32
    return %c0_i32, %c0_i32_0 : i32, i32
  }
  func.func @transform_2(%arg0: i32) -> (i32, i32) {
    %c0_i32 = arith.constant 0 : i32
    %c0_i32_0 = arith.constant 0 : i32
    return %arg0, %c0_i32 : i32, i32
  }
}

module attributes {stable_mosaic.version = 11 : i64} {
  func.func @_inorm_lrelu_kernel(%arg0: i32, %arg1: memref<1x16x128xf32, #tpu.memory_space<vmem>>, %arg2: memref<1x16x128xbf16, #tpu.memory_space<vmem>>) attributes {dimension_semantics = [#tpu.dimension_semantics<parallel>], iteration_bounds = array<i64: 2>, scalar_prefetch = 0 : i64, scratch_operands = 0 : i64, tpu.core_type = #tpu.core_type<tc>, window_params = [{transform_indices = @transform_0, window_bounds = array<i64: 1, 16, 128>}, {transform_indices = @transform_1, window_bounds = array<i64: 1, 16, 128>}]} {
    %c0 = arith.constant 0 : index
    %c0_0 = arith.constant 0 : index
    %c0_1 = arith.constant 0 : index
    %0 = vector.load %arg1[%c0, %c0_0, %c0_1] : memref<1x16x128xf32, #tpu.memory_space<vmem>>, vector<1x16x128xf32>
    %1 = vector.shape_cast %0 : vector<1x16x128xf32> to vector<16x128xf32>
    %cst = arith.constant dense<0.000000e+00> : vector<128xf32>
    %2 = vector.multi_reduction <add>, %1, %cst [0] : vector<16x128xf32> to vector<128xf32>
    %3 = vector.shape_cast %2 : vector<128xf32> to vector<1x128xf32>
    %4 = arith.mulf %1, %1 : vector<16x128xf32>
    %cst_2 = arith.constant dense<0.000000e+00> : vector<128xf32>
    %5 = vector.multi_reduction <add>, %4, %cst_2 [0] : vector<16x128xf32> to vector<128xf32>
    %6 = vector.shape_cast %5 : vector<128xf32> to vector<1x128xf32>
    %cst_3 = arith.constant 6.250000e-02 : f32
    %7 = vector.broadcast %cst_3 : f32 to vector<1x128xf32>
    %8 = arith.mulf %3, %7 : vector<1x128xf32>
    %cst_4 = arith.constant 6.250000e-02 : f32
    %9 = vector.broadcast %cst_4 : f32 to vector<1x128xf32>
    %10 = arith.mulf %6, %9 : vector<1x128xf32>
    %11 = arith.mulf %8, %8 : vector<1x128xf32>
    %12 = arith.subf %10, %11 : vector<1x128xf32>
    %cst_5 = arith.constant 0.000000e+00 : f32
    %13 = vector.broadcast %cst_5 : f32 to vector<1x128xf32>
    %14 = arith.maximumf %12, %13 : vector<1x128xf32>
    %15 = vector.broadcast %8 : vector<1x128xf32> to vector<16x128xf32>
    %16 = arith.subf %1, %15 : vector<16x128xf32>
    %cst_6 = arith.constant 9.99999974E-6 : f32
    %17 = vector.broadcast %cst_6 : f32 to vector<1x128xf32>
    %18 = arith.addf %14, %17 : vector<1x128xf32>
    %19 = math.rsqrt %18 : vector<1x128xf32>
    %20 = vector.broadcast %19 : vector<1x128xf32> to vector<16x128xf32>
    %21 = arith.mulf %16, %20 : vector<16x128xf32>
    %cst_7 = arith.constant 0.000000e+00 : f32
    %22 = vector.broadcast %cst_7 : f32 to vector<16x128xf32>
    %23 = arith.cmpf oge, %21, %22 : vector<16x128xf32>
    %cst_8 = arith.constant 2.000000e-01 : f32
    %24 = vector.broadcast %cst_8 : f32 to vector<16x128xf32>
    %25 = arith.mulf %24, %21 : vector<16x128xf32>
    %26 = arith.select %23, %21, %25 : vector<16x128xi1>, vector<16x128xf32>
    %27 = arith.truncf %26 : vector<16x128xf32> to vector<16x128xbf16>
    %c0_9 = arith.constant 0 : index
    %c0_10 = arith.constant 0 : index
    %c0_11 = arith.constant 0 : index
    %28 = vector.load %arg2[%c0_9, %c0_10, %c0_11] : memref<1x16x128xbf16, #tpu.memory_space<vmem>>, vector<1x16x128xbf16>
    %29 = vector.shape_cast %28 : vector<1x16x128xbf16> to vector<16x128xbf16>
    %30 = vector.shape_cast %27 : vector<16x128xbf16> to vector<1x16x128xbf16>
    tpu.vector_store %arg2[%c0_9, %c0_10, %c0_11], %30 {strides = array<i32>} : memref<1x16x128xbf16, #tpu.memory_space<vmem>>, vector<1x16x128xbf16>,
    return
  }
  func.func @transform_0(%arg0: i32) -> (i32, i32, i32) {
    %c0_i32 = arith.constant 0 : i32
    %c0_i32_0 = arith.constant 0 : i32
    %c0_i32_1 = arith.constant 0 : i32
    return %arg0, %c0_i32, %c0_i32_0 : i32, i32, i32
  }
  func.func @transform_1(%arg0: i32) -> (i32, i32, i32) {
    %c0_i32 = arith.constant 0 : i32
    %c0_i32_0 = arith.constant 0 : i32
    %c0_i32_1 = arith.constant 0 : i32
    return %arg0, %c0_i32, %c0_i32_0 : i32, i32, i32
  }
}

module attributes {stable_mosaic.version = 11 : i64} {
  func.func @_mm_kernel(%arg0: i32, %arg1: memref<24x512xbf16, #tpu.memory_space<vmem>>, %arg2: memref<512x128xbf16, #tpu.memory_space<vmem>>, %arg3: memref<24x128xf32, #tpu.memory_space<vmem>>) attributes {dimension_semantics = [#tpu.dimension_semantics<parallel>], iteration_bounds = array<i64: 1>, scalar_prefetch = 0 : i64, scratch_operands = 0 : i64, tpu.core_type = #tpu.core_type<tc>, window_params = [{transform_indices = @transform_0, window_bounds = array<i64: 24, 512>}, {pipeline_mode = #tpu.pipeline_mode<synchronous>, transform_indices = @transform_1, window_bounds = array<i64: 512, 128>}, {transform_indices = @transform_2, window_bounds = array<i64: 24, 128>}]} {
    %c0 = arith.constant 0 : index
    %c0_0 = arith.constant 0 : index
    %0 = vector.load %arg1[%c0, %c0_0] : memref<24x512xbf16, #tpu.memory_space<vmem>>, vector<24x512xbf16>
    %c0_1 = arith.constant 0 : index
    %c0_2 = arith.constant 0 : index
    %1 = vector.load %arg2[%c0_1, %c0_2] : memref<512x128xbf16, #tpu.memory_space<vmem>>, vector<512x128xbf16>
    %cst = arith.constant dense<0.000000e+00> : vector<24x128xf32>
    %2 = tpu.matmul %0, %1, %cst {dimension_numbers = #tpu.dot_dimension_numbers<[1], [0], [0], [1], [0, 0, 1, 1], [], []>} : vector<24x512xbf16>, vector<512x128xbf16>, vector<24x128xf32> -> vector<24x128xf32>
    %c0_3 = arith.constant 0 : index
    %c0_4 = arith.constant 0 : index
    %3 = vector.load %arg3[%c0_3, %c0_4] : memref<24x128xf32, #tpu.memory_space<vmem>>, vector<24x128xf32>
    tpu.vector_store %arg3[%c0_3, %c0_4], %2 {strides = array<i32>} : memref<24x128xf32, #tpu.memory_space<vmem>>, vector<24x128xf32>,
    return
  }
  func.func @transform_0(%arg0: i32) -> (i32, i32) {
    %c0_i32 = arith.constant 0 : i32
    %c0_i32_0 = arith.constant 0 : i32
    return %arg0, %c0_i32 : i32, i32
  }
  func.func @transform_1(%arg0: i32) -> (i32, i32) {
    %c0_i32 = arith.constant 0 : i32
    %c0_i32_0 = arith.constant 0 : i32
    %c0_i32_1 = arith.constant 0 : i32
    return %c0_i32, %c0_i32_0 : i32, i32
  }
  func.func @transform_2(%arg0: i32) -> (i32, i32) {
    %c0_i32 = arith.constant 0 : i32
    %c0_i32_0 = arith.constant 0 : i32
    return %arg0, %c0_i32 : i32, i32
  }
}

module attributes {stable_mosaic.version = 11 : i64} {
  func.func @_inorm_lrelu_kernel(%arg0: i32, %arg1: memref<1x9x128xf32, #tpu.memory_space<vmem>>, %arg2: memref<1x9x128xbf16, #tpu.memory_space<vmem>>) attributes {dimension_semantics = [#tpu.dimension_semantics<parallel>], iteration_bounds = array<i64: 2>, scalar_prefetch = 0 : i64, scratch_operands = 0 : i64, tpu.core_type = #tpu.core_type<tc>, window_params = [{transform_indices = @transform_0, window_bounds = array<i64: 1, 9, 128>}, {transform_indices = @transform_1, window_bounds = array<i64: 1, 9, 128>}]} {
    %c0 = arith.constant 0 : index
    %c0_0 = arith.constant 0 : index
    %c0_1 = arith.constant 0 : index
    %0 = vector.load %arg1[%c0, %c0_0, %c0_1] : memref<1x9x128xf32, #tpu.memory_space<vmem>>, vector<1x9x128xf32>
    %1 = vector.shape_cast %0 : vector<1x9x128xf32> to vector<9x128xf32>
    %cst = arith.constant dense<0.000000e+00> : vector<128xf32>
    %2 = vector.multi_reduction <add>, %1, %cst [0] : vector<9x128xf32> to vector<128xf32>
    %3 = vector.shape_cast %2 : vector<128xf32> to vector<1x128xf32>
    %4 = arith.mulf %1, %1 : vector<9x128xf32>
    %cst_2 = arith.constant dense<0.000000e+00> : vector<128xf32>
    %5 = vector.multi_reduction <add>, %4, %cst_2 [0] : vector<9x128xf32> to vector<128xf32>
    %6 = vector.shape_cast %5 : vector<128xf32> to vector<1x128xf32>
    %cst_3 = arith.constant 0.111111112 : f32
    %7 = vector.broadcast %cst_3 : f32 to vector<1x128xf32>
    %8 = arith.mulf %3, %7 : vector<1x128xf32>
    %cst_4 = arith.constant 0.111111112 : f32
    %9 = vector.broadcast %cst_4 : f32 to vector<1x128xf32>
    %10 = arith.mulf %6, %9 : vector<1x128xf32>
    %11 = arith.mulf %8, %8 : vector<1x128xf32>
    %12 = arith.subf %10, %11 : vector<1x128xf32>
    %cst_5 = arith.constant 0.000000e+00 : f32
    %13 = vector.broadcast %cst_5 : f32 to vector<1x128xf32>
    %14 = arith.maximumf %12, %13 : vector<1x128xf32>
    %15 = vector.broadcast %8 : vector<1x128xf32> to vector<9x128xf32>
    %16 = arith.subf %1, %15 : vector<9x128xf32>
    %cst_6 = arith.constant 9.99999974E-6 : f32
    %17 = vector.broadcast %cst_6 : f32 to vector<1x128xf32>
    %18 = arith.addf %14, %17 : vector<1x128xf32>
    %19 = math.rsqrt %18 : vector<1x128xf32>
    %20 = vector.broadcast %19 : vector<1x128xf32> to vector<9x128xf32>
    %21 = arith.mulf %16, %20 : vector<9x128xf32>
    %cst_7 = arith.constant 0.000000e+00 : f32
    %22 = vector.broadcast %cst_7 : f32 to vector<9x128xf32>
    %23 = arith.cmpf oge, %21, %22 : vector<9x128xf32>
    %cst_8 = arith.constant 2.000000e-01 : f32
    %24 = vector.broadcast %cst_8 : f32 to vector<9x128xf32>
    %25 = arith.mulf %24, %21 : vector<9x128xf32>
    %26 = arith.select %23, %21, %25 : vector<9x128xi1>, vector<9x128xf32>
    %27 = arith.truncf %26 : vector<9x128xf32> to vector<9x128xbf16>
    %c0_9 = arith.constant 0 : index
    %c0_10 = arith.constant 0 : index
    %c0_11 = arith.constant 0 : index
    %28 = vector.load %arg2[%c0_9, %c0_10, %c0_11] : memref<1x9x128xbf16, #tpu.memory_space<vmem>>, vector<1x9x128xbf16>
    %29 = vector.shape_cast %28 : vector<1x9x128xbf16> to vector<9x128xbf16>
    %30 = vector.shape_cast %27 : vector<9x128xbf16> to vector<1x9x128xbf16>
    tpu.vector_store %arg2[%c0_9, %c0_10, %c0_11], %30 {strides = array<i32>} : memref<1x9x128xbf16, #tpu.memory_space<vmem>>, vector<1x9x128xbf16>,
    return
  }
  func.func @transform_0(%arg0: i32) -> (i32, i32, i32) {
    %c0_i32 = arith.constant 0 : i32
    %c0_i32_0 = arith.constant 0 : i32
    %c0_i32_1 = arith.constant 0 : i32
    return %arg0, %c0_i32, %c0_i32_0 : i32, i32, i32
  }
  func.func @transform_1(%arg0: i32) -> (i32, i32, i32) {
    %c0_i32 = arith.constant 0 : i32
    %c0_i32_0 = arith.constant 0 : i32
    %c0_i32_1 = arith.constant 0 : i32
    return %arg0, %c0_i32, %c0_i32_0 : i32, i32, i32
  }
}

module attributes {stable_mosaic.version = 11 : i64} {
  func.func @_conv_pool_kernel(%arg0: i32, %arg1: memref<1x4x1024xbf16, #tpu.memory_space<vmem>>, %arg2: memref<1024x128xbf16, #tpu.memory_space<vmem>>, %arg3: memref<1x128xf32, #tpu.memory_space<vmem>>, %arg4: memref<1x1x128xf32, #tpu.memory_space<vmem>>) attributes {dimension_semantics = [#tpu.dimension_semantics<parallel>], iteration_bounds = array<i64: 2>, scalar_prefetch = 0 : i64, scratch_operands = 0 : i64, tpu.core_type = #tpu.core_type<tc>, window_params = [{transform_indices = @transform_0, window_bounds = array<i64: 1, 4, 1024>}, {pipeline_mode = #tpu.pipeline_mode<synchronous>, transform_indices = @transform_1, window_bounds = array<i64: 1024, 128>}, {pipeline_mode = #tpu.pipeline_mode<synchronous>, transform_indices = @transform_2, window_bounds = array<i64: 1, 128>}, {transform_indices = @transform_3, window_bounds = array<i64: 1, 1, 128>}]} {
    %c0 = arith.constant 0 : index
    %c0_0 = arith.constant 0 : index
    %c0_1 = arith.constant 0 : index
    %0 = vector.load %arg1[%c0, %c0_0, %c0_1] : memref<1x4x1024xbf16, #tpu.memory_space<vmem>>, vector<1x4x1024xbf16>
    %1 = vector.shape_cast %0 : vector<1x4x1024xbf16> to vector<4x1024xbf16>
    %c0_2 = arith.constant 0 : index
    %c0_3 = arith.constant 0 : index
    %2 = vector.load %arg2[%c0_2, %c0_3] : memref<1024x128xbf16, #tpu.memory_space<vmem>>, vector<1024x128xbf16>
    %cst = arith.constant dense<0.000000e+00> : vector<4x128xf32>
    %3 = tpu.matmul %1, %2, %cst {dimension_numbers = #tpu.dot_dimension_numbers<[1], [0], [0], [1], [0, 0, 1, 1], [], []>} : vector<4x1024xbf16>, vector<1024x128xbf16>, vector<4x128xf32> -> vector<4x128xf32>
    %cst_4 = arith.constant dense<0.000000e+00> : vector<128xf32>
    %4 = vector.multi_reduction <add>, %3, %cst_4 [0] : vector<4x128xf32> to vector<128xf32>
    %5 = vector.shape_cast %4 : vector<128xf32> to vector<1x128xf32>
    %cst_5 = arith.constant 2.500000e-01 : f32
    %6 = vector.broadcast %cst_5 : f32 to vector<1x128xf32>
    %7 = arith.mulf %5, %6 : vector<1x128xf32>
    %c0_6 = arith.constant 0 : index
    %c0_7 = arith.constant 0 : index
    %8 = vector.load %arg3[%c0_6, %c0_7] : memref<1x128xf32, #tpu.memory_space<vmem>>, vector<1x128xf32>
    %9 = arith.addf %7, %8 : vector<1x128xf32>
    %c0_8 = arith.constant 0 : index
    %c0_9 = arith.constant 0 : index
    %c0_10 = arith.constant 0 : index
    %10 = vector.load %arg4[%c0_8, %c0_9, %c0_10] : memref<1x1x128xf32, #tpu.memory_space<vmem>>, vector<1x1x128xf32>
    %11 = vector.shape_cast %10 : vector<1x1x128xf32> to vector<1x128xf32>
    %12 = vector.shape_cast %9 : vector<1x128xf32> to vector<1x1x128xf32>
    tpu.vector_store %arg4[%c0_8, %c0_9, %c0_10], %12 {strides = array<i32>} : memref<1x1x128xf32, #tpu.memory_space<vmem>>, vector<1x1x128xf32>,
    return
  }
  func.func @transform_0(%arg0: i32) -> (i32, i32, i32) {
    %c0_i32 = arith.constant 0 : i32
    %c0_i32_0 = arith.constant 0 : i32
    %c0_i32_1 = arith.constant 0 : i32
    return %arg0, %c0_i32, %c0_i32_0 : i32, i32, i32
  }
  func.func @transform_1(%arg0: i32) -> (i32, i32) {
    %c0_i32 = arith.constant 0 : i32
    %c0_i32_0 = arith.constant 0 : i32
    %c0_i32_1 = arith.constant 0 : i32
    return %c0_i32, %c0_i32_0 : i32, i32
  }
  func.func @transform_2(%arg0: i32) -> (i32, i32) {
    %c0_i32 = arith.constant 0 : i32
    %c0_i32_0 = arith.constant 0 : i32
    %c0_i32_1 = arith.constant 0 : i32
    return %c0_i32, %c0_i32_0 : i32, i32
  }
  func.func @transform_3(%arg0: i32) -> (i32, i32, i32) {
    %c0_i32 = arith.constant 0 : i32
    %c0_i32_0 = arith.constant 0 : i32
    %c0_i32_1 = arith.constant 0 : i32
    return %arg0, %c0_i32, %c0_i32_0 : i32, i32, i32
  }
}

</mosaic_0001>

<llo_original>
// kernel: _lambda_.8
$region0: #{_lambda_.8}
  #allocation0 [shape = 'u32[]', space=smem, size = 0x4, offset = 0x4, fixed_abs, tag = 'smem constant byte address 0x4 - core index']
  #allocation1 [shape = 'u32[144,128]{1,0:T(1,128)}', space=vmem, size = 0x12000, scoped, tag = 'internal scratch']
  %s0 = inlined_call_operand.vmem [shape: bf16[512,48], index: 0, kind: input, shape index: {}]
  %s1 = inlined_call_operand.vmem [shape: bf16[48,128], index: 1, kind: input, shape index: {}]
  %s2 = inlined_call_operand.vmem [shape: f32[1,128], index: 2, kind: input, shape index: {}]
  %s3 = inlined_call_operand.vmem [shape: bf16[512,128], index: 3, kind: output, shape index: {}]
  %s4 = sld [smem:[#allocation0]]
  $region45: #{_lambda_.8} parent=0
    _
  %s6 = ssub.s32 1, %s4
  %s7 = scalar_select 0, %s6, %s4
  loop: start=0, step=1, limit=4
  $region2: #{_lambda_.8} parent=0 // loop_pre_header
    _
  $region3: #{_lambda_.8} parent=0 // loop_header
    %s9 = sphi 0, %s13
    %p10 = scmp.ge.s32.totalorder %s9, 4
    %s19 = sphi 0, %s21
    %s22 = sphi 0, %s19
    %s23 = sphi 0, %s22
    %s39 = sphi 0, %s23
    %s43 = sphi 0, %s43
    %s45 = sphi 0, %s43
    %s46 = sphi 0, %s45
    %s60 = sphi 0, %s46
    %s64 = sphi 0, %s64
    %s66 = sphi 0, %s64
    %s67 = sphi 0, %s66
    %s81 = sphi 0, %s67
    %s87 = sphi 0, %s89
    %s90 = sphi 0, %s87
    %s91 = sphi 0, %s90
    %s107 = sphi 0, %s91
  $region4: #{_lambda_.8} parent=0 // loop_header_branch
    %12 = sbr.rel (%p10) target = $region8
  $region5: #{_lambda_.8} parent=0 // loop_body
    %s14 = ssub.s32 %s9, 1
    %s15 = ssub.s32 %s9, 2
    %s16 = sadd.s32 %s9, 1
    %s17 = ssub.s32 %s9, %s16
    %p18 = scmp.eq.s32.totalorder %s17, 0
    %s20 = sadd.s32 %s19, 1
    %s21 = scalar_select %p18, %s19, %s20
    %p24 = pneg %p18
    %p25 = scmp.eq.s32.totalorder %s9, 1
    %p26 = por %p24, %p25
    %p27 = scmp.ne.s32.totalorder %s19, %s22
    %p28 = scmp.eq.s32.totalorder %s9, 0
    %p29 = por %p27, %p28
    %p30 = scmp.ne.s32.totalorder %s19, %s22
    %p31 = scmp.eq.s32.totalorder %s14, 1
    %p32 = por %p30, %p31
    %p33 = scmp.ne.s32.totalorder %s22, %s23
    %p34 = scmp.eq.s32.totalorder %s14, 0
    %p35 = por %p33, %p34
    %p36 = scmp.ne.s32.totalorder %s22, %s23
    %p37 = scmp.eq.s32.totalorder %s15, 1
    %p38 = por %p36, %p37
    %p40 = scmp.ne.s32.totalorder %s23, %s39
    %p41 = scmp.eq.s32.totalorder %s15, 0
    %p42 = por %p40, %p41
    %s44 = sadd.s32 %s43, 1
    %p47 = scmp.eq.s32.totalorder %s9, 1
    %p48 = scmp.ne.s32.totalorder %s43, %s45
    %p49 = scmp.eq.s32.totalorder %s9, 0
    %p50 = por %p48, %p49
    %p51 = scmp.ne.s32.totalorder %s43, %s45
    %p52 = scmp.eq.s32.totalorder %s14, 1
    %p53 = por %p51, %p52
    %p54 = scmp.ne.s32.totalorder %s45, %s46
    %p55 = scmp.eq.s32.totalorder %s14, 0
    %p56 = por %p54, %p55
    %p57 = scmp.ne.s32.totalorder %s45, %s46
    %p58 = scmp.eq.s32.totalorder %s15, 1
    %p59 = por %p57, %p58
    %p61 = scmp.ne.s32.totalorder %s46, %s60
    %p62 = scmp.eq.s32.totalorder %s15, 0
    %p63 = por %p61, %p62
    %s65 = sadd.s32 %s64, 1
    %p68 = scmp.eq.s32.totalorder %s9, 1
    %p69 = scmp.ne.s32.totalorder %s64, %s66
    %p70 = scmp.eq.s32.totalorder %s9, 0
    %p71 = por %p69, %p70
    %p72 = scmp.ne.s32.totalorder %s64, %s66
    %p73 = scmp.eq.s32.totalorder %s14, 1
    %p74 = por %p72, %p73
    %p75 = scmp.ne.s32.totalorder %s66, %s67
    %p76 = scmp.eq.s32.totalorder %s14, 0
    %p77 = por %p75, %p76
    %p78 = scmp.ne.s32.totalorder %s66, %s67
    %p79 = scmp.eq.s32.totalorder %s15, 1
    %p80 = por %p78, %p79
    %p82 = scmp.ne.s32.totalorder %s67, %s81
    %p83 = scmp.eq.s32.totalorder %s15, 0
    %p84 = por %p82, %p83
    %s85 = ssub.s32 %s9, %s16
    %p86 = scmp.eq.s32.totalorder %s85, 0
    %s88 = sadd.s32 %s87, 1
    %s89 = scalar_select %p86, %s87, %s88
    %p92 = pneg %p86
    %p93 = scmp.eq.s32.totalorder %s9, 1
    %p94 = por %p92, %p93
    %p95 = scmp.ne.s32.totalorder %s87, %s90
    %p96 = scmp.eq.s32.totalorder %s9, 0
    %p97 = por %p95, %p96
    %p98 = scmp.ne.s32.totalorder %s87, %s90
    %p99 = scmp.eq.s32.totalorder %s14, 1
    %p100 = por %p98, %p99
    %p101 = scmp.ne.s32.totalorder %s90, %s91
    %p102 = scmp.eq.s32.totalorder %s14, 0
    %p103 = por %p101, %p102
    %p104 = scmp.ne.s32.totalorder %s90, %s91
    %p105 = scmp.eq.s32.totalorder %s15, 1
    %p106 = por %p104, %p105
    %p108 = scmp.ne.s32.totalorder %s91, %s107
    %p109 = scmp.eq.s32.totalorder %s15, 0
    %p110 = por %p108, %p109
    %p111 = scmp.le.s32.totalorder 1, %s9
    %p112 = scmp.lt.s32.totalorder %s9, 3
    %p113 = pnand %p111, %p112
    %p114 = pneg %p113
    // Predicated region
    $region9: #{_lambda_.8} parent=5 // pred_check
      _
    $region10: #{_lambda_.8} parent=5 // pred_check_branch
      %116 = sbr.rel (%p113) target = $region12
    $region11: #{_lambda_.8} parent=5 // pred_region
      %s117 = ssub.s32 %s9, 1
      // Predicated region
      $region13: #{_lambda_.8} parent=11 // pred_check
        %p118 = pneg %p56
      $region14: #{_lambda_.8} parent=11 // pred_check_branch
        %120 = sbr.rel (%p118) target = $region16
      $region15: #{_lambda_.8} parent=11 // pred_region
        _
      $region16: #{_lambda_.8} parent=11 // pred_fallthru
        _
      // Predicated region
      $region17: #{_lambda_.8} parent=11 // pred_check
        %p121 = pneg %p77
      $region18: #{_lambda_.8} parent=11 // pred_check_branch
        %123 = sbr.rel (%p121) target = $region20
      $region19: #{_lambda_.8} parent=11 // pred_region
        _
      $region20: #{_lambda_.8} parent=11 // pred_fallthru
        _
    $region12: #{_lambda_.8} parent=5 // pred_fallthru
      _
    %p124 = scmp.lt.s32.totalorder %s9, 2
    // Predicated region
    $region21: #{_lambda_.8} parent=5 // pred_check
      %p125 = pneg %p124
    $region22: #{_lambda_.8} parent=5 // pred_check_branch
      %127 = sbr.rel (%p125) target = $region24
    $region23: #{_lambda_.8} parent=5 // pred_region
      // Predicated region
      $region25: #{_lambda_.8} parent=23 // pred_check
        %p128 = pneg %p29
      $region26: #{_lambda_.8} parent=23 // pred_check_branch
        %130 = sbr.rel (%p128) target = $region28
      $region27: #{_lambda_.8} parent=23 // pred_region
        %s131 = smul.u32 32, %s9
        %p132 = scmp.lt.s32.totalorder %s131, 63
        %s133 = scalar_select %p132, %s131, 63
        %s134 = smul.addr %s133, 4
        %s135 = scalar_lea.vmem %s0, %s134
        %s136 = smul.u32 32, %s9
      $region28: #{_lambda_.8} parent=23 // pred_fallthru
        _
    $region24: #{_lambda_.8} parent=5 // pred_fallthru
      _
    %p137 = scmp.le.s32.totalorder 1, %s9
    %p138 = scmp.lt.s32.totalorder %s9, 3
    %p139 = pnand %p137, %p138
    %p140 = pneg %p139
    // Predicated region
    $region29: #{_lambda_.8} parent=5 // pred_check
      _
    $region30: #{_lambda_.8} parent=5 // pred_check_branch
      %142 = sbr.rel (%p139) target = $region32
    $region31: #{_lambda_.8} parent=5 // pred_region
      %s143 = ssub.s32 %s9, 1
      %s144 = smul.u32 32, %s14
      %p145 = scmp.lt.s32.totalorder %s144, 63
      %s146 = scalar_select %p145, %s144, 63
      %s147 = smul.addr %s146, 4
      %s148 = scalar_lea.vmem %s0, %s147
      %p149 = pneg %p35
      %p150 = pneg %p32
      %p151 = pneg %p56
      %p152 = pneg %p53
      %p153 = pneg %p77
      %p154 = pneg %p74
      %p155 = pneg %p103
      %p156 = pneg %p100
      %s157 = smul.u32 32, %s14
      %p158 = scmp.lt.s32.totalorder %s157, 63
      %s159 = scalar_select %p158, %s157, 63
      %s160 = smul.addr %s159, 4
      %s161 = scalar_lea.vmem %s3, %s160
      %s162 = smul.u32 32, %s14
      %p163 = scmp.lt.s32.totalorder %s162, 63
      %s164 = scalar_select %p163, %s162, 63
      %s165 = smul.addr %s164, 4
      %s166 = scalar_lea.vmem %s0, %s165
      %s167 = smul.u32 32, %s14
      %s168 = smul.u32 32, %s14
      %p169 = scmp.lt.s32.totalorder %s168, 63
      %s170 = scalar_select %p169, %s168, 63
      %s171 = smul.addr %s170, 4
      %s172 = scalar_lea.vmem %s3, %s171
      %s173 = smul.u32 32, %s14
      %v175 = vld [vmem:[%s166] sm:$0xf]
      %v176 = vld [vmem:[%s166 + $0x4] sm:$0xf]
      %v177 = vld [vmem:[%s166 + $0x8] sm:$0xf]
      %v178 = vld [vmem:[%s166 + $0xc] sm:$0xf]
      %v179 = vld [vmem:[%s166 + $0x10] sm:$0xf]
      %v180 = vld [vmem:[%s166 + $0x14] sm:$0xf]
      %v181 = vld [vmem:[%s166 + $0x18] sm:$0xf]
      %v182 = vld [vmem:[%s166 + $0x1c] sm:$0xf]
      %v183 = vld [vmem:[%s166 + $0x20] sm:$0xf]
      %v184 = vld [vmem:[%s166 + $0x24] sm:$0xf]
      %v185 = vld [vmem:[%s166 + $0x28] sm:$0xf]
      %v186 = vld [vmem:[%s166 + $0x2c] sm:$0xf]
      %v187 = vld [vmem:[%s166 + $0x30] sm:$0xf]
      %v188 = vld [vmem:[%s166 + $0x34] sm:$0xf]
      %v189 = vld [vmem:[%s166 + $0x38] sm:$0xf]
      %v190 = vld [vmem:[%s166 + $0x3c] sm:$0xf]
      %v191 = vld [vmem:[%s166 + $0x40] sm:$0xf]
      %v192 = vld [vmem:[%s166 + $0x44] sm:$0xf]
      %v193 = vld [vmem:[%s166 + $0x48] sm:$0xf]
      %v194 = vld [vmem:[%s166 + $0x4c] sm:$0xf]
      %v195 = vld [vmem:[%s166 + $0x50] sm:$0xf]
      %v196 = vld [vmem:[%s166 + $0x54] sm:$0xf]
      %v197 = vld [vmem:[%s166 + $0x58] sm:$0xf]
      %v198 = vld [vmem:[%s166 + $0x5c] sm:$0xf]
      %v199 = vld [vmem:[%s166 + $0x60] sm:$0xf]
      %v200 = vld [vmem:[%s166 + $0x64] sm:$0xf]
      %v201 = vld [vmem:[%s166 + $0x68] sm:$0xf]
      %v202 = vld [vmem:[%s166 + $0x6c] sm:$0xf]
      %v203 = vld [vmem:[%s166 + $0x70] sm:$0xf]
      %v204 = vld [vmem:[%s166 + $0x74] sm:$0xf]
      %v205 = vld [vmem:[%s166 + $0x78] sm:$0xf]
      %v206 = vld [vmem:[%s166 + $0x7c] sm:$0xf]
      %v207 = vld [vmem:[%s1] sm:$0xf]
      %v208 = vld [vmem:[%s1 + $0x4] sm:$0xf]
      %v209 = vld [vmem:[%s1 + $0x8] sm:$0xf]
      %v210 = vld [vmem:[%s1 + $0xc] sm:$0xf]
      %v211 = vld [vmem:[%s1 + $0x10] sm:$0xf]
      %v212 = vld [vmem:[%s1 + $0x14] sm:$0xf]
      %v213 = vld [vmem:[%s2] sm:$0x1]
      %v215 = vlaneseq
      %v216 = vshrl.u32 %v215, 7
      %v217 = vsub.s32 0, %v216
      %v218 = vrot.slane %v213, %v217
      %v252 = vunpack.c.l.b16 %v175
      %v253 = vunpack.c.l.b16 %v176
      %v254 = vunpack.c.l.b16 %v177
      %v255 = vunpack.c.l.b16 %v178
      %v256 = vunpack.c.l.b16 %v179
      %v257 = vunpack.c.l.b16 %v180
      %v258 = vunpack.c.l.b16 %v181
      %v259 = vunpack.c.l.b16 %v182
      %v260 = vunpack.c.l.b16 %v183
      %v261 = vunpack.c.l.b16 %v184
      %v262 = vunpack.c.l.b16 %v185
      %v263 = vunpack.c.l.b16 %v186
      %v264 = vunpack.c.l.b16 %v187
      %v265 = vunpack.c.l.b16 %v188
      %v266 = vunpack.c.l.b16 %v189
      %v267 = vunpack.c.l.b16 %v190
      %v268 = vunpack.c.l.b16 %v191
      %v269 = vunpack.c.l.b16 %v192
      %v270 = vunpack.c.l.b16 %v193
      %v271 = vunpack.c.l.b16 %v194
      %v272 = vunpack.c.l.b16 %v195
      %v273 = vunpack.c.l.b16 %v196
      %v274 = vunpack.c.l.b16 %v197
      %v275 = vunpack.c.l.b16 %v198
      %v276 = vunpack.c.l.b16 %v199
      %v277 = vunpack.c.l.b16 %v200
      %v278 = vunpack.c.l.b16 %v201
      %v279 = vunpack.c.l.b16 %v202
      %v280 = vunpack.c.l.b16 %v203
      %v281 = vunpack.c.l.b16 %v204
      %v282 = vunpack.c.l.b16 %v205
      %v283 = vunpack.c.l.b16 %v206
      %v284 = vpack.c.b16 %v253, %v252
      %v285 = vpack.c.b16 %v255, %v254
      %v286 = vpack.c.b16 %v257, %v256
      %v287 = vpack.c.b16 %v259, %v258
      %v288 = vpack.c.b16 %v261, %v260
      %v289 = vpack.c.b16 %v263, %v262
      %v290 = vpack.c.b16 %v265, %v264
      %v291 = vpack.c.b16 %v267, %v266
      %v292 = vpack.c.b16 %v269, %v268
      %v293 = vpack.c.b16 %v271, %v270
      %v294 = vpack.c.b16 %v273, %v272
      %v295 = vpack.c.b16 %v275, %v274
      %v296 = vpack.c.b16 %v277, %v276
      %v297 = vpack.c.b16 %v279, %v278
      %v298 = vpack.c.b16 %v281, %v280
      %v299 = vpack.c.b16 %v283, %v282
      %v306 = vunpack.c.l.b16 %v207
      %v307 = vunpack.c.l.b16 %v208
      %v308 = vunpack.c.l.b16 %v209
      %v309 = vunpack.c.l.b16 %v210
      %v310 = vunpack.c.l.b16 %v211
      %v311 = vunpack.c.l.b16 %v212
      %v312 = vpack.c.b16 %v307, %v306
      %v313 = vpack.c.b16 %v309, %v308
      %v314 = vpack.c.b16 %v311, %v310
      %vm318 = vcmask 392192
      %v320 = vsel %vm318, %v284, 0
      %v323 = vsel %vm318, %v285, 0
      %v326 = vsel %vm318, %v286, 0
      %v329 = vsel %vm318, %v287, 0
      %v332 = vsel %vm318, %v288, 0
      %v335 = vsel %vm318, %v289, 0
      %v338 = vsel %vm318, %v290, 0
      %v341 = vsel %vm318, %v291, 0
      %v344 = vsel %vm318, %v292, 0
      %v347 = vsel %vm318, %v293, 0
      %v350 = vsel %vm318, %v294, 0
      %v353 = vsel %vm318, %v295, 0
      %v356 = vsel %vm318, %v296, 0
      %v359 = vsel %vm318, %v297, 0
      %v362 = vsel %vm318, %v298, 0
      %v365 = vsel %vm318, %v299, 0
      %367 = vmatprep.subr.bf16.mxu0 0
      %368 = vmatpush1.bf16.msra.mxu0 %v312
      %369 = vmatprep.subr.bf16.mxu0 0
      %370 = vmatpush1.bf16.msra.mxu0 %v313
      %371 = vmatprep.subr.bf16.mxu0 0
      %372 = vmatpush1.bf16.msra.mxu0 %v314
      %373 = vmatprep.subr.bf16.mxu0 0
      %374 = vmatpush1.bf16.msra.mxu0 0
      %375 = vmatprep.subr.bf16.mxu0 0
      %376 = vmatpush1.bf16.msra.mxu0 0
      %377 = vmatprep.subr.bf16.mxu0 0
      %378 = vmatpush1.bf16.msra.mxu0 0
      %379 = vmatprep.subr.bf16.mxu0 0
      %380 = vmatpush1.bf16.msra.mxu0 0
      %381 = vmatprep.subr.bf16.mxu0 0
      %382 = vmatpush1.bf16.msra.mxu0 0
      %383 = vmatprep.subr.bf16.mxu0 0
      %384 = vmatpush1.bf16.msra.mxu0 0
      %385 = vmatprep.subr.bf16.mxu0 0
      %386 = vmatpush1.bf16.msra.mxu0 0
      %387 = vmatprep.subr.bf16.mxu0 0
      %388 = vmatpush1.bf16.msra.mxu0 0
      %389 = vmatprep.subr.bf16.mxu0 0
      %390 = vmatpush1.bf16.msra.mxu0 0
      %391 = vmatprep.subr.bf16.mxu0 0
      %392 = vmatpush1.bf16.msra.mxu0 0
      %393 = vmatprep.subr.bf16.mxu0 0
      %394 = vmatpush1.bf16.msra.mxu0 0
      %395 = vmatprep.subr.bf16.mxu0 0
      %396 = vmatpush1.bf16.msra.mxu0 0
      %397 = vmatprep.subr.bf16.mxu0 0
      %398 = vmatpush1.bf16.msra.mxu0 0
      %399 = vmatprep.mubr.bf16.mxu0 0
      %400 = vmatmul.mubr.bf16.gmra.mrb[0].mxu0 %v320
      %v401 = vpop.f32.mrb[0].mxu0
      %v402 = vadd.f32 %v218, %v401
      %v403 = vpop.f32.mrb[0].mxu0
      %v404 = vpop.f32.mrb[0].mxu0
      %v405 = vadd.f32 %v218, %v404
      %v406 = vpop.f32.mrb[0].mxu0
      %407 = vmatprep.mubr.bf16.mxu0 0
      %408 = vmatmul.mubr.bf16.gmra.mrb[0].mxu0 %v323
      %v409 = vpop.f32.mrb[0].mxu0
      %v410 = vadd.f32 %v218, %v409
      %v411 = vpop.f32.mrb[0].mxu0
      %v412 = vpop.f32.mrb[0].mxu0
      %v413 = vadd.f32 %v218, %v412
      %v414 = vpop.f32.mrb[0].mxu0
      %415 = vmatprep.mubr.bf16.mxu0 0
      %416 = vmatmul.mubr.bf16.gmra.mrb[0].mxu0 %v326
      %v417 = vpop.f32.mrb[0].mxu0
      %v418 = vadd.f32 %v218, %v417
      %v419 = vpop.f32.mrb[0].mxu0
      %v420 = vpop.f32.mrb[0].mxu0
      %v421 = vadd.f32 %v218, %v420
      %v422 = vpop.f32.mrb[0].mxu0
      %423 = vmatprep.mubr.bf16.mxu0 0
      %424 = vmatmul.mubr.bf16.gmra.mrb[0].mxu0 %v329
      %v425 = vpop.f32.mrb[0].mxu0
      %v426 = vadd.f32 %v218, %v425
      %v427 = vpop.f32.mrb[0].mxu0
      %v428 = vpop.f32.mrb[0].mxu0
      %v429 = vadd.f32 %v218, %v428
      %v430 = vpop.f32.mrb[0].mxu0
      %431 = vmatprep.mubr.bf16.mxu0 0
      %432 = vmatmul.mubr.bf16.gmra.mrb[0].mxu0 %v332
      %v433 = vpop.f32.mrb[0].mxu0
      %v434 = vadd.f32 %v218, %v433
      %v435 = vpop.f32.mrb[0].mxu0
      %v436 = vpop.f32.mrb[0].mxu0
      %v437 = vadd.f32 %v218, %v436
      %v438 = vpop.f32.mrb[0].mxu0
      %439 = vmatprep.mubr.bf16.mxu0 0
      %440 = vmatmul.mubr.bf16.gmra.mrb[0].mxu0 %v335
      %v441 = vpop.f32.mrb[0].mxu0
      %v442 = vadd.f32 %v218, %v441
      %v443 = vpop.f32.mrb[0].mxu0
      %v444 = vpop.f32.mrb[0].mxu0
      %v445 = vadd.f32 %v218, %v444
      %v446 = vpop.f32.mrb[0].mxu0
      %447 = vmatprep.mubr.bf16.mxu0 0
      %448 = vmatmul.mubr.bf16.gmra.mrb[0].mxu0 %v338
      %v449 = vpop.f32.mrb[0].mxu0
      %v450 = vadd.f32 %v218, %v449
      %v451 = vpop.f32.mrb[0].mxu0
      %v452 = vpop.f32.mrb[0].mxu0
      %v453 = vadd.f32 %v218, %v452
      %v454 = vpop.f32.mrb[0].mxu0
      %455 = vmatprep.mubr.bf16.mxu0 0
      %456 = vmatmul.mubr.bf16.gmra.mrb[0].mxu0 %v341
      %v457 = vpop.f32.mrb[0].mxu0
      %v458 = vadd.f32 %v218, %v457
      %v459 = vpop.f32.mrb[0].mxu0
      %v460 = vpop.f32.mrb[0].mxu0
      %v461 = vadd.f32 %v218, %v460
      %v462 = vpop.f32.mrb[0].mxu0
      %463 = vmatprep.mubr.bf16.mxu0 0
      %464 = vmatmul.mubr.bf16.gmra.mrb[0].mxu0 %v344
      %v465 = vpop.f32.mrb[0].mxu0
      %v466 = vadd.f32 %v218, %v465
      %v467 = vpop.f32.mrb[0].mxu0
      %v468 = vpop.f32.mrb[0].mxu0
      %v469 = vadd.f32 %v218, %v468
      %v470 = vpop.f32.mrb[0].mxu0
      %471 = vmatprep.mubr.bf16.mxu0 0
      %472 = vmatmul.mubr.bf16.gmra.mrb[0].mxu0 %v347
      %v473 = vpop.f32.mrb[0].mxu0
      %v474 = vadd.f32 %v218, %v473
      %v475 = vpop.f32.mrb[0].mxu0
      %v476 = vpop.f32.mrb[0].mxu0
      %v477 = vadd.f32 %v218, %v476
      %v478 = vpop.f32.mrb[0].mxu0
      %479 = vmatprep.mubr.bf16.mxu0 0
      %480 = vmatmul.mubr.bf16.gmra.mrb[0].mxu0 %v350
      %v481 = vpop.f32.mrb[0].mxu0
      %v482 = vadd.f32 %v218, %v481
      %v483 = vpop.f32.mrb[0].mxu0
      %v484 = vpop.f32.mrb[0].mxu0
      %v485 = vadd.f32 %v218, %v484
      %v486 = vpop.f32.mrb[0].mxu0
      %487 = vmatprep.mubr.bf16.mxu0 0
      %488 = vmatmul.mubr.bf16.gmra.mrb[0].mxu0 %v353
      %v489 = vpop.f32.mrb[0].mxu0
      %v490 = vadd.f32 %v218, %v489
      %v491 = vpop.f32.mrb[0].mxu0
      %v492 = vpop.f32.mrb[0].mxu0
      %v493 = vadd.f32 %v218, %v492
      %v494 = vpop.f32.mrb[0].mxu0
      %495 = vmatprep.mubr.bf16.mxu0 0
      %496 = vmatmul.mubr.bf16.gmra.mrb[0].mxu0 %v356
      %v497 = vpop.f32.mrb[0].mxu0
      %v498 = vadd.f32 %v218, %v497
      %v499 = vpop.f32.mrb[0].mxu0
      %v500 = vpop.f32.mrb[0].mxu0
      %v501 = vadd.f32 %v218, %v500
      %v502 = vpop.f32.mrb[0].mxu0
      %503 = vmatprep.mubr.bf16.mxu0 0
      %504 = vmatmul.mubr.bf16.gmra.mrb[0].mxu0 %v359
      %v505 = vpop.f32.mrb[0].mxu0
      %v506 = vadd.f32 %v218, %v505
      %v507 = vpop.f32.mrb[0].mxu0
      %v508 = vpop.f32.mrb[0].mxu0
      %v509 = vadd.f32 %v218, %v508
      %v510 = vpop.f32.mrb[0].mxu0
      %511 = vmatprep.mubr.bf16.mxu0 0
      %512 = vmatmul.mubr.bf16.gmra.mrb[0].mxu0 %v362
      %v513 = vpop.f32.mrb[0].mxu0
      %v514 = vadd.f32 %v218, %v513
      %v515 = vpop.f32.mrb[0].mxu0
      %v516 = vpop.f32.mrb[0].mxu0
      %v517 = vadd.f32 %v218, %v516
      %v518 = vpop.f32.mrb[0].mxu0
      %519 = vmatprep.mubr.bf16.mxu0 0
      %520 = vmatmul.mubr.bf16.gmra.mrb[0].mxu0 %v365
      %v521 = vpop.f32.mrb[0].mxu0
      %v522 = vadd.f32 %v218, %v521
      %v523 = vpop.f32.mrb[0].mxu0
      %v524 = vpop.f32.mrb[0].mxu0
      %v525 = vadd.f32 %v218, %v524
      %v526 = vpop.f32.mrb[0].mxu0
      %527 = vdwg.mxu0
      %vm528 = vcmp.ge.f32.partialorder %v402, 0.0
      %vm529 = vcmp.ge.f32.partialorder %v405, 0.0
      %vm530 = vcmp.ge.f32.partialorder %v410, 0.0
      %vm531 = vcmp.ge.f32.partialorder %v413, 0.0
      %vm532 = vcmp.ge.f32.partialorder %v418, 0.0
      %vm533 = vcmp.ge.f32.partialorder %v421, 0.0
      %vm534 = vcmp.ge.f32.partialorder %v426, 0.0
      %vm535 = vcmp.ge.f32.partialorder %v429, 0.0
      %vm536 = vcmp.ge.f32.partialorder %v434, 0.0
      %vm537 = vcmp.ge.f32.partialorder %v437, 0.0
      %vm538 = vcmp.ge.f32.partialorder %v442, 0.0
      %vm539 = vcmp.ge.f32.partialorder %v445, 0.0
      %vm540 = vcmp.ge.f32.partialorder %v450, 0.0
      %vm541 = vcmp.ge.f32.partialorder %v453, 0.0
      %vm542 = vcmp.ge.f32.partialorder %v458, 0.0
      %vm543 = vcmp.ge.f32.partialorder %v461, 0.0
      %vm544 = vcmp.ge.f32.partialorder %v466, 0.0
      %vm545 = vcmp.ge.f32.partialorder %v469, 0.0
      %vm546 = vcmp.ge.f32.partialorder %v474, 0.0
      %vm547 = vcmp.ge.f32.partialorder %v477, 0.0
      %vm548 = vcmp.ge.f32.partialorder %v482, 0.0
      %vm549 = vcmp.ge.f32.partialorder %v485, 0.0
      %vm550 = vcmp.ge.f32.partialorder %v490, 0.0
      %vm551 = vcmp.ge.f32.partialorder %v493, 0.0
      %vm552 = vcmp.ge.f32.partialorder %v498, 0.0
      %vm553 = vcmp.ge.f32.partialorder %v501, 0.0
      %vm554 = vcmp.ge.f32.partialorder %v506, 0.0
      %vm555 = vcmp.ge.f32.partialorder %v509, 0.0
      %vm556 = vcmp.ge.f32.partialorder %v514, 0.0
      %vm557 = vcmp.ge.f32.partialorder %v517, 0.0
      %vm558 = vcmp.ge.f32.partialorder %v522, 0.0
      %vm559 = vcmp.ge.f32.partialorder %v525, 0.0
      %v560 = vmul.f32 %v402, 0.2
      %v561 = vmul.f32 %v405, 0.2
      %v562 = vmul.f32 %v410, 0.2
      %v563 = vmul.f32 %v413, 0.2
      %v564 = vmul.f32 %v418, 0.2
      %v565 = vmul.f32 %v421, 0.2
      %v566 = vmul.f32 %v426, 0.2
      %v567 = vmul.f32 %v429, 0.2
      %v568 = vmul.f32 %v434, 0.2
      %v569 = vmul.f32 %v437, 0.2
      %v570 = vmul.f32 %v442, 0.2
      %v571 = vmul.f32 %v445, 0.2
      %v572 = vmul.f32 %v450, 0.2
      %v573 = vmul.f32 %v453, 0.2
      %v574 = vmul.f32 %v458, 0.2
      %v575 = vmul.f32 %v461, 0.2
      %v576 = vmul.f32 %v466, 0.2
      %v577 = vmul.f32 %v469, 0.2
      %v578 = vmul.f32 %v474, 0.2
      %v579 = vmul.f32 %v477, 0.2
      %v580 = vmul.f32 %v482, 0.2
      %v581 = vmul.f32 %v485, 0.2
      %v582 = vmul.f32 %v490, 0.2
      %v583 = vmul.f32 %v493, 0.2
      %v584 = vmul.f32 %v498, 0.2
      %v585 = vmul.f32 %v501, 0.2
      %v586 = vmul.f32 %v506, 0.2
      %v587 = vmul.f32 %v509, 0.2
      %v588 = vmul.f32 %v514, 0.2
      %v589 = vmul.f32 %v517, 0.2
      %v590 = vmul.f32 %v522, 0.2
      %v591 = vmul.f32 %v525, 0.2
      %v592 = vsel %vm528, %v402, %v560
      %v593 = vsel %vm529, %v405, %v561
      %v594 = vsel %vm530, %v410, %v562
      %v595 = vsel %vm531, %v413, %v563
      %v596 = vsel %vm532, %v418, %v564
      %v597 = vsel %vm533, %v421, %v565
      %v598 = vsel %vm534, %v426, %v566
      %v599 = vsel %vm535, %v429, %v567
      %v600 = vsel %vm536, %v434, %v568
      %v601 = vsel %vm537, %v437, %v569
      %v602 = vsel %vm538, %v442, %v570
      %v603 = vsel %vm539, %v445, %v571
      %v604 = vsel %vm540, %v450, %v572
      %v605 = vsel %vm541, %v453, %v573
      %v606 = vsel %vm542, %v458, %v574
      %v607 = vsel %vm543, %v461, %v575
      %v608 = vsel %vm544, %v466, %v576
      %v609 = vsel %vm545, %v469, %v577
      %v610 = vsel %vm546, %v474, %v578
      %v611 = vsel %vm547, %v477, %v579
      %v612 = vsel %vm548, %v482, %v580
      %v613 = vsel %vm549, %v485, %v581
      %v614 = vsel %vm550, %v490, %v582
      %v615 = vsel %vm551, %v493, %v583
      %v616 = vsel %vm552, %v498, %v584
      %v617 = vsel %vm553, %v501, %v585
      %v618 = vsel %vm554, %v506, %v586
      %v619 = vsel %vm555, %v509, %v587
      %v620 = vsel %vm556, %v514, %v588
      %v621 = vsel %vm557, %v517, %v589
      %v622 = vsel %vm558, %v522, %v590
      %v623 = vsel %vm559, %v525, %v591
      %v624 = vpack.c.bf16 %v593, %v592
      %v625 = vpack.c.bf16 %v595, %v594
      %v626 = vpack.c.bf16 %v597, %v596
      %v627 = vpack.c.bf16 %v599, %v598
      %v628 = vpack.c.bf16 %v601, %v600
      %v629 = vpack.c.bf16 %v603, %v602
      %v630 = vpack.c.bf16 %v605, %v604
      %v631 = vpack.c.bf16 %v607, %v606
      %v632 = vpack.c.bf16 %v609, %v608
      %v633 = vpack.c.bf16 %v611, %v610
      %v634 = vpack.c.bf16 %v613, %v612
      %v635 = vpack.c.bf16 %v615, %v614
      %v636 = vpack.c.bf16 %v617, %v616
      %v637 = vpack.c.bf16 %v619, %v618
      %v638 = vpack.c.bf16 %v621, %v620
      %v639 = vpack.c.bf16 %v623, %v622
      %v656 = vunpack.c.l.b16 %v624
      %v657 = vunpack.c.h.b16 %v624
      %v658 = vunpack.c.l.b16 %v625
      %v659 = vunpack.c.h.b16 %v625
      %v660 = vunpack.c.l.b16 %v626
      %v661 = vunpack.c.h.b16 %v626
      %v662 = vunpack.c.l.b16 %v627
      %v663 = vunpack.c.h.b16 %v627
      %v664 = vunpack.c.l.b16 %v628
      %v665 = vunpack.c.h.b16 %v628
      %v666 = vunpack.c.l.b16 %v629
      %v667 = vunpack.c.h.b16 %v629
      %v668 = vunpack.c.l.b16 %v630
      %v669 = vunpack.c.h.b16 %v630
      %v670 = vunpack.c.l.b16 %v631
      %v671 = vunpack.c.h.b16 %v631
      %v672 = vunpack.c.l.b16 %v632
      %v673 = vunpack.c.h.b16 %v632
      %v674 = vunpack.c.l.b16 %v633
      %v675 = vunpack.c.h.b16 %v633
      %v676 = vunpack.c.l.b16 %v634
      %v677 = vunpack.c.h.b16 %v634
      %v678 = vunpack.c.l.b16 %v635
      %v679 = vunpack.c.h.b16 %v635
      %v680 = vunpack.c.l.b16 %v636
      %v681 = vunpack.c.h.b16 %v636
      %v682 = vunpack.c.l.b16 %v637
      %v683 = vunpack.c.h.b16 %v637
      %v684 = vunpack.c.l.b16 %v638
      %v685 = vunpack.c.h.b16 %v638
      %v686 = vunpack.c.l.b16 %v639
      %v687 = vunpack.c.h.b16 %v639
      %v688 = vpack.c.b16 %v656, %v656
      %v689 = vpack.c.b16 %v657, %v657
      %v690 = vpack.c.b16 %v658, %v658
      %v691 = vpack.c.b16 %v659, %v659
      %v692 = vpack.c.b16 %v660, %v660
      %v693 = vpack.c.b16 %v661, %v661
      %v694 = vpack.c.b16 %v662, %v662
      %v695 = vpack.c.b16 %v663, %v663
      %v696 = vpack.c.b16 %v664, %v664
      %v697 = vpack.c.b16 %v665, %v665
      %v698 = vpack.c.b16 %v666, %v666
      %v699 = vpack.c.b16 %v667, %v667
      %v700 = vpack.c.b16 %v668, %v668
      %v701 = vpack.c.b16 %v669, %v669
      %v702 = vpack.c.b16 %v670, %v670
      %v703 = vpack.c.b16 %v671, %v671
      %v704 = vpack.c.b16 %v672, %v672
      %v705 = vpack.c.b16 %v673, %v673
      %v706 = vpack.c.b16 %v674, %v674
      %v707 = vpack.c.b16 %v675, %v675
      %v708 = vpack.c.b16 %v676, %v676
      %v709 = vpack.c.b16 %v677, %v677
      %v710 = vpack.c.b16 %v678, %v678
      %v711 = vpack.c.b16 %v679, %v679
      %v712 = vpack.c.b16 %v680, %v680
      %v713 = vpack.c.b16 %v681, %v681
      %v714 = vpack.c.b16 %v682, %v682
      %v715 = vpack.c.b16 %v683, %v683
      %v716 = vpack.c.b16 %v684, %v684
      %v717 = vpack.c.b16 %v685, %v685
      %v718 = vpack.c.b16 %v686, %v686
      %v719 = vpack.c.b16 %v687, %v687
      %752 = vst [vmem:[%s172] sm:$0xf] %v688
      %753 = vst [vmem:[%s172 + $0x4] sm:$0xf] %v689
      %754 = vst [vmem:[%s172 + $0x8] sm:$0xf] %v690
      %755 = vst [vmem:[%s172 + $0xc] sm:$0xf] %v691
      %756 = vst [vmem:[%s172 + $0x10] sm:$0xf] %v692
      %757 = vst [vmem:[%s172 + $0x14] sm:$0xf] %v693
      %758 = vst [vmem:[%s172 + $0x18] sm:$0xf] %v694
      %759 = vst [vmem:[%s172 + $0x1c] sm:$0xf] %v695
      %760 = vst [vmem:[%s172 + $0x20] sm:$0xf] %v696
      %761 = vst [vmem:[%s172 + $0x24] sm:$0xf] %v697
      %762 = vst [vmem:[%s172 + $0x28] sm:$0xf] %v698
      %763 = vst [vmem:[%s172 + $0x2c] sm:$0xf] %v699
      %764 = vst [vmem:[%s172 + $0x30] sm:$0xf] %v700
      %765 = vst [vmem:[%s172 + $0x34] sm:$0xf] %v701
      %766 = vst [vmem:[%s172 + $0x38] sm:$0xf] %v702
      %767 = vst [vmem:[%s172 + $0x3c] sm:$0xf] %v703
      %768 = vst [vmem:[%s172 + $0x40] sm:$0xf] %v704
      %769 = vst [vmem:[%s172 + $0x44] sm:$0xf] %v705
      %770 = vst [vmem:[%s172 + $0x48] sm:$0xf] %v706
      %771 = vst [vmem:[%s172 + $0x4c] sm:$0xf] %v707
      %772 = vst [vmem:[%s172 + $0x50] sm:$0xf] %v708
      %773 = vst [vmem:[%s172 + $0x54] sm:$0xf] %v709
      %774 = vst [vmem:[%s172 + $0x58] sm:$0xf] %v710
      %775 = vst [vmem:[%s172 + $0x5c] sm:$0xf] %v711
      %776 = vst [vmem:[%s172 + $0x60] sm:$0xf] %v712
      %777 = vst [vmem:[%s172 + $0x64] sm:$0xf] %v713
      %778 = vst [vmem:[%s172 + $0x68] sm:$0xf] %v714
      %779 = vst [vmem:[%s172 + $0x6c] sm:$0xf] %v715
      %780 = vst [vmem:[%s172 + $0x70] sm:$0xf] %v716
      %781 = vst [vmem:[%s172 + $0x74] sm:$0xf] %v717
      %782 = vst [vmem:[%s172 + $0x78] sm:$0xf] %v718
      %783 = vst [vmem:[%s172 + $0x7c] sm:$0xf] %v719
      %s784 = smul.u32 32, %s14
      %p785 = scmp.lt.s32.totalorder %s784, 63
      %s786 = scalar_select %p785, %s784, 63
      %s787 = smul.addr %s786, 4
      %s788 = scalar_lea.vmem %s3, %s787
      // Predicated region
      $region33: #{_lambda_.8} parent=31 // pred_check
        %p789 = pneg %p100
      $region34: #{_lambda_.8} parent=31 // pred_check_branch
        %791 = sbr.rel (%p789) target = $region36
      $region35: #{_lambda_.8} parent=31 // pred_region
        %s792 = smul.u32 32, %s14
      $region36: #{_lambda_.8} parent=31 // pred_fallthru
        _
    $region32: #{_lambda_.8} parent=5 // pred_fallthru
      _
    %p793 = scmp.le.s32.totalorder 2, %s9
    // Predicated region
    $region37: #{_lambda_.8} parent=5 // pred_check
      %p794 = pneg %p793
    $region38: #{_lambda_.8} parent=5 // pred_check_branch
      %796 = sbr.rel (%p794) target = $region40
    $region39: #{_lambda_.8} parent=5 // pred_region
      %s797 = ssub.s32 %s9, 2
      // Predicated region
      $region41: #{_lambda_.8} parent=39 // pred_check
        %p798 = pneg %p106
      $region42: #{_lambda_.8} parent=39 // pred_check_branch
        %800 = sbr.rel (%p798) target = $region44
      $region43: #{_lambda_.8} parent=39 // pred_region
        %s801 = smul.u32 32, %s15
        %p802 = scmp.lt.s32.totalorder %s801, 63
        %s803 = scalar_select %p802, %s801, 63
        %s804 = smul.addr %s803, 4
        %s805 = scalar_lea.vmem %s3, %s804
      $region44: #{_lambda_.8} parent=39 // pred_fallthru
        _
    $region40: #{_lambda_.8} parent=5 // pred_fallthru
      _
  $region6: #{_lambda_.8} parent=0 // loop_footer
    %s13 = sadd.s32 1, %s9
  $region7: #{_lambda_.8} parent=0 // loop_footer_branch
    %8 = sbr.rel target = $region3
  $region8: #{_lambda_.8} parent=0 // loop_exit
    _

// kernel: _lambda_.9
$region0: #{_lambda_.9}
  #allocation0 [shape = 'u32[]', space=smem, size = 0x4, offset = 0x4, fixed_abs, tag = 'smem constant byte address 0x4 - core index']
  #allocation1 [shape = 'u32[144,128]{1,0:T(1,128)}', space=vmem, size = 0x12000, scoped, tag = 'internal scratch']
  %s0 = inlined_call_operand.vmem [shape: bf16[128,128], index: 0, kind: input, shape index: {}]
  %s1 = inlined_call_operand.vmem [shape: bf16[128,128], index: 1, kind: input, shape index: {}]
  %s2 = inlined_call_operand.vmem [shape: f32[128,128], index: 2, kind: output, shape index: {}]
  %s3 = sld [smem:[#allocation0]]
  $region18: #{_lambda_.9} parent=0
    _
  %s5 = ssub.s32 1, %s3
  %s6 = scalar_select 0, %s5, %s3
  // Predicated region
  $region2: #{_lambda_.9} parent=0 // pred_check
    _
  $region3: #{_lambda_.9} parent=0 // pred_check_branch
    %8 = sbr.rel (0) target = $region5
  $region4: #{_lambda_.9} parent=0 // pred_region
    _
  $region5: #{_lambda_.9} parent=0 // pred_fallthru
    _
  // Predicated region
  $region6: #{_lambda_.9} parent=0 // pred_check
    _
  $region7: #{_lambda_.9} parent=0 // pred_check_branch
    %10 = sbr.rel (0) target = $region9
  $region8: #{_lambda_.9} parent=0 // pred_region
    _
  $region9: #{_lambda_.9} parent=0 // pred_fallthru
    _
  %v12 = vld [vmem:[%s0] sm:$0xf]
  %v13 = vld [vmem:[%s0 + $0x4] sm:$0xf]
  %v14 = vld [vmem:[%s0 + $0x8] sm:$0xf]
  %v15 = vld [vmem:[%s0 + $0xc] sm:$0xf]
  %v16 = vld [vmem:[%s0 + $0x10] sm:$0xf]
  %v17 = vld [vmem:[%s0 + $0x14] sm:$0xf]
  %v18 = vld [vmem:[%s0 + $0x18] sm:$0xf]
  %v19 = vld [vmem:[%s0 + $0x1c] sm:$0xf]
  %v20 = vld [vmem:[%s0 + $0x20] sm:$0xf]
  %v21 = vld [vmem:[%s0 + $0x24] sm:$0xf]
  %v22 = vld [vmem:[%s0 + $0x28] sm:$0xf]
  %v23 = vld [vmem:[%s0 + $0x2c] sm:$0xf]
  %v24 = vld [vmem:[%s0 + $0x30] sm:$0xf]
  %v25 = vld [vmem:[%s0 + $0x34] sm:$0xf]
  %v26 = vld [vmem:[%s0 + $0x38] sm:$0xf]
  %v27 = vld [vmem:[%s0 + $0x3c] sm:$0xf]
  %v28 = vld [vmem:[%s1] sm:$0xf]
  %v29 = vld [vmem:[%s1 + $0x4] sm:$0xf]
  %v30 = vld [vmem:[%s1 + $0x8] sm:$0xf]
  %v31 = vld [vmem:[%s1 + $0xc] sm:$0xf]
  %v32 = vld [vmem:[%s1 + $0x10] sm:$0xf]
  %v33 = vld [vmem:[%s1 + $0x14] sm:$0xf]
  %v34 = vld [vmem:[%s1 + $0x18] sm:$0xf]
  %v35 = vld [vmem:[%s1 + $0x1c] sm:$0xf]
  %v36 = vld [vmem:[%s1 + $0x20] sm:$0xf]
  %v37 = vld [vmem:[%s1 + $0x24] sm:$0xf]
  %v38 = vld [vmem:[%s1 + $0x28] sm:$0xf]
  %v39 = vld [vmem:[%s1 + $0x2c] sm:$0xf]
  %v40 = vld [vmem:[%s1 + $0x30] sm:$0xf]
  %v41 = vld [vmem:[%s1 + $0x34] sm:$0xf]
  %v42 = vld [vmem:[%s1 + $0x38] sm:$0xf]
  %v43 = vld [vmem:[%s1 + $0x3c] sm:$0xf]
  %v60 = vunpack.c.l.b16 %v12
  %v61 = vunpack.c.l.b16 %v13
  %v62 = vunpack.c.l.b16 %v14
  %v63 = vunpack.c.l.b16 %v15
  %v64 = vunpack.c.l.b16 %v16
  %v65 = vunpack.c.l.b16 %v17
  %v66 = vunpack.c.l.b16 %v18
  %v67 = vunpack.c.l.b16 %v19
  %v68 = vunpack.c.l.b16 %v20
  %v69 = vunpack.c.l.b16 %v21
  %v70 = vunpack.c.l.b16 %v22
  %v71 = vunpack.c.l.b16 %v23
  %v72 = vunpack.c.l.b16 %v24
  %v73 = vunpack.c.l.b16 %v25
  %v74 = vunpack.c.l.b16 %v26
  %v75 = vunpack.c.l.b16 %v27
  %v76 = vpack.c.b16 %v61, %v60
  %v77 = vpack.c.b16 %v63, %v62
  %v78 = vpack.c.b16 %v65, %v64
  %v79 = vpack.c.b16 %v67, %v66
  %v80 = vpack.c.b16 %v69, %v68
  %v81 = vpack.c.b16 %v71, %v70
  %v82 = vpack.c.b16 %v73, %v72
  %v83 = vpack.c.b16 %v75, %v74
  %v108 = vunpack.c.l.b16 %v28
  %v109 = vunpack.c.l.b16 %v29
  %v110 = vunpack.c.l.b16 %v30
  %v111 = vunpack.c.l.b16 %v31
  %v112 = vunpack.c.l.b16 %v32
  %v113 = vunpack.c.l.b16 %v33
  %v114 = vunpack.c.l.b16 %v34
  %v115 = vunpack.c.l.b16 %v35
  %v116 = vunpack.c.l.b16 %v36
  %v117 = vunpack.c.l.b16 %v37
  %v118 = vunpack.c.l.b16 %v38
  %v119 = vunpack.c.l.b16 %v39
  %v120 = vunpack.c.l.b16 %v40
  %v121 = vunpack.c.l.b16 %v41
  %v122 = vunpack.c.l.b16 %v42
  %v123 = vunpack.c.l.b16 %v43
  %v124 = vpack.c.b16 %v109, %v108
  %v125 = vpack.c.b16 %v111, %v110
  %v126 = vpack.c.b16 %v113, %v112
  %v127 = vpack.c.b16 %v115, %v114
  %v128 = vpack.c.b16 %v117, %v116
  %v129 = vpack.c.b16 %v119, %v118
  %v130 = vpack.c.b16 %v121, %v120
  %v131 = vpack.c.b16 %v123, %v122
  %140 = vmatprep.subr.bf16.mxu0 0
  %141 = vmatpush1.bf16.msra.mxu0 %v124
  %142 = vmatprep.subr.bf16.mxu0 0
  %143 = vmatpush1.bf16.msra.mxu0 %v125
  %144 = vmatprep.subr.bf16.mxu0 0
  %145 = vmatpush1.bf16.msra.mxu0 %v126
  %146 = vmatprep.subr.bf16.mxu0 0
  %147 = vmatpush1.bf16.msra.mxu0 %v127
  %148 = vmatprep.subr.bf16.mxu0 0
  %149 = vmatpush1.bf16.msra.mxu0 %v128
  %150 = vmatprep.subr.bf16.mxu0 0
  %151 = vmatpush1.bf16.msra.mxu0 %v129
  %152 = vmatprep.subr.bf16.mxu0 0
  %153 = vmatpush1.bf16.msra.mxu0 %v130
  %154 = vmatprep.subr.bf16.mxu0 0
  %155 = vmatpush1.bf16.msra.mxu0 %v131
  %156 = vmatprep.subr.bf16.mxu0 0
  %157 = vmatpush1.bf16.msra.mxu0 0
  %158 = vmatprep.subr.bf16.mxu0 0
  %159 = vmatpush1.bf16.msra.mxu0 0
  %160 = vmatprep.subr.bf16.mxu0 0
  %161 = vmatpush1.bf16.msra.mxu0 0
  %162 = vmatprep.subr.bf16.mxu0 0
  %163 = vmatpush1.bf16.msra.mxu0 0
  %164 = vmatprep.subr.bf16.mxu0 0
  %165 = vmatpush1.bf16.msra.mxu0 0
  %166 = vmatprep.subr.bf16.mxu0 0
  %167 = vmatpush1.bf16.msra.mxu0 0
  %168 = vmatprep.subr.bf16.mxu0 0
  %169 = vmatpush1.bf16.msra.mxu0 0
  %170 = vmatprep.subr.bf16.mxu0 0
  %171 = vmatpush1.bf16.msra.mxu0 0
  %172 = vmatprep.mubr.bf16.mxu0 0
  %173 = vmatmul.mubr.bf16.gmra.mrb[0].mxu0 %v76
  %v174 = vpop.f32.mrb[0].mxu0
  %v175 = vadd.f32 0.0, %v174
  %v176 = vpop.f32.mrb[0].mxu0
  %v177 = vpop.f32.mrb[0].mxu0
  %v178 = vadd.f32 0.0, %v177
  %v179 = vpop.f32.mrb[0].mxu0
  %180 = vmatprep.mubr.bf16.mxu0 0
  %181 = vmatmul.mubr.bf16.gmra.mrb[0].mxu0 %v77
  %v182 = vpop.f32.mrb[0].mxu0
  %v183 = vadd.f32 0.0, %v182
  %v184 = vpop.f32.mrb[0].mxu0
  %v185 = vpop.f32.mrb[0].mxu0
  %v186 = vadd.f32 0.0, %v185
  %v187 = vpop.f32.mrb[0].mxu0
  %188 = vmatprep.mubr.bf16.mxu0 0
  %189 = vmatmul.mubr.bf16.gmra.mrb[0].mxu0 %v78
  %v190 = vpop.f32.mrb[0].mxu0
  %v191 = vadd.f32 0.0, %v190
  %v192 = vpop.f32.mrb[0].mxu0
  %v193 = vpop.f32.mrb[0].mxu0
  %v194 = vadd.f32 0.0, %v193
  %v195 = vpop.f32.mrb[0].mxu0
  %196 = vmatprep.mubr.bf16.mxu0 0
  %197 = vmatmul.mubr.bf16.gmra.mrb[0].mxu0 %v79
  %v198 = vpop.f32.mrb[0].mxu0
  %v199 = vadd.f32 0.0, %v198
  %v200 = vpop.f32.mrb[0].mxu0
  %v201 = vpop.f32.mrb[0].mxu0
  %v202 = vadd.f32 0.0, %v201
  %v203 = vpop.f32.mrb[0].mxu0
  %204 = vmatprep.mubr.bf16.mxu0 0
  %205 = vmatmul.mubr.bf16.gmra.mrb[0].mxu0 %v80
  %v206 = vpop.f32.mrb[0].mxu0
  %v207 = vadd.f32 0.0, %v206
  %v208 = vpop.f32.mrb[0].mxu0
  %v209 = vpop.f32.mrb[0].mxu0
  %v210 = vadd.f32 0.0, %v209
  %v211 = vpop.f32.mrb[0].mxu0
  %212 = vmatprep.mubr.bf16.mxu0 0
  %213 = vmatmul.mubr.bf16.gmra.mrb[0].mxu0 %v81
  %v214 = vpop.f32.mrb[0].mxu0
  %v215 = vadd.f32 0.0, %v214
  %v216 = vpop.f32.mrb[0].mxu0
  %v217 = vpop.f32.mrb[0].mxu0
  %v218 = vadd.f32 0.0, %v217
  %v219 = vpop.f32.mrb[0].mxu0
  %220 = vmatprep.mubr.bf16.mxu0 0
  %221 = vmatmul.mubr.bf16.gmra.mrb[0].mxu0 %v82
  %v222 = vpop.f32.mrb[0].mxu0
  %v223 = vadd.f32 0.0, %v222
  %v224 = vpop.f32.mrb[0].mxu0
  %v225 = vpop.f32.mrb[0].mxu0
  %v226 = vadd.f32 0.0, %v225
  %v227 = vpop.f32.mrb[0].mxu0
  %228 = vmatprep.mubr.bf16.mxu0 0
  %229 = vmatmul.mubr.bf16.gmra.mrb[0].mxu0 %v83
  %v230 = vpop.f32.mrb[0].mxu0
  %v231 = vadd.f32 0.0, %v230
  %v232 = vpop.f32.mrb[0].mxu0
  %v233 = vpop.f32.mrb[0].mxu0
  %v234 = vadd.f32 0.0, %v233
  %v235 = vpop.f32.mrb[0].mxu0
  %236 = vdwg.mxu0
  %237 = vst [vmem:[%s2] sm:$0xff] %v175
  %238 = vst [vmem:[%s2 + $0x8] sm:$0xff] %v178
  %239 = vst [vmem:[%s2 + $0x10] sm:$0xff] %v183
  %240 = vst [vmem:[%s2 + $0x18] sm:$0xff] %v186
  %241 = vst [vmem:[%s2 + $0x20] sm:$0xff] %v191
  %242 = vst [vmem:[%s2 + $0x28] sm:$0xff] %v194
  %243 = vst [vmem:[%s2 + $0x30] sm:$0xff] %v199
  %244 = vst [vmem:[%s2 + $0x38] sm:$0xff] %v202
  %245 = vst [vmem:[%s2 + $0x40] sm:$0xff] %v207
  %246 = vst [vmem:[%s2 + $0x48] sm:$0xff] %v210
  %247 = vst [vmem:[%s2 + $0x50] sm:$0xff] %v215
  %248 = vst [vmem:[%s2 + $0x58] sm:$0xff] %v218
  %249 = vst [vmem:[%s2 + $0x60] sm:$0xff] %v223
  %250 = vst [vmem:[%s2 + $0x68] sm:$0xff] %v226
  %251 = vst [vmem:[%s2 + $0x70] sm:$0xff] %v231
  %252 = vst [vmem:[%s2 + $0x78] sm:$0xff] %v234
  // Predicated region
  $region10: #{_lambda_.9} parent=0 // pred_check
    _
  $region11: #{_lambda_.9} parent=0 // pred_check_branch
    %254 = sbr.rel (0) target = $region13
  $region12: #{_lambda_.9} parent=0 // pred_region
    _
  $region13: #{_lambda_.9} parent=0 // pred_fallthru
    _
  // Predicated region
  $region14: #{_lambda_.9} parent=0 // pred_check
    _
  $region15: #{_lambda_.9} parent=0 // pred_check_branch
    %256 = sbr.rel (0) target = $region17
  $region16: #{_lambda_.9} parent=0 // pred_region
    _
  $region17: #{_lambda_.9} parent=0 // pred_fallthru
    _

// kernel: _lambda_.10
$region0: #{_lambda_.10}
  #allocation0 [shape = 'u32[]', space=smem, size = 0x4, offset = 0x4, fixed_abs, tag = 'smem constant byte address 0x4 - core index']
  #allocation1 [shape = 'u32[144,128]{1,0:T(1,128)}', space=vmem, size = 0x12000, scoped, tag = 'internal scratch']
  %s0 = inlined_call_operand.vmem [shape: f32[2,64,128], index: 0, kind: input, shape index: {}]
  %s1 = inlined_call_operand.vmem [shape: bf16[2,64,128], index: 1, kind: output, shape index: {}]
  %s2 = sld [smem:[#allocation0]]
  $region37: #{_lambda_.10} parent=0
    _
  %s4 = ssub.s32 1, %s2
  %s5 = scalar_select 0, %s4, %s2
  loop: start=0, step=1, limit=4
  $region2: #{_lambda_.10} parent=0 // loop_pre_header
    _
  $region3: #{_lambda_.10} parent=0 // loop_header
    %s7 = sphi 0, %s11
    %p8 = scmp.ge.s32.totalorder %s7, 4
    %s17 = sphi 0, %s19
    %s20 = sphi 0, %s17
    %s21 = sphi 0, %s20
    %s37 = sphi 0, %s21
    %s43 = sphi 0, %s45
    %s46 = sphi 0, %s43
    %s47 = sphi 0, %s46
    %s63 = sphi 0, %s47
  $region4: #{_lambda_.10} parent=0 // loop_header_branch
    %10 = sbr.rel (%p8) target = $region8
  $region5: #{_lambda_.10} parent=0 // loop_body
    %s12 = ssub.s32 %s7, 1
    %s13 = ssub.s32 %s7, 2
    %s14 = sadd.s32 %s7, 1
    %s15 = ssub.s32 %s7, %s14
    %p16 = scmp.eq.s32.totalorder %s15, 0
    %s18 = sadd.s32 %s17, 1
    %s19 = scalar_select %p16, %s17, %s18
    %p22 = pneg %p16
    %p23 = scmp.eq.s32.totalorder %s7, 1
    %p24 = por %p22, %p23
    %p25 = scmp.ne.s32.totalorder %s17, %s20
    %p26 = scmp.eq.s32.totalorder %s7, 0
    %p27 = por %p25, %p26
    %p28 = scmp.ne.s32.totalorder %s17, %s20
    %p29 = scmp.eq.s32.totalorder %s12, 1
    %p30 = por %p28, %p29
    %p31 = scmp.ne.s32.totalorder %s20, %s21
    %p32 = scmp.eq.s32.totalorder %s12, 0
    %p33 = por %p31, %p32
    %p34 = scmp.ne.s32.totalorder %s20, %s21
    %p35 = scmp.eq.s32.totalorder %s13, 1
    %p36 = por %p34, %p35
    %p38 = scmp.ne.s32.totalorder %s21, %s37
    %p39 = scmp.eq.s32.totalorder %s13, 0
    %p40 = por %p38, %p39
    %s41 = ssub.s32 %s7, %s14
    %p42 = scmp.eq.s32.totalorder %s41, 0
    %s44 = sadd.s32 %s43, 1
    %s45 = scalar_select %p42, %s43, %s44
    %p48 = pneg %p42
    %p49 = scmp.eq.s32.totalorder %s7, 1
    %p50 = por %p48, %p49
    %p51 = scmp.ne.s32.totalorder %s43, %s46
    %p52 = scmp.eq.s32.totalorder %s7, 0
    %p53 = por %p51, %p52
    %p54 = scmp.ne.s32.totalorder %s43, %s46
    %p55 = scmp.eq.s32.totalorder %s12, 1
    %p56 = por %p54, %p55
    %p57 = scmp.ne.s32.totalorder %s46, %s47
    %p58 = scmp.eq.s32.totalorder %s12, 0
    %p59 = por %p57, %p58
    %p60 = scmp.ne.s32.totalorder %s46, %s47
    %p61 = scmp.eq.s32.totalorder %s13, 1
    %p62 = por %p60, %p61
    %p64 = scmp.ne.s32.totalorder %s47, %s63
    %p65 = scmp.eq.s32.totalorder %s13, 0
    %p66 = por %p64, %p65
    %p67 = scmp.le.s32.totalorder 1, %s7
    %p68 = scmp.lt.s32.totalorder %s7, 3
    %p69 = pnand %p67, %p68
    %p70 = pneg %p69
    // Predicated region
    $region9: #{_lambda_.10} parent=5 // pred_check
      _
    $region10: #{_lambda_.10} parent=5 // pred_check_branch
      %72 = sbr.rel (%p69) target = $region12
    $region11: #{_lambda_.10} parent=5 // pred_region
      %s73 = ssub.s32 %s7, 1
    $region12: #{_lambda_.10} parent=5 // pred_fallthru
      _
    %p74 = scmp.lt.s32.totalorder %s7, 2
    // Predicated region
    $region13: #{_lambda_.10} parent=5 // pred_check
      %p75 = pneg %p74
    $region14: #{_lambda_.10} parent=5 // pred_check_branch
      %77 = sbr.rel (%p75) target = $region16
    $region15: #{_lambda_.10} parent=5 // pred_region
      // Predicated region
      $region17: #{_lambda_.10} parent=15 // pred_check
        %p78 = pneg %p27
      $region18: #{_lambda_.10} parent=15 // pred_check_branch
        %80 = sbr.rel (%p78) target = $region20
      $region19: #{_lambda_.10} parent=15 // pred_region
        %p81 = scmp.lt.s32.totalorder %s7, 1
        %s82 = scalar_select %p81, %s7, 1
        %s83 = smul.addr %s82, 8
        %s84 = smul.addr %s83, 8
        %s85 = scalar_lea.vmem %s0, %s84
      $region20: #{_lambda_.10} parent=15 // pred_fallthru
        _
    $region16: #{_lambda_.10} parent=5 // pred_fallthru
      _
    %p86 = scmp.le.s32.totalorder 1, %s7
    %p87 = scmp.lt.s32.totalorder %s7, 3
    %p88 = pnand %p86, %p87
    %p89 = pneg %p88
    // Predicated region
    $region21: #{_lambda_.10} parent=5 // pred_check
      _
    $region22: #{_lambda_.10} parent=5 // pred_check_branch
      %91 = sbr.rel (%p88) target = $region24
    $region23: #{_lambda_.10} parent=5 // pred_region
      %s92 = ssub.s32 %s7, 1
      %p93 = scmp.lt.s32.totalorder %s12, 1
      %s94 = scalar_select %p93, %s12, 1
      %s95 = smul.addr %s94, 8
      %s96 = smul.addr %s95, 8
      %s97 = scalar_lea.vmem %s0, %s96
      %p98 = pneg %p33
      %p99 = pneg %p30
      %p100 = pneg %p59
      %p101 = pneg %p56
      %p102 = scmp.lt.s32.totalorder %s12, 1
      %s103 = scalar_select %p102, %s12, 1
      %s104 = smul.addr %s103, 8
      %s105 = smul.addr %s104, 4
      %s106 = scalar_lea.vmem %s1, %s105
      %p107 = scmp.lt.s32.totalorder %s12, 1
      %s108 = scalar_select %p107, %s12, 1
      %s109 = smul.addr %s108, 8
      %s110 = smul.addr %s109, 8
      %s111 = scalar_lea.vmem %s0, %s110
      %p112 = scmp.lt.s32.totalorder %s12, 1
      %s113 = scalar_select %p112, %s12, 1
      %s114 = smul.addr %s113, 8
      %s115 = smul.addr %s114, 4
      %s116 = scalar_lea.vmem %s1, %s115
      %v117 = vld [vmem:[%s111] sm:$0xff]
      %v118 = vld [vmem:[%s111 + $0x8] sm:$0xff]
      %v119 = vld [vmem:[%s111 + $0x10] sm:$0xff]
      %v120 = vld [vmem:[%s111 + $0x18] sm:$0xff]
      %v121 = vld [vmem:[%s111 + $0x20] sm:$0xff]
      %v122 = vld [vmem:[%s111 + $0x28] sm:$0xff]
      %v123 = vld [vmem:[%s111 + $0x30] sm:$0xff]
      %v124 = vld [vmem:[%s111 + $0x38] sm:$0xff]
      %v125 = vadd.f32 %v117, %v118
      %v126 = vadd.f32 %v125, %v119
      %v127 = vadd.f32 %v126, %v120
      %v128 = vadd.f32 %v127, %v121
      %v129 = vadd.f32 %v128, %v122
      %v130 = vadd.f32 %v129, %v123
      %v131 = vadd.f32 %v130, %v124
      %v132 = vrot.slane %v131, 4
      %v133 = vadd.f32 %v131, %v132
      %v134 = vrot.slane %v133, 2
      %v135 = vadd.f32 %v133, %v134
      %v136 = vrot.slane %v135, 1
      %v137 = vadd.f32 %v135, %v136
      %v138 = vmul.f32 %v117, %v117
      %v139 = vmul.f32 %v118, %v118
      %v140 = vmul.f32 %v119, %v119
      %v141 = vmul.f32 %v120, %v120
      %v142 = vmul.f32 %v121, %v121
      %v143 = vmul.f32 %v122, %v122
      %v144 = vmul.f32 %v123, %v123
      %v145 = vmul.f32 %v124, %v124
      %v146 = vadd.f32 %v138, %v139
      %v147 = vadd.f32 %v146, %v140
      %v148 = vadd.f32 %v147, %v141
      %v149 = vadd.f32 %v148, %v142
      %v150 = vadd.f32 %v149, %v143
      %v151 = vadd.f32 %v150, %v144
      %v152 = vadd.f32 %v151, %v145
      %v153 = vrot.slane %v152, 4
      %v154 = vadd.f32 %v152, %v153
      %v155 = vrot.slane %v154, 2
      %v156 = vadd.f32 %v154, %v155
      %v157 = vrot.slane %v156, 1
      %v158 = vadd.f32 %v156, %v157
      %v159 = vmul.f32 %v137, 0.015625
      %v160 = vmul.f32 %v158, 0.015625
      %v161 = vmul.f32 %v159, %v159
      %v162 = vsub.f32 %v160, %v161
      %v163 = vmax.f32 %v162, 0.0
      %v164 = vsub.f32 %v117, %v159
      %v165 = vsub.f32 %v118, %v159
      %v166 = vsub.f32 %v119, %v159
      %v167 = vsub.f32 %v120, %v159
      %v168 = vsub.f32 %v121, %v159
      %v169 = vsub.f32 %v122, %v159
      %v170 = vsub.f32 %v123, %v159
      %v171 = vsub.f32 %v124, %v159
      %v172 = vadd.f32 %v163, 1e-05
      %v173 = vrsqrt.pop %v172
      %v174 = vmul.f32 %v164, %v173
      %v175 = vmul.f32 %v165, %v173
      %v176 = vmul.f32 %v166, %v173
      %v177 = vmul.f32 %v167, %v173
      %v178 = vmul.f32 %v168, %v173
      %v179 = vmul.f32 %v169, %v173
      %v180 = vmul.f32 %v170, %v173
      %v181 = vmul.f32 %v171, %v173
      %vm182 = vcmp.ge.f32.partialorder %v174, 0.0
      %vm183 = vcmp.ge.f32.partialorder %v175, 0.0
      %vm184 = vcmp.ge.f32.partialorder %v176, 0.0
      %vm185 = vcmp.ge.f32.partialorder %v177, 0.0
      %vm186 = vcmp.ge.f32.partialorder %v178, 0.0
      %vm187 = vcmp.ge.f32.partialorder %v179, 0.0
      %vm188 = vcmp.ge.f32.partialorder %v180, 0.0
      %vm189 = vcmp.ge.f32.partialorder %v181, 0.0
      %v190 = vmul.f32 %v174, 0.2
      %v191 = vmul.f32 %v175, 0.2
      %v192 = vmul.f32 %v176, 0.2
      %v193 = vmul.f32 %v177, 0.2
      %v194 = vmul.f32 %v178, 0.2
      %v195 = vmul.f32 %v179, 0.2
      %v196 = vmul.f32 %v180, 0.2
      %v197 = vmul.f32 %v181, 0.2
      %v198 = vsel %vm182, %v174, %v190
      %v199 = vsel %vm183, %v175, %v191
      %v200 = vsel %vm184, %v176, %v192
      %v201 = vsel %vm185, %v177, %v193
      %v202 = vsel %vm186, %v178, %v194
      %v203 = vsel %vm187, %v179, %v195
      %v204 = vsel %vm188, %v180, %v196
      %v205 = vsel %vm189, %v181, %v197
      %v206 = vpack.c.bf16 %v199, %v198
      %v207 = vpack.c.bf16 %v201, %v200
      %v208 = vpack.c.bf16 %v203, %v202
      %v209 = vpack.c.bf16 %v205, %v204
      %v214 = vunpack.c.l.b16 %v206
      %v215 = vunpack.c.h.b16 %v206
      %v216 = vunpack.c.l.b16 %v207
      %v217 = vunpack.c.h.b16 %v207
      %v218 = vunpack.c.l.b16 %v208
      %v219 = vunpack.c.h.b16 %v208
      %v220 = vunpack.c.l.b16 %v209
      %v221 = vunpack.c.h.b16 %v209
      %v222 = vpack.c.b16 %v214, %v214
      %v223 = vpack.c.b16 %v215, %v215
      %v224 = vpack.c.b16 %v216, %v216
      %v225 = vpack.c.b16 %v217, %v217
      %v226 = vpack.c.b16 %v218, %v218
      %v227 = vpack.c.b16 %v219, %v219
      %v228 = vpack.c.b16 %v220, %v220
      %v229 = vpack.c.b16 %v221, %v221
      %238 = vst [vmem:[%s116] sm:$0xf] %v222
      %239 = vst [vmem:[%s116 + $0x4] sm:$0xf] %v223
      %240 = vst [vmem:[%s116 + $0x8] sm:$0xf] %v224
      %241 = vst [vmem:[%s116 + $0xc] sm:$0xf] %v225
      %242 = vst [vmem:[%s116 + $0x10] sm:$0xf] %v226
      %243 = vst [vmem:[%s116 + $0x14] sm:$0xf] %v227
      %244 = vst [vmem:[%s116 + $0x18] sm:$0xf] %v228
      %245 = vst [vmem:[%s116 + $0x1c] sm:$0xf] %v229
      %p246 = scmp.lt.s32.totalorder %s12, 1
      %s247 = scalar_select %p246, %s12, 1
      %s248 = smul.addr %s247, 8
      %s249 = smul.addr %s248, 4
      %s250 = scalar_lea.vmem %s1, %s249
      // Predicated region
      $region25: #{_lambda_.10} parent=23 // pred_check
        %p251 = pneg %p56
      $region26: #{_lambda_.10} parent=23 // pred_check_branch
        %253 = sbr.rel (%p251) target = $region28
      $region27: #{_lambda_.10} parent=23 // pred_region
        _
      $region28: #{_lambda_.10} parent=23 // pred_fallthru
        _
    $region24: #{_lambda_.10} parent=5 // pred_fallthru
      _
    %p254 = scmp.le.s32.totalorder 2, %s7
    // Predicated region
    $region29: #{_lambda_.10} parent=5 // pred_check
      %p255 = pneg %p254
    $region30: #{_lambda_.10} parent=5 // pred_check_branch
      %257 = sbr.rel (%p255) target = $region32
    $region31: #{_lambda_.10} parent=5 // pred_region
      %s258 = ssub.s32 %s7, 2
      // Predicated region
      $region33: #{_lambda_.10} parent=31 // pred_check
        %p259 = pneg %p62
      $region34: #{_lambda_.10} parent=31 // pred_check_branch
        %261 = sbr.rel (%p259) target = $region36
      $region35: #{_lambda_.10} parent=31 // pred_region
        %p262 = scmp.lt.s32.totalorder %s13, 1
        %s263 = scalar_select %p262, %s13, 1
        %s264 = smul.addr %s263, 8
        %s265 = smul.addr %s264, 4
        %s266 = scalar_lea.vmem %s1, %s265
      $region36: #{_lambda_.10} parent=31 // pred_fallthru
        _
    $region32: #{_lambda_.10} parent=5 // pred_fallthru
      _
  $region6: #{_lambda_.10} parent=0 // loop_footer
    %s11 = sadd.s32 1, %s7
  $region7: #{_lambda_.10} parent=0 // loop_footer_branch
    %6 = sbr.rel target = $region3
  $region8: #{_lambda_.10} parent=0 // loop_exit
    _

// kernel: _lambda_.11
$region0: #{_lambda_.11}
  #allocation0 [shape = 'u32[]', space=smem, size = 0x4, offset = 0x4, fixed_abs, tag = 'smem constant byte address 0x4 - core index']
  #allocation1 [shape = 'u32[144,128]{1,0:T(1,128)}', space=vmem, size = 0x12000, scoped, tag = 'internal scratch']
  %s0 = inlined_call_operand.vmem [shape: bf16[32,256], index: 0, kind: input, shape index: {}]
  %s1 = inlined_call_operand.vmem [shape: bf16[256,128], index: 1, kind: input, shape index: {}]
  %s2 = inlined_call_operand.vmem [shape: f32[32,128], index: 2, kind: output, shape index: {}]
  %s3 = sld [smem:[#allocation0]]
  $region18: #{_lambda_.11} parent=0
    _
  %s5 = ssub.s32 1, %s3
  %s6 = scalar_select 0, %s5, %s3
  // Predicated region
  $region2: #{_lambda_.11} parent=0 // pred_check
    _
  $region3: #{_lambda_.11} parent=0 // pred_check_branch
    %8 = sbr.rel (0) target = $region5
  $region4: #{_lambda_.11} parent=0 // pred_region
    _
  $region5: #{_lambda_.11} parent=0 // pred_fallthru
    _
  // Predicated region
  $region6: #{_lambda_.11} parent=0 // pred_check
    _
  $region7: #{_lambda_.11} parent=0 // pred_check_branch
    %10 = sbr.rel (0) target = $region9
  $region8: #{_lambda_.11} parent=0 // pred_region
    _
  $region9: #{_lambda_.11} parent=0 // pred_fallthru
    _
  %v12 = vld [vmem:[%s0] sm:$0xff]
  %v13 = vld [vmem:[%s0 + $0x8] sm:$0xff]
  %v14 = vld [vmem:[%s0 + $0x10] sm:$0xff]
  %v15 = vld [vmem:[%s0 + $0x18] sm:$0xff]
  %v16 = vld [vmem:[%s1] sm:$0xf]
  %v17 = vld [vmem:[%s1 + $0x4] sm:$0xf]
  %v18 = vld [vmem:[%s1 + $0x8] sm:$0xf]
  %v19 = vld [vmem:[%s1 + $0xc] sm:$0xf]
  %v20 = vld [vmem:[%s1 + $0x10] sm:$0xf]
  %v21 = vld [vmem:[%s1 + $0x14] sm:$0xf]
  %v22 = vld [vmem:[%s1 + $0x18] sm:$0xf]
  %v23 = vld [vmem:[%s1 + $0x1c] sm:$0xf]
  %v24 = vld [vmem:[%s1 + $0x20] sm:$0xf]
  %v25 = vld [vmem:[%s1 + $0x24] sm:$0xf]
  %v26 = vld [vmem:[%s1 + $0x28] sm:$0xf]
  %v27 = vld [vmem:[%s1 + $0x2c] sm:$0xf]
  %v28 = vld [vmem:[%s1 + $0x30] sm:$0xf]
  %v29 = vld [vmem:[%s1 + $0x34] sm:$0xf]
  %v30 = vld [vmem:[%s1 + $0x38] sm:$0xf]
  %v31 = vld [vmem:[%s1 + $0x3c] sm:$0xf]
  %v32 = vld [vmem:[%s1 + $0x40] sm:$0xf]
  %v33 = vld [vmem:[%s1 + $0x44] sm:$0xf]
  %v34 = vld [vmem:[%s1 + $0x48] sm:$0xf]
  %v35 = vld [vmem:[%s1 + $0x4c] sm:$0xf]
  %v36 = vld [vmem:[%s1 + $0x50] sm:$0xf]
  %v37 = vld [vmem:[%s1 + $0x54] sm:$0xf]
  %v38 = vld [vmem:[%s1 + $0x58] sm:$0xf]
  %v39 = vld [vmem:[%s1 + $0x5c] sm:$0xf]
  %v40 = vld [vmem:[%s1 + $0x60] sm:$0xf]
  %v41 = vld [vmem:[%s1 + $0x64] sm:$0xf]
  %v42 = vld [vmem:[%s1 + $0x68] sm:$0xf]
  %v43 = vld [vmem:[%s1 + $0x6c] sm:$0xf]
  %v44 = vld [vmem:[%s1 + $0x70] sm:$0xf]
  %v45 = vld [vmem:[%s1 + $0x74] sm:$0xf]
  %v46 = vld [vmem:[%s1 + $0x78] sm:$0xf]
  %v47 = vld [vmem:[%s1 + $0x7c] sm:$0xf]
  %v52 = vunpack.c.l.b16 %v12
  %v53 = vunpack.c.h.b16 %v12
  %v54 = vunpack.c.l.b16 %v13
  %v55 = vunpack.c.h.b16 %v13
  %v56 = vunpack.c.l.b16 %v14
  %v57 = vunpack.c.h.b16 %v14
  %v58 = vunpack.c.l.b16 %v15
  %v59 = vunpack.c.h.b16 %v15
  %v60 = vpack.c.b16 %v54, %v52
  %v61 = vpack.c.b16 %v55, %v53
  %v62 = vpack.c.b16 %v58, %v56
  %v63 = vpack.c.b16 %v59, %v57
  %v100 = vunpack.c.l.b16 %v16
  %v101 = vunpack.c.l.b16 %v17
  %v102 = vunpack.c.l.b16 %v18
  %v103 = vunpack.c.l.b16 %v19
  %v104 = vunpack.c.l.b16 %v20
  %v105 = vunpack.c.l.b16 %v21
  %v106 = vunpack.c.l.b16 %v22
  %v107 = vunpack.c.l.b16 %v23
  %v108 = vunpack.c.l.b16 %v24
  %v109 = vunpack.c.l.b16 %v25
  %v110 = vunpack.c.l.b16 %v26
  %v111 = vunpack.c.l.b16 %v27
  %v112 = vunpack.c.l.b16 %v28
  %v113 = vunpack.c.l.b16 %v29
  %v114 = vunpack.c.l.b16 %v30
  %v115 = vunpack.c.l.b16 %v31
  %v116 = vunpack.c.l.b16 %v32
  %v117 = vunpack.c.l.b16 %v33
  %v118 = vunpack.c.l.b16 %v34
  %v119 = vunpack.c.l.b16 %v35
  %v120 = vunpack.c.l.b16 %v36
  %v121 = vunpack.c.l.b16 %v37
  %v122 = vunpack.c.l.b16 %v38
  %v123 = vunpack.c.l.b16 %v39
  %v124 = vunpack.c.l.b16 %v40
  %v125 = vunpack.c.l.b16 %v41
  %v126 = vunpack.c.l.b16 %v42
  %v127 = vunpack.c.l.b16 %v43
  %v128 = vunpack.c.l.b16 %v44
  %v129 = vunpack.c.l.b16 %v45
  %v130 = vunpack.c.l.b16 %v46
  %v131 = vunpack.c.l.b16 %v47
  %v132 = vpack.c.b16 %v101, %v100
  %v133 = vpack.c.b16 %v103, %v102
  %v134 = vpack.c.b16 %v105, %v104
  %v135 = vpack.c.b16 %v107, %v106
  %v136 = vpack.c.b16 %v109, %v108
  %v137 = vpack.c.b16 %v111, %v110
  %v138 = vpack.c.b16 %v113, %v112
  %v139 = vpack.c.b16 %v115, %v114
  %v140 = vpack.c.b16 %v117, %v116
  %v141 = vpack.c.b16 %v119, %v118
  %v142 = vpack.c.b16 %v121, %v120
  %v143 = vpack.c.b16 %v123, %v122
  %v144 = vpack.c.b16 %v125, %v124
  %v145 = vpack.c.b16 %v127, %v126
  %v146 = vpack.c.b16 %v129, %v128
  %v147 = vpack.c.b16 %v131, %v130
  %164 = vmatprep.subr.bf16.mxu0 0
  %165 = vmatpush1.bf16.msra.mxu0 %v132
  %166 = vmatprep.subr.bf16.mxu0 0
  %167 = vmatpush1.bf16.msra.mxu0 %v133
  %168 = vmatprep.subr.bf16.mxu0 0
  %169 = vmatpush1.bf16.msra.mxu0 %v134
  %170 = vmatprep.subr.bf16.mxu0 0
  %171 = vmatpush1.bf16.msra.mxu0 %v135
  %172 = vmatprep.subr.bf16.mxu0 0
  %173 = vmatpush1.bf16.msra.mxu0 %v136
  %174 = vmatprep.subr.bf16.mxu0 0
  %175 = vmatpush1.bf16.msra.mxu0 %v137
  %176 = vmatprep.subr.bf16.mxu0 0
  %177 = vmatpush1.bf16.msra.mxu0 %v138
  %178 = vmatprep.subr.bf16.mxu0 0
  %179 = vmatpush1.bf16.msra.mxu0 %v139
  %180 = vmatprep.subr.bf16.mxu0 0
  %181 = vmatpush1.bf16.msra.mxu0 %v140
  %182 = vmatprep.subr.bf16.mxu0 0
  %183 = vmatpush1.bf16.msra.mxu0 %v141
  %184 = vmatprep.subr.bf16.mxu0 0
  %185 = vmatpush1.bf16.msra.mxu0 %v142
  %186 = vmatprep.subr.bf16.mxu0 0
  %187 = vmatpush1.bf16.msra.mxu0 %v143
  %188 = vmatprep.subr.bf16.mxu0 0
  %189 = vmatpush1.bf16.msra.mxu0 %v144
  %190 = vmatprep.subr.bf16.mxu0 0
  %191 = vmatpush1.bf16.msra.mxu0 %v145
  %192 = vmatprep.subr.bf16.mxu0 0
  %193 = vmatpush1.bf16.msra.mxu0 %v146
  %194 = vmatprep.subr.bf16.mxu0 0
  %195 = vmatpush1.bf16.msra.mxu0 %v147
  %196 = vmatprep.mubr.bf16.mxu0 %v61
  %197 = vmatmul.mubr.bf16.gmra.mrb[0].mxu0 %v60
  %v198 = vpop.f32.mrb[0].mxu0
  %v199 = vadd.f32 0.0, %v198
  %v200 = vpop.f32.mrb[0].mxu0
  %v201 = vpop.f32.mrb[0].mxu0
  %v202 = vadd.f32 0.0, %v201
  %v203 = vpop.f32.mrb[0].mxu0
  %204 = vmatprep.mubr.bf16.mxu0 %v63
  %205 = vmatmul.mubr.bf16.gmra.mrb[0].mxu0 %v62
  %v206 = vpop.f32.mrb[0].mxu0
  %v207 = vadd.f32 0.0, %v206
  %v208 = vpop.f32.mrb[0].mxu0
  %v209 = vpop.f32.mrb[0].mxu0
  %v210 = vadd.f32 0.0, %v209
  %v211 = vpop.f32.mrb[0].mxu0
  %212 = vdwg.mxu0
  %213 = vst [vmem:[%s2] sm:$0xff] %v199
  %214 = vst [vmem:[%s2 + $0x8] sm:$0xff] %v202
  %215 = vst [vmem:[%s2 + $0x10] sm:$0xff] %v207
  %216 = vst [vmem:[%s2 + $0x18] sm:$0xff] %v210
  // Predicated region
  $region10: #{_lambda_.11} parent=0 // pred_check
    _
  $region11: #{_lambda_.11} parent=0 // pred_check_branch
    %218 = sbr.rel (0) target = $region13
  $region12: #{_lambda_.11} parent=0 // pred_region
    _
  $region13: #{_lambda_.11} parent=0 // pred_fallthru
    _
  // Predicated region
  $region14: #{_lambda_.11} parent=0 // pred_check
    _
  $region15: #{_lambda_.11} parent=0 // pred_check_branch
    %220 = sbr.rel (0) target = $region17
  $region16: #{_lambda_.11} parent=0 // pred_region
    _
  $region17: #{_lambda_.11} parent=0 // pred_fallthru
    _

// kernel: _lambda_.12
$region0: #{_lambda_.12}
  #allocation0 [shape = 'u32[]', space=smem, size = 0x4, offset = 0x4, fixed_abs, tag = 'smem constant byte address 0x4 - core index']
  #allocation1 [shape = 'u32[144,128]{1,0:T(1,128)}', space=vmem, size = 0x12000, scoped, tag = 'internal scratch']
  %s0 = inlined_call_operand.vmem [shape: f32[2,16,128], index: 0, kind: input, shape index: {}]
  %s1 = inlined_call_operand.vmem [shape: bf16[2,16,128], index: 1, kind: output, shape index: {}]
  %s2 = sld [smem:[#allocation0]]
  $region37: #{_lambda_.12} parent=0
    _
  %s4 = ssub.s32 1, %s2
  %s5 = scalar_select 0, %s4, %s2
  loop: start=0, step=1, limit=4
  $region2: #{_lambda_.12} parent=0 // loop_pre_header
    _
  $region3: #{_lambda_.12} parent=0 // loop_header
    %s7 = sphi 0, %s11
    %p8 = scmp.ge.s32.totalorder %s7, 4
    %s17 = sphi 0, %s19
    %s20 = sphi 0, %s17
    %s21 = sphi 0, %s20
    %s37 = sphi 0, %s21
    %s43 = sphi 0, %s45
    %s46 = sphi 0, %s43
    %s47 = sphi 0, %s46
    %s63 = sphi 0, %s47
  $region4: #{_lambda_.12} parent=0 // loop_header_branch
    %10 = sbr.rel (%p8) target = $region8
  $region5: #{_lambda_.12} parent=0 // loop_body
    %s12 = ssub.s32 %s7, 1
    %s13 = ssub.s32 %s7, 2
    %s14 = sadd.s32 %s7, 1
    %s15 = ssub.s32 %s7, %s14
    %p16 = scmp.eq.s32.totalorder %s15, 0
    %s18 = sadd.s32 %s17, 1
    %s19 = scalar_select %p16, %s17, %s18
    %p22 = pneg %p16
    %p23 = scmp.eq.s32.totalorder %s7, 1
    %p24 = por %p22, %p23
    %p25 = scmp.ne.s32.totalorder %s17, %s20
    %p26 = scmp.eq.s32.totalorder %s7, 0
    %p27 = por %p25, %p26
    %p28 = scmp.ne.s32.totalorder %s17, %s20
    %p29 = scmp.eq.s32.totalorder %s12, 1
    %p30 = por %p28, %p29
    %p31 = scmp.ne.s32.totalorder %s20, %s21
    %p32 = scmp.eq.s32.totalorder %s12, 0
    %p33 = por %p31, %p32
    %p34 = scmp.ne.s32.totalorder %s20, %s21
    %p35 = scmp.eq.s32.totalorder %s13, 1
    %p36 = por %p34, %p35
    %p38 = scmp.ne.s32.totalorder %s21, %s37
    %p39 = scmp.eq.s32.totalorder %s13, 0
    %p40 = por %p38, %p39
    %s41 = ssub.s32 %s7, %s14
    %p42 = scmp.eq.s32.totalorder %s41, 0
    %s44 = sadd.s32 %s43, 1
    %s45 = scalar_select %p42, %s43, %s44
    %p48 = pneg %p42
    %p49 = scmp.eq.s32.totalorder %s7, 1
    %p50 = por %p48, %p49
    %p51 = scmp.ne.s32.totalorder %s43, %s46
    %p52 = scmp.eq.s32.totalorder %s7, 0
    %p53 = por %p51, %p52
    %p54 = scmp.ne.s32.totalorder %s43, %s46
    %p55 = scmp.eq.s32.totalorder %s12, 1
    %p56 = por %p54, %p55
    %p57 = scmp.ne.s32.totalorder %s46, %s47
    %p58 = scmp.eq.s32.totalorder %s12, 0
    %p59 = por %p57, %p58
    %p60 = scmp.ne.s32.totalorder %s46, %s47
    %p61 = scmp.eq.s32.totalorder %s13, 1
    %p62 = por %p60, %p61
    %p64 = scmp.ne.s32.totalorder %s47, %s63
    %p65 = scmp.eq.s32.totalorder %s13, 0
    %p66 = por %p64, %p65
    %p67 = scmp.le.s32.totalorder 1, %s7
    %p68 = scmp.lt.s32.totalorder %s7, 3
    %p69 = pnand %p67, %p68
    %p70 = pneg %p69
    // Predicated region
    $region9: #{_lambda_.12} parent=5 // pred_check
      _
    $region10: #{_lambda_.12} parent=5 // pred_check_branch
      %72 = sbr.rel (%p69) target = $region12
    $region11: #{_lambda_.12} parent=5 // pred_region
      %s73 = ssub.s32 %s7, 1
    $region12: #{_lambda_.12} parent=5 // pred_fallthru
      _
    %p74 = scmp.lt.s32.totalorder %s7, 2
    // Predicated region
    $region13: #{_lambda_.12} parent=5 // pred_check
      %p75 = pneg %p74
    $region14: #{_lambda_.12} parent=5 // pred_check_branch
      %77 = sbr.rel (%p75) target = $region16
    $region15: #{_lambda_.12} parent=5 // pred_region
      // Predicated region
      $region17: #{_lambda_.12} parent=15 // pred_check
        %p78 = pneg %p27
      $region18: #{_lambda_.12} parent=15 // pred_check_branch
        %80 = sbr.rel (%p78) target = $region20
      $region19: #{_lambda_.12} parent=15 // pred_region
        %p81 = scmp.lt.s32.totalorder %s7, 1
        %s82 = scalar_select %p81, %s7, 1
        %s83 = smul.addr %s82, 2
        %s84 = smul.addr %s83, 8
        %s85 = scalar_lea.vmem %s0, %s84
      $region20: #{_lambda_.12} parent=15 // pred_fallthru
        _
    $region16: #{_lambda_.12} parent=5 // pred_fallthru
      _
    %p86 = scmp.le.s32.totalorder 1, %s7
    %p87 = scmp.lt.s32.totalorder %s7, 3
    %p88 = pnand %p86, %p87
    %p89 = pneg %p88
    // Predicated region
    $region21: #{_lambda_.12} parent=5 // pred_check
      _
    $region22: #{_lambda_.12} parent=5 // pred_check_branch
      %91 = sbr.rel (%p88) target = $region24
    $region23: #{_lambda_.12} parent=5 // pred_region
      %s92 = ssub.s32 %s7, 1
      %p93 = scmp.lt.s32.totalorder %s12, 1
      %s94 = scalar_select %p93, %s12, 1
      %s95 = smul.addr %s94, 2
      %s96 = smul.addr %s95, 8
      %s97 = scalar_lea.vmem %s0, %s96
      %p98 = pneg %p33
      %p99 = pneg %p30
      %p100 = pneg %p59
      %p101 = pneg %p56
      %p102 = scmp.lt.s32.totalorder %s12, 1
      %s103 = scalar_select %p102, %s12, 1
      %s104 = smul.addr %s103, 2
      %s105 = smul.addr %s104, 4
      %s106 = scalar_lea.vmem %s1, %s105
      %p107 = scmp.lt.s32.totalorder %s12, 1
      %s108 = scalar_select %p107, %s12, 1
      %s109 = smul.addr %s108, 2
      %s110 = smul.addr %s109, 8
      %s111 = scalar_lea.vmem %s0, %s110
      %p112 = scmp.lt.s32.totalorder %s12, 1
      %s113 = scalar_select %p112, %s12, 1
      %s114 = smul.addr %s113, 2
      %s115 = smul.addr %s114, 4
      %s116 = scalar_lea.vmem %s1, %s115
      %v117 = vld [vmem:[%s111] sm:$0xff]
      %v118 = vld [vmem:[%s111 + $0x8] sm:$0xff]
      %v119 = vadd.f32 %v117, %v118
      %v120 = vrot.slane %v119, 4
      %v121 = vadd.f32 %v119, %v120
      %v122 = vrot.slane %v121, 2
      %v123 = vadd.f32 %v121, %v122
      %v124 = vrot.slane %v123, 1
      %v125 = vadd.f32 %v123, %v124
      %v126 = vmul.f32 %v117, %v117
      %v127 = vmul.f32 %v118, %v118
      %v128 = vadd.f32 %v126, %v127
      %v129 = vrot.slane %v128, 4
      %v130 = vadd.f32 %v128, %v129
      %v131 = vrot.slane %v130, 2
      %v132 = vadd.f32 %v130, %v131
      %v133 = vrot.slane %v132, 1
      %v134 = vadd.f32 %v132, %v133
      %v135 = vmul.f32 %v125, 0.0625
      %v136 = vmul.f32 %v134, 0.0625
      %v137 = vmul.f32 %v135, %v135
      %v138 = vsub.f32 %v136, %v137
      %v139 = vmax.f32 %v138, 0.0
      %v140 = vsub.f32 %v117, %v135
      %v141 = vsub.f32 %v118, %v135
      %v142 = vadd.f32 %v139, 1e-05
      %v143 = vrsqrt.pop %v142
      %v144 = vmul.f32 %v140, %v143
      %v145 = vmul.f32 %v141, %v143
      %vm146 = vcmp.ge.f32.partialorder %v144, 0.0
      %vm147 = vcmp.ge.f32.partialorder %v145, 0.0
      %v148 = vmul.f32 %v144, 0.2
      %v149 = vmul.f32 %v145, 0.2
      %v150 = vsel %vm146, %v144, %v148
      %v151 = vsel %vm147, %v145, %v149
      %v152 = vpack.c.bf16 %v151, %v150
      %v154 = vunpack.c.l.b16 %v152
      %v155 = vunpack.c.h.b16 %v152
      %v156 = vpack.c.b16 %v154, %v154
      %v157 = vpack.c.b16 %v155, %v155
      %160 = vst [vmem:[%s116] sm:$0xf] %v156
      %161 = vst [vmem:[%s116 + $0x4] sm:$0xf] %v157
      %p162 = scmp.lt.s32.totalorder %s12, 1
      %s163 = scalar_select %p162, %s12, 1
      %s164 = smul.addr %s163, 2
      %s165 = smul.addr %s164, 4
      %s166 = scalar_lea.vmem %s1, %s165
      // Predicated region
      $region25: #{_lambda_.12} parent=23 // pred_check
        %p167 = pneg %p56
      $region26: #{_lambda_.12} parent=23 // pred_check_branch
        %169 = sbr.rel (%p167) target = $region28
      $region27: #{_lambda_.12} parent=23 // pred_region
        _
      $region28: #{_lambda_.12} parent=23 // pred_fallthru
        _
    $region24: #{_lambda_.12} parent=5 // pred_fallthru
      _
    %p170 = scmp.le.s32.totalorder 2, %s7
    // Predicated region
    $region29: #{_lambda_.12} parent=5 // pred_check
      %p171 = pneg %p170
    $region30: #{_lambda_.12} parent=5 // pred_check_branch
      %173 = sbr.rel (%p171) target = $region32
    $region31: #{_lambda_.12} parent=5 // pred_region
      %s174 = ssub.s32 %s7, 2
      // Predicated region
      $region33: #{_lambda_.12} parent=31 // pred_check
        %p175 = pneg %p62
      $region34: #{_lambda_.12} parent=31 // pred_check_branch
        %177 = sbr.rel (%p175) target = $region36
      $region35: #{_lambda_.12} parent=31 // pred_region
        %p178 = scmp.lt.s32.totalorder %s13, 1
        %s179 = scalar_select %p178, %s13, 1
        %s180 = smul.addr %s179, 2
        %s181 = smul.addr %s180, 4
        %s182 = scalar_lea.vmem %s1, %s181
      $region36: #{_lambda_.12} parent=31 // pred_fallthru
        _
    $region32: #{_lambda_.12} parent=5 // pred_fallthru
      _
  $region6: #{_lambda_.12} parent=0 // loop_footer
    %s11 = sadd.s32 1, %s7
  $region7: #{_lambda_.12} parent=0 // loop_footer_branch
    %6 = sbr.rel target = $region3
  $region8: #{_lambda_.12} parent=0 // loop_exit
    _

// kernel: _lambda_.13
$region0: #{_lambda_.13}
  #allocation0 [shape = 'u32[]', space=smem, size = 0x4, offset = 0x4, fixed_abs, tag = 'smem constant byte address 0x4 - core index']
  #allocation1 [shape = 'u32[144,128]{1,0:T(1,128)}', space=vmem, size = 0x12000, scoped, tag = 'internal scratch']
  %s0 = inlined_call_operand.vmem [shape: bf16[18,512], index: 0, kind: input, shape index: {}]
  %s1 = inlined_call_operand.vmem [shape: bf16[512,128], index: 1, kind: input, shape index: {}]
  %s2 = inlined_call_operand.vmem [shape: f32[18,128], index: 2, kind: output, shape index: {}]
  %s3 = sld [smem:[#allocation0]]
  $region18: #{_lambda_.13} parent=0
    _
  %s5 = ssub.s32 1, %s3
  %s6 = scalar_select 0, %s5, %s3
  // Predicated region
  $region2: #{_lambda_.13} parent=0 // pred_check
    _
  $region3: #{_lambda_.13} parent=0 // pred_check_branch
    %8 = sbr.rel (0) target = $region5
  $region4: #{_lambda_.13} parent=0 // pred_region
    _
  $region5: #{_lambda_.13} parent=0 // pred_fallthru
    _
  // Predicated region
  $region6: #{_lambda_.13} parent=0 // pred_check
    _
  $region7: #{_lambda_.13} parent=0 // pred_check_branch
    %10 = sbr.rel (0) target = $region9
  $region8: #{_lambda_.13} parent=0 // pred_region
    _
  $region9: #{_lambda_.13} parent=0 // pred_fallthru
    _
  %v12 = vld [vmem:[%s0] sm:$0xff]
  %v13 = vld [vmem:[%s0 + $0x8] sm:$0xff]
  %v14 = vld [vmem:[%s0 + $0x10] sm:$0xff]
  %v15 = vld [vmem:[%s0 + $0x18] sm:$0xff]
  %v16 = vld [vmem:[%s0 + $0x20] sm:$0xff]
  %v17 = vld [vmem:[%s0 + $0x28] sm:$0xff]
  %v18 = vld [vmem:[%s1] sm:$0xf]
  %v19 = vld [vmem:[%s1 + $0x4] sm:$0xf]
  %v20 = vld [vmem:[%s1 + $0x8] sm:$0xf]
  %v21 = vld [vmem:[%s1 + $0xc] sm:$0xf]
  %v22 = vld [vmem:[%s1 + $0x10] sm:$0xf]
  %v23 = vld [vmem:[%s1 + $0x14] sm:$0xf]
  %v24 = vld [vmem:[%s1 + $0x18] sm:$0xf]
  %v25 = vld [vmem:[%s1 + $0x1c] sm:$0xf]
  %v26 = vld [vmem:[%s1 + $0x20] sm:$0xf]
  %v27 = vld [vmem:[%s1 + $0x24] sm:$0xf]
  %v28 = vld [vmem:[%s1 + $0x28] sm:$0xf]
  %v29 = vld [vmem:[%s1 + $0x2c] sm:$0xf]
  %v30 = vld [vmem:[%s1 + $0x30] sm:$0xf]
  %v31 = vld [vmem:[%s1 + $0x34] sm:$0xf]
  %v32 = vld [vmem:[%s1 + $0x38] sm:$0xf]
  %v33 = vld [vmem:[%s1 + $0x3c] sm:$0xf]
  %v34 = vld [vmem:[%s1 + $0x40] sm:$0xf]
  %v35 = vld [vmem:[%s1 + $0x44] sm:$0xf]
  %v36 = vld [vmem:[%s1 + $0x48] sm:$0xf]
  %v37 = vld [vmem:[%s1 + $0x4c] sm:$0xf]
  %v38 = vld [vmem:[%s1 + $0x50] sm:$0xf]
  %v39 = vld [vmem:[%s1 + $0x54] sm:$0xf]
  %v40 = vld [vmem:[%s1 + $0x58] sm:$0xf]
  %v41 = vld [vmem:[%s1 + $0x5c] sm:$0xf]
  %v42 = vld [vmem:[%s1 + $0x60] sm:$0xf]
  %v43 = vld [vmem:[%s1 + $0x64] sm:$0xf]
  %v44 = vld [vmem:[%s1 + $0x68] sm:$0xf]
  %v45 = vld [vmem:[%s1 + $0x6c] sm:$0xf]
  %v46 = vld [vmem:[%s1 + $0x70] sm:$0xf]
  %v47 = vld [vmem:[%s1 + $0x74] sm:$0xf]
  %v48 = vld [vmem:[%s1 + $0x78] sm:$0xf]
  %v49 = vld [vmem:[%s1 + $0x7c] sm:$0xf]
  %v50 = vld [vmem:[%s1 + $0x80] sm:$0xf]
  %v51 = vld [vmem:[%s1 + $0x84] sm:$0xf]
  %v52 = vld [vmem:[%s1 + $0x88] sm:$0xf]
  %v53 = vld [vmem:[%s1 + $0x8c] sm:$0xf]
  %v54 = vld [vmem:[%s1 + $0x90] sm:$0xf]
  %v55 = vld [vmem:[%s1 + $0x94] sm:$0xf]
  %v56 = vld [vmem:[%s1 + $0x98] sm:$0xf]
  %v57 = vld [vmem:[%s1 + $0x9c] sm:$0xf]
  %v58 = vld [vmem:[%s1 + $0xa0] sm:$0xf]
  %v59 = vld [vmem:[%s1 + $0xa4] sm:$0xf]
  %v60 = vld [vmem:[%s1 + $0xa8] sm:$0xf]
  %v61 = vld [vmem:[%s1 + $0xac] sm:$0xf]
  %v62 = vld [vmem:[%s1 + $0xb0] sm:$0xf]
  %v63 = vld [vmem:[%s1 + $0xb4] sm:$0xf]
  %v64 = vld [vmem:[%s1 + $0xb8] sm:$0xf]
  %v65 = vld [vmem:[%s1 + $0xbc] sm:$0xf]
  %v66 = vld [vmem:[%s1 + $0xc0] sm:$0xf]
  %v67 = vld [vmem:[%s1 + $0xc4] sm:$0xf]
  %v68 = vld [vmem:[%s1 + $0xc8] sm:$0xf]
  %v69 = vld [vmem:[%s1 + $0xcc] sm:$0xf]
  %v70 = vld [vmem:[%s1 + $0xd0] sm:$0xf]
  %v71 = vld [vmem:[%s1 + $0xd4] sm:$0xf]
  %v72 = vld [vmem:[%s1 + $0xd8] sm:$0xf]
  %v73 = vld [vmem:[%s1 + $0xdc] sm:$0xf]
  %v74 = vld [vmem:[%s1 + $0xe0] sm:$0xf]
  %v75 = vld [vmem:[%s1 + $0xe4] sm:$0xf]
  %v76 = vld [vmem:[%s1 + $0xe8] sm:$0xf]
  %v77 = vld [vmem:[%s1 + $0xec] sm:$0xf]
  %v78 = vld [vmem:[%s1 + $0xf0] sm:$0xf]
  %v79 = vld [vmem:[%s1 + $0xf4] sm:$0xf]
  %v80 = vld [vmem:[%s1 + $0xf8] sm:$0xf]
  %v81 = vld [vmem:[%s1 + $0xfc] sm:$0xf]
  %v88 = vunpack.c.l.b16 %v12
  %v89 = vunpack.c.h.b16 %v12
  %v90 = vunpack.c.l.b16 %v13
  %v91 = vunpack.c.h.b16 %v13
  %v92 = vunpack.c.l.b16 %v14
  %v93 = vunpack.c.h.b16 %v14
  %v94 = vunpack.c.l.b16 %v15
  %v95 = vunpack.c.h.b16 %v15
  %v96 = vunpack.c.l.b16 %v16
  %v97 = vunpack.c.h.b16 %v16
  %v98 = vunpack.c.l.b16 %v17
  %v99 = vunpack.c.h.b16 %v17
  %v100 = vpack.c.b16 %v92, %v88
  %v101 = vpack.c.b16 %v93, %v89
  %v102 = vpack.c.b16 %v94, %v90
  %v103 = vpack.c.b16 %v95, %v91
  %v104 = vpack.c.b16 %v96, %v96
  %v105 = vpack.c.b16 %v97, %v97
  %v106 = vpack.c.b16 %v98, %v98
  %v107 = vpack.c.b16 %v99, %v99
  %v180 = vunpack.c.l.b16 %v18
  %v181 = vunpack.c.l.b16 %v19
  %v182 = vunpack.c.l.b16 %v20
  %v183 = vunpack.c.l.b16 %v21
  %v184 = vunpack.c.l.b16 %v22
  %v185 = vunpack.c.l.b16 %v23
  %v186 = vunpack.c.l.b16 %v24
  %v187 = vunpack.c.l.b16 %v25
  %v188 = vunpack.c.l.b16 %v26
  %v189 = vunpack.c.l.b16 %v27
  %v190 = vunpack.c.l.b16 %v28
  %v191 = vunpack.c.l.b16 %v29
  %v192 = vunpack.c.l.b16 %v30
  %v193 = vunpack.c.l.b16 %v31
  %v194 = vunpack.c.l.b16 %v32
  %v195 = vunpack.c.l.b16 %v33
  %v196 = vunpack.c.l.b16 %v34
  %v197 = vunpack.c.l.b16 %v35
  %v198 = vunpack.c.l.b16 %v36
  %v199 = vunpack.c.l.b16 %v37
  %v200 = vunpack.c.l.b16 %v38
  %v201 = vunpack.c.l.b16 %v39
  %v202 = vunpack.c.l.b16 %v40
  %v203 = vunpack.c.l.b16 %v41
  %v204 = vunpack.c.l.b16 %v42
  %v205 = vunpack.c.l.b16 %v43
  %v206 = vunpack.c.l.b16 %v44
  %v207 = vunpack.c.l.b16 %v45
  %v208 = vunpack.c.l.b16 %v46
  %v209 = vunpack.c.l.b16 %v47
  %v210 = vunpack.c.l.b16 %v48
  %v211 = vunpack.c.l.b16 %v49
  %v212 = vunpack.c.l.b16 %v50
  %v213 = vunpack.c.l.b16 %v51
  %v214 = vunpack.c.l.b16 %v52
  %v215 = vunpack.c.l.b16 %v53
  %v216 = vunpack.c.l.b16 %v54
  %v217 = vunpack.c.l.b16 %v55
  %v218 = vunpack.c.l.b16 %v56
  %v219 = vunpack.c.l.b16 %v57
  %v220 = vunpack.c.l.b16 %v58
  %v221 = vunpack.c.l.b16 %v59
  %v222 = vunpack.c.l.b16 %v60
  %v223 = vunpack.c.l.b16 %v61
  %v224 = vunpack.c.l.b16 %v62
  %v225 = vunpack.c.l.b16 %v63
  %v226 = vunpack.c.l.b16 %v64
  %v227 = vunpack.c.l.b16 %v65
  %v228 = vunpack.c.l.b16 %v66
  %v229 = vunpack.c.l.b16 %v67
  %v230 = vunpack.c.l.b16 %v68
  %v231 = vunpack.c.l.b16 %v69
  %v232 = vunpack.c.l.b16 %v70
  %v233 = vunpack.c.l.b16 %v71
  %v234 = vunpack.c.l.b16 %v72
  %v235 = vunpack.c.l.b16 %v73
  %v236 = vunpack.c.l.b16 %v74
  %v237 = vunpack.c.l.b16 %v75
  %v238 = vunpack.c.l.b16 %v76
  %v239 = vunpack.c.l.b16 %v77
  %v240 = vunpack.c.l.b16 %v78
  %v241 = vunpack.c.l.b16 %v79
  %v242 = vunpack.c.l.b16 %v80
  %v243 = vunpack.c.l.b16 %v81
  %v244 = vpack.c.b16 %v181, %v180
  %v245 = vpack.c.b16 %v183, %v182
  %v246 = vpack.c.b16 %v185, %v184
  %v247 = vpack.c.b16 %v187, %v186
  %v248 = vpack.c.b16 %v189, %v188
  %v249 = vpack.c.b16 %v191, %v190
  %v250 = vpack.c.b16 %v193, %v192
  %v251 = vpack.c.b16 %v195, %v194
  %v252 = vpack.c.b16 %v197, %v196
  %v253 = vpack.c.b16 %v199, %v198
  %v254 = vpack.c.b16 %v201, %v200
  %v255 = vpack.c.b16 %v203, %v202
  %v256 = vpack.c.b16 %v205, %v204
  %v257 = vpack.c.b16 %v207, %v206
  %v258 = vpack.c.b16 %v209, %v208
  %v259 = vpack.c.b16 %v211, %v210
  %v260 = vpack.c.b16 %v213, %v212
  %v261 = vpack.c.b16 %v215, %v214
  %v262 = vpack.c.b16 %v217, %v216
  %v263 = vpack.c.b16 %v219, %v218
  %v264 = vpack.c.b16 %v221, %v220
  %v265 = vpack.c.b16 %v223, %v222
  %v266 = vpack.c.b16 %v225, %v224
  %v267 = vpack.c.b16 %v227, %v226
  %v268 = vpack.c.b16 %v229, %v228
  %v269 = vpack.c.b16 %v231, %v230
  %v270 = vpack.c.b16 %v233, %v232
  %v271 = vpack.c.b16 %v235, %v234
  %v272 = vpack.c.b16 %v237, %v236
  %v273 = vpack.c.b16 %v239, %v238
  %v274 = vpack.c.b16 %v241, %v240
  %v275 = vpack.c.b16 %v243, %v242
  %308 = vmatprep.subr.bf16.mxu0 0
  %309 = vmatpush1.bf16.msra.mxu0 %v244
  %310 = vmatprep.subr.bf16.mxu0 0
  %311 = vmatpush1.bf16.msra.mxu0 %v245
  %312 = vmatprep.subr.bf16.mxu0 0
  %313 = vmatpush1.bf16.msra.mxu0 %v246
  %314 = vmatprep.subr.bf16.mxu0 0
  %315 = vmatpush1.bf16.msra.mxu0 %v247
  %316 = vmatprep.subr.bf16.mxu0 0
  %317 = vmatpush1.bf16.msra.mxu0 %v248
  %318 = vmatprep.subr.bf16.mxu0 0
  %319 = vmatpush1.bf16.msra.mxu0 %v249
  %320 = vmatprep.subr.bf16.mxu0 0
  %321 = vmatpush1.bf16.msra.mxu0 %v250
  %322 = vmatprep.subr.bf16.mxu0 0
  %323 = vmatpush1.bf16.msra.mxu0 %v251
  %324 = vmatprep.subr.bf16.mxu0 0
  %325 = vmatpush1.bf16.msra.mxu0 %v252
  %326 = vmatprep.subr.bf16.mxu0 0
  %327 = vmatpush1.bf16.msra.mxu0 %v253
  %328 = vmatprep.subr.bf16.mxu0 0
  %329 = vmatpush1.bf16.msra.mxu0 %v254
  %330 = vmatprep.subr.bf16.mxu0 0
  %331 = vmatpush1.bf16.msra.mxu0 %v255
  %332 = vmatprep.subr.bf16.mxu0 0
  %333 = vmatpush1.bf16.msra.mxu0 %v256
  %334 = vmatprep.subr.bf16.mxu0 0
  %335 = vmatpush1.bf16.msra.mxu0 %v257
  %336 = vmatprep.subr.bf16.mxu0 0
  %337 = vmatpush1.bf16.msra.mxu0 %v258
  %338 = vmatprep.subr.bf16.mxu0 0
  %339 = vmatpush1.bf16.msra.mxu0 %v259
  %340 = vmatprep.mubr.bf16.mxu0 %v101
  %341 = vmatmul.mubr.bf16.gmra.mrb[0].mxu0 %v100
  %v342 = vpop.f32.mrb[0].mxu0
  %v343 = vadd.f32 0.0, %v342
  %v344 = vpop.f32.mrb[0].mxu0
  %v345 = vpop.f32.mrb[0].mxu0
  %v346 = vadd.f32 0.0, %v345
  %v347 = vpop.f32.mrb[0].mxu0
  %348 = vmatprep.mubr.bf16.mxu0 %v105
  %349 = vmatmul.mubr.bf16.gmra.mrb[0].mxu0 %v104
  %v350 = vpop.f32.mrb[0].mxu0
  %v351 = vadd.f32 0.0, %v350
  %v352 = vpop.f32.mrb[0].mxu0
  %v353 = vpop.f32.mrb[0].mxu0
  %v354 = vpop.f32.mrb[0].mxu0
  %355 = vdwg.mxu0
  %356 = vmatprep.subr.bf16.mxu0 0
  %357 = vmatpush1.bf16.msra.mxu0 %v260
  %358 = vmatprep.subr.bf16.mxu0 0
  %359 = vmatpush1.bf16.msra.mxu0 %v261
  %360 = vmatprep.subr.bf16.mxu0 0
  %361 = vmatpush1.bf16.msra.mxu0 %v262
  %362 = vmatprep.subr.bf16.mxu0 0
  %363 = vmatpush1.bf16.msra.mxu0 %v263
  %364 = vmatprep.subr.bf16.mxu0 0
  %365 = vmatpush1.bf16.msra.mxu0 %v264
  %366 = vmatprep.subr.bf16.mxu0 0
  %367 = vmatpush1.bf16.msra.mxu0 %v265
  %368 = vmatprep.subr.bf16.mxu0 0
  %369 = vmatpush1.bf16.msra.mxu0 %v266
  %370 = vmatprep.subr.bf16.mxu0 0
  %371 = vmatpush1.bf16.msra.mxu0 %v267
  %372 = vmatprep.subr.bf16.mxu0 0
  %373 = vmatpush1.bf16.msra.mxu0 %v268
  %374 = vmatprep.subr.bf16.mxu0 0
  %375 = vmatpush1.bf16.msra.mxu0 %v269
  %376 = vmatprep.subr.bf16.mxu0 0
  %377 = vmatpush1.bf16.msra.mxu0 %v270
  %378 = vmatprep.subr.bf16.mxu0 0
  %379 = vmatpush1.bf16.msra.mxu0 %v271
  %380 = vmatprep.subr.bf16.mxu0 0
  %381 = vmatpush1.bf16.msra.mxu0 %v272
  %382 = vmatprep.subr.bf16.mxu0 0
  %383 = vmatpush1.bf16.msra.mxu0 %v273
  %384 = vmatprep.subr.bf16.mxu0 0
  %385 = vmatpush1.bf16.msra.mxu0 %v274
  %386 = vmatprep.subr.bf16.mxu0 0
  %387 = vmatpush1.bf16.msra.mxu0 %v275
  %388 = vmatprep.mubr.bf16.mxu0 %v103
  %389 = vmatmul.mubr.bf16.gmra.mrb[0].mxu0 %v102
  %v390 = vpop.f32.mrb[0].mxu0
  %v391 = vadd.f32 %v343, %v390
  %v392 = vpop.f32.mrb[0].mxu0
  %v393 = vpop.f32.mrb[0].mxu0
  %v394 = vadd.f32 %v346, %v393
  %v395 = vpop.f32.mrb[0].mxu0
  %396 = vmatprep.mubr.bf16.mxu0 %v107
  %397 = vmatmul.mubr.bf16.gmra.mrb[0].mxu0 %v106
  %v398 = vpop.f32.mrb[0].mxu0
  %v399 = vadd.f32 %v351, %v398
  %v400 = vpop.f32.mrb[0].mxu0
  %v401 = vpop.f32.mrb[0].mxu0
  %v402 = vpop.f32.mrb[0].mxu0
  %403 = vdwg.mxu0
  %404 = vst [vmem:[%s2] sm:$0xff] %v391
  %405 = vst [vmem:[%s2 + $0x8] sm:$0xff] %v394
  %406 = vst [vmem:[%s2 + $0x10] sm:$0xff] %v399
  // Predicated region
  $region10: #{_lambda_.13} parent=0 // pred_check
    _
  $region11: #{_lambda_.13} parent=0 // pred_check_branch
    %408 = sbr.rel (0) target = $region13
  $region12: #{_lambda_.13} parent=0 // pred_region
    _
  $region13: #{_lambda_.13} parent=0 // pred_fallthru
    _
  // Predicated region
  $region14: #{_lambda_.13} parent=0 // pred_check
    _
  $region15: #{_lambda_.13} parent=0 // pred_check_branch
    %410 = sbr.rel (0) target = $region17
  $region16: #{_lambda_.13} parent=0 // pred_region
    _
  $region17: #{_lambda_.13} parent=0 // pred_fallthru
    _

// kernel: _lambda_.14
$region0: #{_lambda_.14}
  #allocation0 [shape = 'u32[]', space=smem, size = 0x4, offset = 0x4, fixed_abs, tag = 'smem constant byte address 0x4 - core index']
  #allocation1 [shape = 'u32[144,128]{1,0:T(1,128)}', space=vmem, size = 0x12000, scoped, tag = 'internal scratch']
  %s0 = inlined_call_operand.vmem [shape: f32[2,9,128], index: 0, kind: input, shape index: {}]
  %s1 = inlined_call_operand.vmem [shape: bf16[2,9,128], index: 1, kind: output, shape index: {}]
  %s2 = sld [smem:[#allocation0]]
  $region37: #{_lambda_.14} parent=0
    _
  %s4 = ssub.s32 1, %s2
  %s5 = scalar_select 0, %s4, %s2
  loop: start=0, step=1, limit=4
  $region2: #{_lambda_.14} parent=0 // loop_pre_header
    _
  $region3: #{_lambda_.14} parent=0 // loop_header
    %s7 = sphi 0, %s11
    %p8 = scmp.ge.s32.totalorder %s7, 4
    %s17 = sphi 0, %s19
    %s20 = sphi 0, %s17
    %s21 = sphi 0, %s20
    %s37 = sphi 0, %s21
    %s43 = sphi 0, %s45
    %s46 = sphi 0, %s43
    %s47 = sphi 0, %s46
    %s63 = sphi 0, %s47
  $region4: #{_lambda_.14} parent=0 // loop_header_branch
    %10 = sbr.rel (%p8) target = $region8
  $region5: #{_lambda_.14} parent=0 // loop_body
    %s12 = ssub.s32 %s7, 1
    %s13 = ssub.s32 %s7, 2
    %s14 = sadd.s32 %s7, 1
    %s15 = ssub.s32 %s7, %s14
    %p16 = scmp.eq.s32.totalorder %s15, 0
    %s18 = sadd.s32 %s17, 1
    %s19 = scalar_select %p16, %s17, %s18
    %p22 = pneg %p16
    %p23 = scmp.eq.s32.totalorder %s7, 1
    %p24 = por %p22, %p23
    %p25 = scmp.ne.s32.totalorder %s17, %s20
    %p26 = scmp.eq.s32.totalorder %s7, 0
    %p27 = por %p25, %p26
    %p28 = scmp.ne.s32.totalorder %s17, %s20
    %p29 = scmp.eq.s32.totalorder %s12, 1
    %p30 = por %p28, %p29
    %p31 = scmp.ne.s32.totalorder %s20, %s21
    %p32 = scmp.eq.s32.totalorder %s12, 0
    %p33 = por %p31, %p32
    %p34 = scmp.ne.s32.totalorder %s20, %s21
    %p35 = scmp.eq.s32.totalorder %s13, 1
    %p36 = por %p34, %p35
    %p38 = scmp.ne.s32.totalorder %s21, %s37
    %p39 = scmp.eq.s32.totalorder %s13, 0
    %p40 = por %p38, %p39
    %s41 = ssub.s32 %s7, %s14
    %p42 = scmp.eq.s32.totalorder %s41, 0
    %s44 = sadd.s32 %s43, 1
    %s45 = scalar_select %p42, %s43, %s44
    %p48 = pneg %p42
    %p49 = scmp.eq.s32.totalorder %s7, 1
    %p50 = por %p48, %p49
    %p51 = scmp.ne.s32.totalorder %s43, %s46
    %p52 = scmp.eq.s32.totalorder %s7, 0
    %p53 = por %p51, %p52
    %p54 = scmp.ne.s32.totalorder %s43, %s46
    %p55 = scmp.eq.s32.totalorder %s12, 1
    %p56 = por %p54, %p55
    %p57 = scmp.ne.s32.totalorder %s46, %s47
    %p58 = scmp.eq.s32.totalorder %s12, 0
    %p59 = por %p57, %p58
    %p60 = scmp.ne.s32.totalorder %s46, %s47
    %p61 = scmp.eq.s32.totalorder %s13, 1
    %p62 = por %p60, %p61
    %p64 = scmp.ne.s32.totalorder %s47, %s63
    %p65 = scmp.eq.s32.totalorder %s13, 0
    %p66 = por %p64, %p65
    %p67 = scmp.le.s32.totalorder 1, %s7
    %p68 = scmp.lt.s32.totalorder %s7, 3
    %p69 = pnand %p67, %p68
    %p70 = pneg %p69
    // Predicated region
    $region9: #{_lambda_.14} parent=5 // pred_check
      _
    $region10: #{_lambda_.14} parent=5 // pred_check_branch
      %72 = sbr.rel (%p69) target = $region12
    $region11: #{_lambda_.14} parent=5 // pred_region
      %s73 = ssub.s32 %s7, 1
    $region12: #{_lambda_.14} parent=5 // pred_fallthru
      _
    %p74 = scmp.lt.s32.totalorder %s7, 2
    // Predicated region
    $region13: #{_lambda_.14} parent=5 // pred_check
      %p75 = pneg %p74
    $region14: #{_lambda_.14} parent=5 // pred_check_branch
      %77 = sbr.rel (%p75) target = $region16
    $region15: #{_lambda_.14} parent=5 // pred_region
      // Predicated region
      $region17: #{_lambda_.14} parent=15 // pred_check
        %p78 = pneg %p27
      $region18: #{_lambda_.14} parent=15 // pred_check_branch
        %80 = sbr.rel (%p78) target = $region20
      $region19: #{_lambda_.14} parent=15 // pred_region
        %p81 = scmp.lt.s32.totalorder %s7, 1
        %s82 = scalar_select %p81, %s7, 1
        %s83 = smul.addr %s82, 2
        %s84 = smul.addr %s83, 8
        %s85 = scalar_lea.vmem %s0, %s84
      $region20: #{_lambda_.14} parent=15 // pred_fallthru
        _
    $region16: #{_lambda_.14} parent=5 // pred_fallthru
      _
    %p86 = scmp.le.s32.totalorder 1, %s7
    %p87 = scmp.lt.s32.totalorder %s7, 3
    %p88 = pnand %p86, %p87
    %p89 = pneg %p88
    // Predicated region
    $region21: #{_lambda_.14} parent=5 // pred_check
      _
    $region22: #{_lambda_.14} parent=5 // pred_check_branch
      %91 = sbr.rel (%p88) target = $region24
    $region23: #{_lambda_.14} parent=5 // pred_region
      %s92 = ssub.s32 %s7, 1
      %p93 = scmp.lt.s32.totalorder %s12, 1
      %s94 = scalar_select %p93, %s12, 1
      %s95 = smul.addr %s94, 2
      %s96 = smul.addr %s95, 8
      %s97 = scalar_lea.vmem %s0, %s96
      %p98 = pneg %p33
      %p99 = pneg %p30
      %p100 = pneg %p59
      %p101 = pneg %p56
      %p102 = scmp.lt.s32.totalorder %s12, 1
      %s103 = scalar_select %p102, %s12, 1
      %s104 = smul.addr %s103, 2
      %s105 = smul.addr %s104, 4
      %s106 = scalar_lea.vmem %s1, %s105
      %p107 = scmp.lt.s32.totalorder %s12, 1
      %s108 = scalar_select %p107, %s12, 1
      %s109 = smul.addr %s108, 2
      %s110 = smul.addr %s109, 8
      %s111 = scalar_lea.vmem %s0, %s110
      %p112 = scmp.lt.s32.totalorder %s12, 1
      %s113 = scalar_select %p112, %s12, 1
      %s114 = smul.addr %s113, 2
      %s115 = smul.addr %s114, 4
      %s116 = scalar_lea.vmem %s1, %s115
      %v117 = vld [vmem:[%s111] sm:$0xff]
      %v118 = vld [vmem:[%s111 + $0x8] sm:$0x1]
      %vm119 = vcmask 1040384
      %v120 = vsel %vm119, %v118, 0.0
      %v121 = vadd.f32 %v117, %v120
      %v122 = vrot.slane %v121, 4
      %v123 = vadd.f32 %v121, %v122
      %v124 = vrot.slane %v123, 2
      %v125 = vadd.f32 %v123, %v124
      %v126 = vrot.slane %v125, 1
      %v127 = vadd.f32 %v125, %v126
      %v128 = vmul.f32 %v117, %v117
      %v129 = vmul.f32 %v118, %v118
      %v130 = vsel %vm119, %v129, 0.0
      %v131 = vadd.f32 %v128, %v130
      %v132 = vrot.slane %v131, 4
      %v133 = vadd.f32 %v131, %v132
      %v134 = vrot.slane %v133, 2
      %v135 = vadd.f32 %v133, %v134
      %v136 = vrot.slane %v135, 1
      %v137 = vadd.f32 %v135, %v136
      %v138 = vmul.f32 %v127, 0.11111111
      %v139 = vmul.f32 %v137, 0.11111111
      %v140 = vmul.f32 %v138, %v138
      %v141 = vsub.f32 %v139, %v140
      %v142 = vmax.f32 %v141, 0.0
      %v143 = vsub.f32 %v117, %v138
      %v144 = vsub.f32 %v118, %v138
      %v145 = vadd.f32 %v142, 1e-05
      %v146 = vrsqrt.pop %v145
      %v147 = vmul.f32 %v143, %v146
      %v148 = vmul.f32 %v144, %v146
      %vm149 = vcmp.ge.f32.partialorder %v147, 0.0
      %vm150 = vcmp.ge.f32.partialorder %v148, 0.0
      %v151 = vmul.f32 %v147, 0.2
      %v152 = vmul.f32 %v148, 0.2
      %v153 = vsel %vm149, %v147, %v151
      %v154 = vsel %vm150, %v148, %v152
      %v155 = vpack.c.bf16 %v154, %v153
      %v157 = vunpack.c.l.b16 %v155
      %v158 = vunpack.c.h.b16 %v155
      %v159 = vpack.c.b16 %v157, %v157
      %v160 = vpack.c.b16 %v158, %v158
      %163 = vst [vmem:[%s116] sm:$0xf] %v159
      %vm164 = vcmask 1040384
      %vm165 = vsmask.f32 256
      %vm166 = vmand %vm164, %vm165
      %v167 = vld [vmem:[%s116 + $0x4] sm:$0x1]
      %v168 = vsel %vm166, %v160, %v167
      %169 = vst [vmem:[%s116 + $0x4] sm:$0x1] %v168
      %p170 = scmp.lt.s32.totalorder %s12, 1
      %s171 = scalar_select %p170, %s12, 1
      %s172 = smul.addr %s171, 2
      %s173 = smul.addr %s172, 4
      %s174 = scalar_lea.vmem %s1, %s173
      // Predicated region
      $region25: #{_lambda_.14} parent=23 // pred_check
        %p175 = pneg %p56
      $region26: #{_lambda_.14} parent=23 // pred_check_branch
        %177 = sbr.rel (%p175) target = $region28
      $region27: #{_lambda_.14} parent=23 // pred_region
        _
      $region28: #{_lambda_.14} parent=23 // pred_fallthru
        _
    $region24: #{_lambda_.14} parent=5 // pred_fallthru
      _
    %p178 = scmp.le.s32.totalorder 2, %s7
    // Predicated region
    $region29: #{_lambda_.14} parent=5 // pred_check
      %p179 = pneg %p178
    $region30: #{_lambda_.14} parent=5 // pred_check_branch
      %181 = sbr.rel (%p179) target = $region32
    $region31: #{_lambda_.14} parent=5 // pred_region
      %s182 = ssub.s32 %s7, 2
      // Predicated region
      $region33: #{_lambda_.14} parent=31 // pred_check
        %p183 = pneg %p62
      $region34: #{_lambda_.14} parent=31 // pred_check_branch
        %185 = sbr.rel (%p183) target = $region36
      $region35: #{_lambda_.14} parent=31 // pred_region
        %p186 = scmp.lt.s32.totalorder %s13, 1
        %s187 = scalar_select %p186, %s13, 1
        %s188 = smul.addr %s187, 2
        %s189 = smul.addr %s188, 4
        %s190 = scalar_lea.vmem %s1, %s189
      $region36: #{_lambda_.14} parent=31 // pred_fallthru
        _
    $region32: #{_lambda_.14} parent=5 // pred_fallthru
      _
  $region6: #{_lambda_.14} parent=0 // loop_footer
    %s11 = sadd.s32 1, %s7
  $region7: #{_lambda_.14} parent=0 // loop_footer_branch
    %6 = sbr.rel target = $region3
  $region8: #{_lambda_.14} parent=0 // loop_exit
    _

// kernel: _lambda_.15
$region0: #{_lambda_.15}
  #allocation0 [shape = 'u32[]', space=smem, size = 0x4, offset = 0x4, fixed_abs, tag = 'smem constant byte address 0x4 - core index']
  #allocation1 [shape = 'u32[144,128]{1,0:T(1,128)}', space=vmem, size = 0x12000, scoped, tag = 'internal scratch']
  %s0 = inlined_call_operand.vmem [shape: bf16[2,4,1024], index: 0, kind: input, shape index: {}]
  %s1 = inlined_call_operand.vmem [shape: bf16[1024,128], index: 1, kind: input, shape index: {}]
  %s2 = inlined_call_operand.vmem [shape: f32[1,128], index: 2, kind: input, shape index: {}]
  %s3 = inlined_call_operand.vmem [shape: f32[2,1,128], index: 3, kind: output, shape index: {}]
  %s4 = sld [smem:[#allocation0]]
  $region45: #{_lambda_.15} parent=0
    _
  %s6 = ssub.s32 1, %s4
  %s7 = scalar_select 0, %s6, %s4
  loop: start=0, step=1, limit=4
  $region2: #{_lambda_.15} parent=0 // loop_pre_header
    _
  $region3: #{_lambda_.15} parent=0 // loop_header
    %s9 = sphi 0, %s13
    %p10 = scmp.ge.s32.totalorder %s9, 4
    %s19 = sphi 0, %s21
    %s22 = sphi 0, %s19
    %s23 = sphi 0, %s22
    %s39 = sphi 0, %s23
    %s43 = sphi 0, %s43
    %s45 = sphi 0, %s43
    %s46 = sphi 0, %s45
    %s60 = sphi 0, %s46
    %s64 = sphi 0, %s64
    %s66 = sphi 0, %s64
    %s67 = sphi 0, %s66
    %s81 = sphi 0, %s67
    %s87 = sphi 0, %s89
    %s90 = sphi 0, %s87
    %s91 = sphi 0, %s90
    %s107 = sphi 0, %s91
  $region4: #{_lambda_.15} parent=0 // loop_header_branch
    %12 = sbr.rel (%p10) target = $region8
  $region5: #{_lambda_.15} parent=0 // loop_body
    %s14 = ssub.s32 %s9, 1
    %s15 = ssub.s32 %s9, 2
    %s16 = sadd.s32 %s9, 1
    %s17 = ssub.s32 %s9, %s16
    %p18 = scmp.eq.s32.totalorder %s17, 0
    %s20 = sadd.s32 %s19, 1
    %s21 = scalar_select %p18, %s19, %s20
    %p24 = pneg %p18
    %p25 = scmp.eq.s32.totalorder %s9, 1
    %p26 = por %p24, %p25
    %p27 = scmp.ne.s32.totalorder %s19, %s22
    %p28 = scmp.eq.s32.totalorder %s9, 0
    %p29 = por %p27, %p28
    %p30 = scmp.ne.s32.totalorder %s19, %s22
    %p31 = scmp.eq.s32.totalorder %s14, 1
    %p32 = por %p30, %p31
    %p33 = scmp.ne.s32.totalorder %s22, %s23
    %p34 = scmp.eq.s32.totalorder %s14, 0
    %p35 = por %p33, %p34
    %p36 = scmp.ne.s32.totalorder %s22, %s23
    %p37 = scmp.eq.s32.totalorder %s15, 1
    %p38 = por %p36, %p37
    %p40 = scmp.ne.s32.totalorder %s23, %s39
    %p41 = scmp.eq.s32.totalorder %s15, 0
    %p42 = por %p40, %p41
    %s44 = sadd.s32 %s43, 1
    %p47 = scmp.eq.s32.totalorder %s9, 1
    %p48 = scmp.ne.s32.totalorder %s43, %s45
    %p49 = scmp.eq.s32.totalorder %s9, 0
    %p50 = por %p48, %p49
    %p51 = scmp.ne.s32.totalorder %s43, %s45
    %p52 = scmp.eq.s32.totalorder %s14, 1
    %p53 = por %p51, %p52
    %p54 = scmp.ne.s32.totalorder %s45, %s46
    %p55 = scmp.eq.s32.totalorder %s14, 0
    %p56 = por %p54, %p55
    %p57 = scmp.ne.s32.totalorder %s45, %s46
    %p58 = scmp.eq.s32.totalorder %s15, 1
    %p59 = por %p57, %p58
    %p61 = scmp.ne.s32.totalorder %s46, %s60
    %p62 = scmp.eq.s32.totalorder %s15, 0
    %p63 = por %p61, %p62
    %s65 = sadd.s32 %s64, 1
    %p68 = scmp.eq.s32.totalorder %s9, 1
    %p69 = scmp.ne.s32.totalorder %s64, %s66
    %p70 = scmp.eq.s32.totalorder %s9, 0
    %p71 = por %p69, %p70
    %p72 = scmp.ne.s32.totalorder %s64, %s66
    %p73 = scmp.eq.s32.totalorder %s14, 1
    %p74 = por %p72, %p73
    %p75 = scmp.ne.s32.totalorder %s66, %s67
    %p76 = scmp.eq.s32.totalorder %s14, 0
    %p77 = por %p75, %p76
    %p78 = scmp.ne.s32.totalorder %s66, %s67
    %p79 = scmp.eq.s32.totalorder %s15, 1
    %p80 = por %p78, %p79
    %p82 = scmp.ne.s32.totalorder %s67, %s81
    %p83 = scmp.eq.s32.totalorder %s15, 0
    %p84 = por %p82, %p83
    %s85 = ssub.s32 %s9, %s16
    %p86 = scmp.eq.s32.totalorder %s85, 0
    %s88 = sadd.s32 %s87, 1
    %s89 = scalar_select %p86, %s87, %s88
    %p92 = pneg %p86
    %p93 = scmp.eq.s32.totalorder %s9, 1
    %p94 = por %p92, %p93
    %p95 = scmp.ne.s32.totalorder %s87, %s90
    %p96 = scmp.eq.s32.totalorder %s9, 0
    %p97 = por %p95, %p96
    %p98 = scmp.ne.s32.totalorder %s87, %s90
    %p99 = scmp.eq.s32.totalorder %s14, 1
    %p100 = por %p98, %p99
    %p101 = scmp.ne.s32.totalorder %s90, %s91
    %p102 = scmp.eq.s32.totalorder %s14, 0
    %p103 = por %p101, %p102
    %p104 = scmp.ne.s32.totalorder %s90, %s91
    %p105 = scmp.eq.s32.totalorder %s15, 1
    %p106 = por %p104, %p105
    %p108 = scmp.ne.s32.totalorder %s91, %s107
    %p109 = scmp.eq.s32.totalorder %s15, 0
    %p110 = por %p108, %p109
    %p111 = scmp.le.s32.totalorder 1, %s9
    %p112 = scmp.lt.s32.totalorder %s9, 3
    %p113 = pnand %p111, %p112
    %p114 = pneg %p113
    // Predicated region
    $region9: #{_lambda_.15} parent=5 // pred_check
      _
    $region10: #{_lambda_.15} parent=5 // pred_check_branch
      %116 = sbr.rel (%p113) target = $region12
    $region11: #{_lambda_.15} parent=5 // pred_region
      %s117 = ssub.s32 %s9, 1
      // Predicated region
      $region13: #{_lambda_.15} parent=11 // pred_check
        %p118 = pneg %p56
      $region14: #{_lambda_.15} parent=11 // pred_check_branch
        %120 = sbr.rel (%p118) target = $region16
      $region15: #{_lambda_.15} parent=11 // pred_region
        _
      $region16: #{_lambda_.15} parent=11 // pred_fallthru
        _
      // Predicated region
      $region17: #{_lambda_.15} parent=11 // pred_check
        %p121 = pneg %p77
      $region18: #{_lambda_.15} parent=11 // pred_check_branch
        %123 = sbr.rel (%p121) target = $region20
      $region19: #{_lambda_.15} parent=11 // pred_region
        _
      $region20: #{_lambda_.15} parent=11 // pred_fallthru
        _
    $region12: #{_lambda_.15} parent=5 // pred_fallthru
      _
    %p124 = scmp.lt.s32.totalorder %s9, 2
    // Predicated region
    $region21: #{_lambda_.15} parent=5 // pred_check
      %p125 = pneg %p124
    $region22: #{_lambda_.15} parent=5 // pred_check_branch
      %127 = sbr.rel (%p125) target = $region24
    $region23: #{_lambda_.15} parent=5 // pred_region
      // Predicated region
      $region25: #{_lambda_.15} parent=23 // pred_check
        %p128 = pneg %p29
      $region26: #{_lambda_.15} parent=23 // pred_check_branch
        %130 = sbr.rel (%p128) target = $region28
      $region27: #{_lambda_.15} parent=23 // pred_region
        %p131 = scmp.lt.s32.totalorder %s9, 1
        %s132 = scalar_select %p131, %s9, 1
        %s133 = smul.addr %s132, 8
        %s134 = smul.addr %s133, 2
        %s135 = scalar_lea.vmem %s0, %s134
      $region28: #{_lambda_.15} parent=23 // pred_fallthru
        _
    $region24: #{_lambda_.15} parent=5 // pred_fallthru
      _
    %p136 = scmp.le.s32.totalorder 1, %s9
    %p137 = scmp.lt.s32.totalorder %s9, 3
    %p138 = pnand %p136, %p137
    %p139 = pneg %p138
    // Predicated region
    $region29: #{_lambda_.15} parent=5 // pred_check
      _
    $region30: #{_lambda_.15} parent=5 // pred_check_branch
      %141 = sbr.rel (%p138) target = $region32
    $region31: #{_lambda_.15} parent=5 // pred_region
      %s142 = ssub.s32 %s9, 1
      %p143 = scmp.lt.s32.totalorder %s14, 1
      %s144 = scalar_select %p143, %s14, 1
      %s145 = smul.addr %s144, 8
      %s146 = smul.addr %s145, 2
      %s147 = scalar_lea.vmem %s0, %s146
      %p148 = pneg %p35
      %p149 = pneg %p32
      %p150 = pneg %p56
      %p151 = pneg %p53
      %p152 = pneg %p77
      %p153 = pneg %p74
      %p154 = pneg %p103
      %p155 = pneg %p100
      %p156 = scmp.lt.s32.totalorder %s14, 1
      %s157 = scalar_select %p156, %s14, 1
      %s158 = scalar_lea.vmem %s3, %s157
      %p159 = scmp.lt.s32.totalorder %s14, 1
      %s160 = scalar_select %p159, %s14, 1
      %s161 = smul.addr %s160, 8
      %s162 = smul.addr %s161, 2
      %s163 = scalar_lea.vmem %s0, %s162
      %p164 = scmp.lt.s32.totalorder %s14, 1
      %s165 = scalar_select %p164, %s14, 1
      %s166 = scalar_lea.vmem %s3, %s165
      %v168 = vld [vmem:[%s163] sm:$0xff]
      %v169 = vld [vmem:[%s163 + $0x8] sm:$0xff]
      %v170 = vld [vmem:[%s1] sm:$0xf]
      %v171 = vld [vmem:[%s1 + $0x4] sm:$0xf]
      %v172 = vld [vmem:[%s1 + $0x8] sm:$0xf]
      %v173 = vld [vmem:[%s1 + $0xc] sm:$0xf]
      %v174 = vld [vmem:[%s1 + $0x10] sm:$0xf]
      %v175 = vld [vmem:[%s1 + $0x14] sm:$0xf]
      %v176 = vld [vmem:[%s1 + $0x18] sm:$0xf]
      %v177 = vld [vmem:[%s1 + $0x1c] sm:$0xf]
      %v178 = vld [vmem:[%s1 + $0x20] sm:$0xf]
      %v179 = vld [vmem:[%s1 + $0x24] sm:$0xf]
      %v180 = vld [vmem:[%s1 + $0x28] sm:$0xf]
      %v181 = vld [vmem:[%s1 + $0x2c] sm:$0xf]
      %v182 = vld [vmem:[%s1 + $0x30] sm:$0xf]
      %v183 = vld [vmem:[%s1 + $0x34] sm:$0xf]
      %v184 = vld [vmem:[%s1 + $0x38] sm:$0xf]
      %v185 = vld [vmem:[%s1 + $0x3c] sm:$0xf]
      %v186 = vld [vmem:[%s1 + $0x40] sm:$0xf]
      %v187 = vld [vmem:[%s1 + $0x44] sm:$0xf]
      %v188 = vld [vmem:[%s1 + $0x48] sm:$0xf]
      %v189 = vld [vmem:[%s1 + $0x4c] sm:$0xf]
      %v190 = vld [vmem:[%s1 + $0x50] sm:$0xf]
      %v191 = vld [vmem:[%s1 + $0x54] sm:$0xf]
      %v192 = vld [vmem:[%s1 + $0x58] sm:$0xf]
      %v193 = vld [vmem:[%s1 + $0x5c] sm:$0xf]
      %v194 = vld [vmem:[%s1 + $0x60] sm:$0xf]
      %v195 = vld [vmem:[%s1 + $0x64] sm:$0xf]
      %v196 = vld [vmem:[%s1 + $0x68] sm:$0xf]
      %v197 = vld [vmem:[%s1 + $0x6c] sm:$0xf]
      %v198 = vld [vmem:[%s1 + $0x70] sm:$0xf]
      %v199 = vld [vmem:[%s1 + $0x74] sm:$0xf]
      %v200 = vld [vmem:[%s1 + $0x78] sm:$0xf]
      %v201 = vld [vmem:[%s1 + $0x7c] sm:$0xf]
      %v202 = vld [vmem:[%s1 + $0x80] sm:$0xf]
      %v203 = vld [vmem:[%s1 + $0x84] sm:$0xf]
      %v204 = vld [vmem:[%s1 + $0x88] sm:$0xf]
      %v205 = vld [vmem:[%s1 + $0x8c] sm:$0xf]
      %v206 = vld [vmem:[%s1 + $0x90] sm:$0xf]
      %v207 = vld [vmem:[%s1 + $0x94] sm:$0xf]
      %v208 = vld [vmem:[%s1 + $0x98] sm:$0xf]
      %v209 = vld [vmem:[%s1 + $0x9c] sm:$0xf]
      %v210 = vld [vmem:[%s1 + $0xa0] sm:$0xf]
      %v211 = vld [vmem:[%s1 + $0xa4] sm:$0xf]
      %v212 = vld [vmem:[%s1 + $0xa8] sm:$0xf]
      %v213 = vld [vmem:[%s1 + $0xac] sm:$0xf]
      %v214 = vld [vmem:[%s1 + $0xb0] sm:$0xf]
      %v215 = vld [vmem:[%s1 + $0xb4] sm:$0xf]
      %v216 = vld [vmem:[%s1 + $0xb8] sm:$0xf]
      %v217 = vld [vmem:[%s1 + $0xbc] sm:$0xf]
      %v218 = vld [vmem:[%s1 + $0xc0] sm:$0xf]
      %v219 = vld [vmem:[%s1 + $0xc4] sm:$0xf]
      %v220 = vld [vmem:[%s1 + $0xc8] sm:$0xf]
      %v221 = vld [vmem:[%s1 + $0xcc] sm:$0xf]
      %v222 = vld [vmem:[%s1 + $0xd0] sm:$0xf]
      %v223 = vld [vmem:[%s1 + $0xd4] sm:$0xf]
      %v224 = vld [vmem:[%s1 + $0xd8] sm:$0xf]
      %v225 = vld [vmem:[%s1 + $0xdc] sm:$0xf]
      %v226 = vld [vmem:[%s1 + $0xe0] sm:$0xf]
      %v227 = vld [vmem:[%s1 + $0xe4] sm:$0xf]
      %v228 = vld [vmem:[%s1 + $0xe8] sm:$0xf]
      %v229 = vld [vmem:[%s1 + $0xec] sm:$0xf]
      %v230 = vld [vmem:[%s1 + $0xf0] sm:$0xf]
      %v231 = vld [vmem:[%s1 + $0xf4] sm:$0xf]
      %v232 = vld [vmem:[%s1 + $0xf8] sm:$0xf]
      %v233 = vld [vmem:[%s1 + $0xfc] sm:$0xf]
      %v234 = vld [vmem:[%s1 + $0x100] sm:$0xf]
      %v235 = vld [vmem:[%s1 + $0x104] sm:$0xf]
      %v236 = vld [vmem:[%s1 + $0x108] sm:$0xf]
      %v237 = vld [vmem:[%s1 + $0x10c] sm:$0xf]
      %v238 = vld [vmem:[%s1 + $0x110] sm:$0xf]
      %v239 = vld [vmem:[%s1 + $0x114] sm:$0xf]
      %v240 = vld [vmem:[%s1 + $0x118] sm:$0xf]
      %v241 = vld [vmem:[%s1 + $0x11c] sm:$0xf]
      %v242 = vld [vmem:[%s1 + $0x120] sm:$0xf]
      %v243 = vld [vmem:[%s1 + $0x124] sm:$0xf]
      %v244 = vld [vmem:[%s1 + $0x128] sm:$0xf]
      %v245 = vld [vmem:[%s1 + $0x12c] sm:$0xf]
      %v246 = vld [vmem:[%s1 + $0x130] sm:$0xf]
      %v247 = vld [vmem:[%s1 + $0x134] sm:$0xf]
      %v248 = vld [vmem:[%s1 + $0x138] sm:$0xf]
      %v249 = vld [vmem:[%s1 + $0x13c] sm:$0xf]
      %v250 = vld [vmem:[%s1 + $0x140] sm:$0xf]
      %v251 = vld [vmem:[%s1 + $0x144] sm:$0xf]
      %v252 = vld [vmem:[%s1 + $0x148] sm:$0xf]
      %v253 = vld [vmem:[%s1 + $0x14c] sm:$0xf]
      %v254 = vld [vmem:[%s1 + $0x150] sm:$0xf]
      %v255 = vld [vmem:[%s1 + $0x154] sm:$0xf]
      %v256 = vld [vmem:[%s1 + $0x158] sm:$0xf]
      %v257 = vld [vmem:[%s1 + $0x15c] sm:$0xf]
      %v258 = vld [vmem:[%s1 + $0x160] sm:$0xf]
      %v259 = vld [vmem:[%s1 + $0x164] sm:$0xf]
      %v260 = vld [vmem:[%s1 + $0x168] sm:$0xf]
      %v261 = vld [vmem:[%s1 + $0x16c] sm:$0xf]
      %v262 = vld [vmem:[%s1 + $0x170] sm:$0xf]
      %v263 = vld [vmem:[%s1 + $0x174] sm:$0xf]
      %v264 = vld [vmem:[%s1 + $0x178] sm:$0xf]
      %v265 = vld [vmem:[%s1 + $0x17c] sm:$0xf]
      %v266 = vld [vmem:[%s1 + $0x180] sm:$0xf]
      %v267 = vld [vmem:[%s1 + $0x184] sm:$0xf]
      %v268 = vld [vmem:[%s1 + $0x188] sm:$0xf]
      %v269 = vld [vmem:[%s1 + $0x18c] sm:$0xf]
      %v270 = vld [vmem:[%s1 + $0x190] sm:$0xf]
      %v271 = vld [vmem:[%s1 + $0x194] sm:$0xf]
      %v272 = vld [vmem:[%s1 + $0x198] sm:$0xf]
      %v273 = vld [vmem:[%s1 + $0x19c] sm:$0xf]
      %v274 = vld [vmem:[%s1 + $0x1a0] sm:$0xf]
      %v275 = vld [vmem:[%s1 + $0x1a4] sm:$0xf]
      %v276 = vld [vmem:[%s1 + $0x1a8] sm:$0xf]
      %v277 = vld [vmem:[%s1 + $0x1ac] sm:$0xf]
      %v278 = vld [vmem:[%s1 + $0x1b0] sm:$0xf]
      %v279 = vld [vmem:[%s1 + $0x1b4] sm:$0xf]
      %v280 = vld [vmem:[%s1 + $0x1b8] sm:$0xf]
      %v281 = vld [vmem:[%s1 + $0x1bc] sm:$0xf]
      %v282 = vld [vmem:[%s1 + $0x1c0] sm:$0xf]
      %v283 = vld [vmem:[%s1 + $0x1c4] sm:$0xf]
      %v284 = vld [vmem:[%s1 + $0x1c8] sm:$0xf]
      %v285 = vld [vmem:[%s1 + $0x1cc] sm:$0xf]
      %v286 = vld [vmem:[%s1 + $0x1d0] sm:$0xf]
      %v287 = vld [vmem:[%s1 + $0x1d4] sm:$0xf]
      %v288 = vld [vmem:[%s1 + $0x1d8] sm:$0xf]
      %v289 = vld [vmem:[%s1 + $0x1dc] sm:$0xf]
      %v290 = vld [vmem:[%s1 + $0x1e0] sm:$0xf]
      %v291 = vld [vmem:[%s1 + $0x1e4] sm:$0xf]
      %v292 = vld [vmem:[%s1 + $0x1e8] sm:$0xf]
      %v293 = vld [vmem:[%s1 + $0x1ec] sm:$0xf]
      %v294 = vld [vmem:[%s1 + $0x1f0] sm:$0xf]
      %v295 = vld [vmem:[%s1 + $0x1f4] sm:$0xf]
      %v296 = vld [vmem:[%s1 + $0x1f8] sm:$0xf]
      %v297 = vld [vmem:[%s1 + $0x1fc] sm:$0xf]
      %v300 = vcombine.high %v168, %v168
      %v302 = vunpack.c.l.s4 1983009808
      %v303 = vunpack.c.0.s8 %v302
      %v304 = vlaneseq
      %v305 = vshrl.u32 %v304, 7
      %v306 = vsub.s32 %v303, %v305
      %v307 = vrot.slane %v168, %v306
      %v309 = vunpack.c.l.s4 1983009808
      %v310 = vunpack.c.0.s8 %v309
      %v311 = vlaneseq
      %v312 = vshrl.u32 %v311, 7
      %v313 = vsub.s32 %v310, %v312
      %v314 = vrot.slane %v300, %v313
      %v315 = vcombine.high %v307, %v307
      %v316 = vcombine.high %v314, %v314
      %v317 = vcombine.high %v169, %v169
      %v319 = vunpack.c.l.s4 1983009808
      %v320 = vunpack.c.0.s8 %v319
      %v321 = vlaneseq
      %v322 = vshrl.u32 %v321, 7
      %v323 = vsub.s32 %v320, %v322
      %v324 = vrot.slane %v169, %v323
      %v326 = vunpack.c.l.s4 1983009808
      %v327 = vunpack.c.0.s8 %v326
      %v328 = vlaneseq
      %v329 = vshrl.u32 %v328, 7
      %v330 = vsub.s32 %v327, %v329
      %v331 = vrot.slane %v317, %v330
      %v332 = vcombine.high %v324, %v324
      %v333 = vcombine.high %v331, %v331
      %v470 = vunpack.c.l.b16 %v170
      %v471 = vunpack.c.l.b16 %v171
      %v472 = vunpack.c.l.b16 %v172
      %v473 = vunpack.c.l.b16 %v173
      %v474 = vunpack.c.l.b16 %v174
      %v475 = vunpack.c.l.b16 %v175
      %v476 = vunpack.c.l.b16 %v176
      %v477 = vunpack.c.l.b16 %v177
      %v478 = vunpack.c.l.b16 %v178
      %v479 = vunpack.c.l.b16 %v179
      %v480 = vunpack.c.l.b16 %v180
      %v481 = vunpack.c.l.b16 %v181
      %v482 = vunpack.c.l.b16 %v182
      %v483 = vunpack.c.l.b16 %v183
      %v484 = vunpack.c.l.b16 %v184
      %v485 = vunpack.c.l.b16 %v185
      %v486 = vunpack.c.l.b16 %v186
      %v487 = vunpack.c.l.b16 %v187
      %v488 = vunpack.c.l.b16 %v188
      %v489 = vunpack.c.l.b16 %v189
      %v490 = vunpack.c.l.b16 %v190
      %v491 = vunpack.c.l.b16 %v191
      %v492 = vunpack.c.l.b16 %v192
      %v493 = vunpack.c.l.b16 %v193
      %v494 = vunpack.c.l.b16 %v194
      %v495 = vunpack.c.l.b16 %v195
      %v496 = vunpack.c.l.b16 %v196
      %v497 = vunpack.c.l.b16 %v197
      %v498 = vunpack.c.l.b16 %v198
      %v499 = vunpack.c.l.b16 %v199
      %v500 = vunpack.c.l.b16 %v200
      %v501 = vunpack.c.l.b16 %v201
      %v502 = vunpack.c.l.b16 %v202
      %v503 = vunpack.c.l.b16 %v203
      %v504 = vunpack.c.l.b16 %v204
      %v505 = vunpack.c.l.b16 %v205
      %v506 = vunpack.c.l.b16 %v206
      %v507 = vunpack.c.l.b16 %v207
      %v508 = vunpack.c.l.b16 %v208
      %v509 = vunpack.c.l.b16 %v209
      %v510 = vunpack.c.l.b16 %v210
      %v511 = vunpack.c.l.b16 %v211
      %v512 = vunpack.c.l.b16 %v212
      %v513 = vunpack.c.l.b16 %v213
      %v514 = vunpack.c.l.b16 %v214
      %v515 = vunpack.c.l.b16 %v215
      %v516 = vunpack.c.l.b16 %v216
      %v517 = vunpack.c.l.b16 %v217
      %v518 = vunpack.c.l.b16 %v218
      %v519 = vunpack.c.l.b16 %v219
      %v520 = vunpack.c.l.b16 %v220
      %v521 = vunpack.c.l.b16 %v221
      %v522 = vunpack.c.l.b16 %v222
      %v523 = vunpack.c.l.b16 %v223
      %v524 = vunpack.c.l.b16 %v224
      %v525 = vunpack.c.l.b16 %v225
      %v526 = vunpack.c.l.b16 %v226
      %v527 = vunpack.c.l.b16 %v227
      %v528 = vunpack.c.l.b16 %v228
      %v529 = vunpack.c.l.b16 %v229
      %v530 = vunpack.c.l.b16 %v230
      %v531 = vunpack.c.l.b16 %v231
      %v532 = vunpack.c.l.b16 %v232
      %v533 = vunpack.c.l.b16 %v233
      %v534 = vunpack.c.l.b16 %v234
      %v535 = vunpack.c.l.b16 %v235
      %v536 = vunpack.c.l.b16 %v236
      %v537 = vunpack.c.l.b16 %v237
      %v538 = vunpack.c.l.b16 %v238
      %v539 = vunpack.c.l.b16 %v239
      %v540 = vunpack.c.l.b16 %v240
      %v541 = vunpack.c.l.b16 %v241
      %v542 = vunpack.c.l.b16 %v242
      %v543 = vunpack.c.l.b16 %v243
      %v544 = vunpack.c.l.b16 %v244
      %v545 = vunpack.c.l.b16 %v245
      %v546 = vunpack.c.l.b16 %v246
      %v547 = vunpack.c.l.b16 %v247
      %v548 = vunpack.c.l.b16 %v248
      %v549 = vunpack.c.l.b16 %v249
      %v550 = vunpack.c.l.b16 %v250
      %v551 = vunpack.c.l.b16 %v251
      %v552 = vunpack.c.l.b16 %v252
      %v553 = vunpack.c.l.b16 %v253
      %v554 = vunpack.c.l.b16 %v254
      %v555 = vunpack.c.l.b16 %v255
      %v556 = vunpack.c.l.b16 %v256
      %v557 = vunpack.c.l.b16 %v257
      %v558 = vunpack.c.l.b16 %v258
      %v559 = vunpack.c.l.b16 %v259
      %v560 = vunpack.c.l.b16 %v260
      %v561 = vunpack.c.l.b16 %v261
      %v562 = vunpack.c.l.b16 %v262
      %v563 = vunpack.c.l.b16 %v263
      %v564 = vunpack.c.l.b16 %v264
      %v565 = vunpack.c.l.b16 %v265
      %v566 = vunpack.c.l.b16 %v266
      %v567 = vunpack.c.l.b16 %v267
      %v568 = vunpack.c.l.b16 %v268
      %v569 = vunpack.c.l.b16 %v269
      %v570 = vunpack.c.l.b16 %v270
      %v571 = vunpack.c.l.b16 %v271
      %v572 = vunpack.c.l.b16 %v272
      %v573 = vunpack.c.l.b16 %v273
      %v574 = vunpack.c.l.b16 %v274
      %v575 = vunpack.c.l.b16 %v275
      %v576 = vunpack.c.l.b16 %v276
      %v577 = vunpack.c.l.b16 %v277
      %v578 = vunpack.c.l.b16 %v278
      %v579 = vunpack.c.l.b16 %v279
      %v580 = vunpack.c.l.b16 %v280
      %v581 = vunpack.c.l.b16 %v281
      %v582 = vunpack.c.l.b16 %v282
      %v583 = vunpack.c.l.b16 %v283
      %v584 = vunpack.c.l.b16 %v284
      %v585 = vunpack.c.l.b16 %v285
      %v586 = vunpack.c.l.b16 %v286
      %v587 = vunpack.c.l.b16 %v287
      %v588 = vunpack.c.l.b16 %v288
      %v589 = vunpack.c.l.b16 %v289
      %v590 = vunpack.c.l.b16 %v290
      %v591 = vunpack.c.l.b16 %v291
      %v592 = vunpack.c.l.b16 %v292
      %v593 = vunpack.c.l.b16 %v293
      %v594 = vunpack.c.l.b16 %v294
      %v595 = vunpack.c.l.b16 %v295
      %v596 = vunpack.c.l.b16 %v296
      %v597 = vunpack.c.l.b16 %v297
      %v598 = vpack.c.b16 %v471, %v470
      %v599 = vpack.c.b16 %v473, %v472
      %v600 = vpack.c.b16 %v475, %v474
      %v601 = vpack.c.b16 %v477, %v476
      %v602 = vpack.c.b16 %v479, %v478
      %v603 = vpack.c.b16 %v481, %v480
      %v604 = vpack.c.b16 %v483, %v482
      %v605 = vpack.c.b16 %v485, %v484
      %v606 = vpack.c.b16 %v487, %v486
      %v607 = vpack.c.b16 %v489, %v488
      %v608 = vpack.c.b16 %v491, %v490
      %v609 = vpack.c.b16 %v493, %v492
      %v610 = vpack.c.b16 %v495, %v494
      %v611 = vpack.c.b16 %v497, %v496
      %v612 = vpack.c.b16 %v499, %v498
      %v613 = vpack.c.b16 %v501, %v500
      %v614 = vpack.c.b16 %v503, %v502
      %v615 = vpack.c.b16 %v505, %v504
      %v616 = vpack.c.b16 %v507, %v506
      %v617 = vpack.c.b16 %v509, %v508
      %v618 = vpack.c.b16 %v511, %v510
      %v619 = vpack.c.b16 %v513, %v512
      %v620 = vpack.c.b16 %v515, %v514
      %v621 = vpack.c.b16 %v517, %v516
      %v622 = vpack.c.b16 %v519, %v518
      %v623 = vpack.c.b16 %v521, %v520
      %v624 = vpack.c.b16 %v523, %v522
      %v625 = vpack.c.b16 %v525, %v524
      %v626 = vpack.c.b16 %v527, %v526
      %v627 = vpack.c.b16 %v529, %v528
      %v628 = vpack.c.b16 %v531, %v530
      %v629 = vpack.c.b16 %v533, %v532
      %v630 = vpack.c.b16 %v535, %v534
      %v631 = vpack.c.b16 %v537, %v536
      %v632 = vpack.c.b16 %v539, %v538
      %v633 = vpack.c.b16 %v541, %v540
      %v634 = vpack.c.b16 %v543, %v542
      %v635 = vpack.c.b16 %v545, %v544
      %v636 = vpack.c.b16 %v547, %v546
      %v637 = vpack.c.b16 %v549, %v548
      %v638 = vpack.c.b16 %v551, %v550
      %v639 = vpack.c.b16 %v553, %v552
      %v640 = vpack.c.b16 %v555, %v554
      %v641 = vpack.c.b16 %v557, %v556
      %v642 = vpack.c.b16 %v559, %v558
      %v643 = vpack.c.b16 %v561, %v560
      %v644 = vpack.c.b16 %v563, %v562
      %v645 = vpack.c.b16 %v565, %v564
      %v646 = vpack.c.b16 %v567, %v566
      %v647 = vpack.c.b16 %v569, %v568
      %v648 = vpack.c.b16 %v571, %v570
      %v649 = vpack.c.b16 %v573, %v572
      %v650 = vpack.c.b16 %v575, %v574
      %v651 = vpack.c.b16 %v577, %v576
      %v652 = vpack.c.b16 %v579, %v578
      %v653 = vpack.c.b16 %v581, %v580
      %v654 = vpack.c.b16 %v583, %v582
      %v655 = vpack.c.b16 %v585, %v584
      %v656 = vpack.c.b16 %v587, %v586
      %v657 = vpack.c.b16 %v589, %v588
      %v658 = vpack.c.b16 %v591, %v590
      %v659 = vpack.c.b16 %v593, %v592
      %v660 = vpack.c.b16 %v595, %v594
      %v661 = vpack.c.b16 %v597, %v596
      %726 = vmatprep.subr.bf16.mxu0 0
      %727 = vmatpush1.bf16.msra.mxu0 %v598
      %728 = vmatprep.subr.bf16.mxu0 0
      %729 = vmatpush1.bf16.msra.mxu0 %v599
      %730 = vmatprep.subr.bf16.mxu0 0
      %731 = vmatpush1.bf16.msra.mxu0 %v600
      %732 = vmatprep.subr.bf16.mxu0 0
      %733 = vmatpush1.bf16.msra.mxu0 %v601
      %734 = vmatprep.subr.bf16.mxu0 0
      %735 = vmatpush1.bf16.msra.mxu0 %v602
      %736 = vmatprep.subr.bf16.mxu0 0
      %737 = vmatpush1.bf16.msra.mxu0 %v603
      %738 = vmatprep.subr.bf16.mxu0 0
      %739 = vmatpush1.bf16.msra.mxu0 %v604
      %740 = vmatprep.subr.bf16.mxu0 0
      %741 = vmatpush1.bf16.msra.mxu0 %v605
      %742 = vmatprep.subr.bf16.mxu0 0
      %743 = vmatpush1.bf16.msra.mxu0 %v606
      %744 = vmatprep.subr.bf16.mxu0 0
      %745 = vmatpush1.bf16.msra.mxu0 %v607
      %746 = vmatprep.subr.bf16.mxu0 0
      %747 = vmatpush1.bf16.msra.mxu0 %v608
      %748 = vmatprep.subr.bf16.mxu0 0
      %749 = vmatpush1.bf16.msra.mxu0 %v609
      %750 = vmatprep.subr.bf16.mxu0 0
      %751 = vmatpush1.bf16.msra.mxu0 %v610
      %752 = vmatprep.subr.bf16.mxu0 0
      %753 = vmatpush1.bf16.msra.mxu0 %v611
      %754 = vmatprep.subr.bf16.mxu0 0
      %755 = vmatpush1.bf16.msra.mxu0 %v612
      %756 = vmatprep.subr.bf16.mxu0 0
      %757 = vmatpush1.bf16.msra.mxu0 %v613
      %758 = vmatprep.mubr.bf16.mxu0 %v315
      %759 = vmatmul.mubr.bf16.gmra.mrb[0].mxu0 %v307
      %v760 = vpop.f32.mrb[0].mxu0
      %v761 = vadd.f32 0.0, %v760
      %v762 = vpop.f32.mrb[0].mxu0
      %v763 = vpop.f32.mrb[0].mxu0
      %v764 = vpop.f32.mrb[0].mxu0
      %765 = vdwg.mxu0
      %766 = vmatprep.subr.bf16.mxu0 0
      %767 = vmatpush1.bf16.msra.mxu0 %v614
      %768 = vmatprep.subr.bf16.mxu0 0
      %769 = vmatpush1.bf16.msra.mxu0 %v615
      %770 = vmatprep.subr.bf16.mxu0 0
      %771 = vmatpush1.bf16.msra.mxu0 %v616
      %772 = vmatprep.subr.bf16.mxu0 0
      %773 = vmatpush1.bf16.msra.mxu0 %v617
      %774 = vmatprep.subr.bf16.mxu0 0
      %775 = vmatpush1.bf16.msra.mxu0 %v618
      %776 = vmatprep.subr.bf16.mxu0 0
      %777 = vmatpush1.bf16.msra.mxu0 %v619
      %778 = vmatprep.subr.bf16.mxu0 0
      %779 = vmatpush1.bf16.msra.mxu0 %v620
      %780 = vmatprep.subr.bf16.mxu0 0
      %781 = vmatpush1.bf16.msra.mxu0 %v621
      %782 = vmatprep.subr.bf16.mxu0 0
      %783 = vmatpush1.bf16.msra.mxu0 %v622
      %784 = vmatprep.subr.bf16.mxu0 0
      %785 = vmatpush1.bf16.msra.mxu0 %v623
      %786 = vmatprep.subr.bf16.mxu0 0
      %787 = vmatpush1.bf16.msra.mxu0 %v624
      %788 = vmatprep.subr.bf16.mxu0 0
      %789 = vmatpush1.bf16.msra.mxu0 %v625
      %790 = vmatprep.subr.bf16.mxu0 0
      %791 = vmatpush1.bf16.msra.mxu0 %v626
      %792 = vmatprep.subr.bf16.mxu0 0
      %793 = vmatpush1.bf16.msra.mxu0 %v627
      %794 = vmatprep.subr.bf16.mxu0 0
      %795 = vmatpush1.bf16.msra.mxu0 %v628
      %796 = vmatprep.subr.bf16.mxu0 0
      %797 = vmatpush1.bf16.msra.mxu0 %v629
      %798 = vmatprep.mubr.bf16.mxu0 %v316
      %799 = vmatmul.mubr.bf16.gmra.mrb[0].mxu0 %v314
      %v800 = vpop.f32.mrb[0].mxu0
      %v801 = vadd.f32 %v761, %v800
      %v802 = vpop.f32.mrb[0].mxu0
      %v803 = vpop.f32.mrb[0].mxu0
      %v804 = vpop.f32.mrb[0].mxu0
      %805 = vdwg.mxu0
      %806 = vmatprep.subr.bf16.mxu0 0
      %807 = vmatpush1.bf16.msra.mxu0 %v630
      %808 = vmatprep.subr.bf16.mxu0 0
      %809 = vmatpush1.bf16.msra.mxu0 %v631
      %810 = vmatprep.subr.bf16.mxu0 0
      %811 = vmatpush1.bf16.msra.mxu0 %v632
      %812 = vmatprep.subr.bf16.mxu0 0
      %813 = vmatpush1.bf16.msra.mxu0 %v633
      %814 = vmatprep.subr.bf16.mxu0 0
      %815 = vmatpush1.bf16.msra.mxu0 %v634
      %816 = vmatprep.subr.bf16.mxu0 0
      %817 = vmatpush1.bf16.msra.mxu0 %v635
      %818 = vmatprep.subr.bf16.mxu0 0
      %819 = vmatpush1.bf16.msra.mxu0 %v636
      %820 = vmatprep.subr.bf16.mxu0 0
      %821 = vmatpush1.bf16.msra.mxu0 %v637
      %822 = vmatprep.subr.bf16.mxu0 0
      %823 = vmatpush1.bf16.msra.mxu0 %v638
      %824 = vmatprep.subr.bf16.mxu0 0
      %825 = vmatpush1.bf16.msra.mxu0 %v639
      %826 = vmatprep.subr.bf16.mxu0 0
      %827 = vmatpush1.bf16.msra.mxu0 %v640
      %828 = vmatprep.subr.bf16.mxu0 0
      %829 = vmatpush1.bf16.msra.mxu0 %v641
      %830 = vmatprep.subr.bf16.mxu0 0
      %831 = vmatpush1.bf16.msra.mxu0 %v642
      %832 = vmatprep.subr.bf16.mxu0 0
      %833 = vmatpush1.bf16.msra.mxu0 %v643
      %834 = vmatprep.subr.bf16.mxu0 0
      %835 = vmatpush1.bf16.msra.mxu0 %v644
      %836 = vmatprep.subr.bf16.mxu0 0
      %837 = vmatpush1.bf16.msra.mxu0 %v645
      %838 = vmatprep.mubr.bf16.mxu0 %v332
      %839 = vmatmul.mubr.bf16.gmra.mrb[0].mxu0 %v324
      %v840 = vpop.f32.mrb[0].mxu0
      %v841 = vadd.f32 %v801, %v840
      %v842 = vpop.f32.mrb[0].mxu0
      %v843 = vpop.f32.mrb[0].mxu0
      %v844 = vpop.f32.mrb[0].mxu0
      %845 = vdwg.mxu0
      %846 = vmatprep.subr.bf16.mxu0 0
      %847 = vmatpush1.bf16.msra.mxu0 %v646
      %848 = vmatprep.subr.bf16.mxu0 0
      %849 = vmatpush1.bf16.msra.mxu0 %v647
      %850 = vmatprep.subr.bf16.mxu0 0
      %851 = vmatpush1.bf16.msra.mxu0 %v648
      %852 = vmatprep.subr.bf16.mxu0 0
      %853 = vmatpush1.bf16.msra.mxu0 %v649
      %854 = vmatprep.subr.bf16.mxu0 0
      %855 = vmatpush1.bf16.msra.mxu0 %v650
      %856 = vmatprep.subr.bf16.mxu0 0
      %857 = vmatpush1.bf16.msra.mxu0 %v651
      %858 = vmatprep.subr.bf16.mxu0 0
      %859 = vmatpush1.bf16.msra.mxu0 %v652
      %860 = vmatprep.subr.bf16.mxu0 0
      %861 = vmatpush1.bf16.msra.mxu0 %v653
      %862 = vmatprep.subr.bf16.mxu0 0
      %863 = vmatpush1.bf16.msra.mxu0 %v654
      %864 = vmatprep.subr.bf16.mxu0 0
      %865 = vmatpush1.bf16.msra.mxu0 %v655
      %866 = vmatprep.subr.bf16.mxu0 0
      %867 = vmatpush1.bf16.msra.mxu0 %v656
      %868 = vmatprep.subr.bf16.mxu0 0
      %869 = vmatpush1.bf16.msra.mxu0 %v657
      %870 = vmatprep.subr.bf16.mxu0 0
      %871 = vmatpush1.bf16.msra.mxu0 %v658
      %872 = vmatprep.subr.bf16.mxu0 0
      %873 = vmatpush1.bf16.msra.mxu0 %v659
      %874 = vmatprep.subr.bf16.mxu0 0
      %875 = vmatpush1.bf16.msra.mxu0 %v660
      %876 = vmatprep.subr.bf16.mxu0 0
      %877 = vmatpush1.bf16.msra.mxu0 %v661
      %878 = vmatprep.mubr.bf16.mxu0 %v333
      %879 = vmatmul.mubr.bf16.gmra.mrb[0].mxu0 %v331
      %v880 = vpop.f32.mrb[0].mxu0
      %v881 = vadd.f32 %v841, %v880
      %v882 = vpop.f32.mrb[0].mxu0
      %v883 = vpop.f32.mrb[0].mxu0
      %v884 = vpop.f32.mrb[0].mxu0
      %885 = vdwg.mxu0
      %vm886 = vcmask 1043456
      %v887 = vsel %vm886, %v881, 0.0
      %v888 = vrot.slane %v887, 4
      %v889 = vadd.f32 %v887, %v888
      %v890 = vrot.slane %v889, 2
      %v891 = vadd.f32 %v889, %v890
      %v892 = vrot.slane %v891, 1
      %v893 = vadd.f32 %v891, %v892
      %v894 = vmul.f32 %v893, 0.25
      %v895 = vld [vmem:[%s2] sm:$0x1]
      %v896 = vadd.f32 %v894, %v895
      %897 = vst [vmem:[%s166] sm:$0x1] %v896
      %p898 = scmp.lt.s32.totalorder %s14, 1
      %s899 = scalar_select %p898, %s14, 1
      %s900 = scalar_lea.vmem %s3, %s899
      // Predicated region
      $region33: #{_lambda_.15} parent=31 // pred_check
        %p901 = pneg %p100
      $region34: #{_lambda_.15} parent=31 // pred_check_branch
        %903 = sbr.rel (%p901) target = $region36
      $region35: #{_lambda_.15} parent=31 // pred_region
        _
      $region36: #{_lambda_.15} parent=31 // pred_fallthru
        _
    $region32: #{_lambda_.15} parent=5 // pred_fallthru
      _
    %p904 = scmp.le.s32.totalorder 2, %s9
    // Predicated region
    $region37: #{_lambda_.15} parent=5 // pred_check
      %p905 = pneg %p904
    $region38: #{_lambda_.15} parent=5 // pred_check_branch
      %907 = sbr.rel (%p905) target = $region40
    $region39: #{_lambda_.15} parent=5 // pred_region
      %s908 = ssub.s32 %s9, 2
      // Predicated region
      $region41: #{_lambda_.15} parent=39 // pred_check
        %p909 = pneg %p106
      $region42: #{_lambda_.15} parent=39 // pred_check_branch
        %911 = sbr.rel (%p909) target = $region44
      $region43: #{_lambda_.15} parent=39 // pred_region
        %p912 = scmp.lt.s32.totalorder %s15, 1
        %s913 = scalar_select %p912, %s15, 1
        %s914 = scalar_lea.vmem %s3, %s913
      $region44: #{_lambda_.15} parent=39 // pred_fallthru
        _
    $region40: #{_lambda_.15} parent=5 // pred_fallthru
      _
  $region6: #{_lambda_.15} parent=0 // loop_footer
    %s13 = sadd.s32 1, %s9
  $region7: #{_lambda_.15} parent=0 // loop_footer_branch
    %8 = sbr.rel target = $region3
  $region8: #{_lambda_.15} parent=0 // loop_exit
    _

</llo_original>
